<compile_context>
chip_gen: v6e
topology: v6e:2x2x1
jax: 0.10.0
libtpu: 0.0.40
codegen_flags: <defaults>
</compile_context>

<pallas_src>
import jax
import jax.numpy as jnp
from jax.experimental import pallas as pl
from jax.experimental.pallas import tpu as pltpu

_CHANNELS = (3, 32, 64, 128)


def _cnn_fused_kernel(x_ref, w1_ref, b1_ref, w2_ref, b2_ref, w3_ref, b3_ref,
                      o_ref, pad1_ref, pad2_ref, pad3_ref):
    """One batch element: (conv+relu+pool) x 3, intermediates stay in VMEM."""

    def conv_relu_pool(pad_ref, src, w_ref, b_ref):
        # src:     (H, W, Cin)      f32 value (layer input)
        # pad_ref: (H+2, W+2, Cin)  f32 VMEM scratch for zero padding
        # w_ref:   (9*Cin, Cout)    bf16 im2col-flattened weights
        # b_ref:   (1, Cout)        f32 bias
        H, W, Cin = src.shape
        Cout = w_ref.shape[1]

        # --- in-kernel zero padding (padding=1) ---
        pad_ref[...] = jnp.zeros(pad_ref.shape, pad_ref.dtype)
        pad_ref[1:1 + H, 1:1 + W, :] = src
        xp = pad_ref[...]                                   # (H+2, W+2, Cin)

        # --- im2col: fold the 3x3 taps into the contraction axis ---
        # tap order (ky, kx) major, channel minor -> matches weight flattening.
        taps = [xp[ky:ky + H, kx:kx + W, :]
                for ky in range(3) for kx in range(3)]
        patch = jnp.concatenate(taps, axis=-1).reshape(H * W, 9 * Cin)

        # --- single big-K MXU matmul (bf16 in, f32 accumulate) ---
        acc = jnp.dot(patch.astype(jnp.bfloat16), w_ref[...],
                      preferred_element_type=jnp.float32)    # (H*W, Cout)
        acc = jnp.maximum(acc + b_ref[...], 0.0)             # bias + ReLU, f32

        # --- 2x2 / stride-2 max pool ---
        y = acc.reshape(H // 2, 2, W // 2, 2, Cout)
        return jnp.max(jnp.max(y, axis=3), axis=1)           # (H//2, W//2, Cout)

    a1 = conv_relu_pool(pad1_ref, x_ref[0], w1_ref, b1_ref)   # (H/2, W/2, 32)
    a2 = conv_relu_pool(pad2_ref, a1, w2_ref, b2_ref)         # (H/4, W/4, 64)
    a3 = conv_relu_pool(pad3_ref, a2, w3_ref, b3_ref)         # (H/8, W/8, 128)
    o_ref[0] = a3.astype(o_ref.dtype)


def cnn_forward(x_nchw, params):
    """Forward pass matching the PyTorch CNN. Input NCHW f32, output NCHW f32."""
    N, C, H, W = x_nchw.shape
    assert C == _CHANNELS[0] and H % 8 == 0 and W % 8 == 0, (C, H, W)
    x = jnp.transpose(x_nchw, (0, 2, 3, 1)).astype(jnp.float32)   # NCHW -> NHWC

    (w1, b1), (w2, b2), (w3, b3) = params
    # bf16 weights for the MXU; accumulation stays f32 inside the kernel.
    w1, w2, w3 = (w.astype(jnp.bfloat16) for w in (w1, w2, w3))

    c0, c1, c2, c3 = _CHANNELS
    out = pl.pallas_call(
        _cnn_fused_kernel,
        out_shape=jax.ShapeDtypeStruct((N, H // 8, W // 8, c3), jnp.float32),
        grid=(N,),
        in_specs=[
            pl.BlockSpec((1, H, W, c0), lambda n: (n, 0, 0, 0)),
            pl.BlockSpec((9 * c0, c1), lambda n: (0, 0)),
            pl.BlockSpec((1, c1), lambda n: (0, 0)),
            pl.BlockSpec((9 * c1, c2), lambda n: (0, 0)),
            pl.BlockSpec((1, c2), lambda n: (0, 0)),
            pl.BlockSpec((9 * c2, c3), lambda n: (0, 0)),
            pl.BlockSpec((1, c3), lambda n: (0, 0)),
        ],
        out_specs=pl.BlockSpec((1, H // 8, W // 8, c3), lambda n: (n, 0, 0, 0)),
        scratch_shapes=[
            pltpu.VMEM((H + 2, W + 2, c0), jnp.float32),            # pad buf L1
            pltpu.VMEM((H // 2 + 2, W // 2 + 2, c1), jnp.float32),  # pad buf L2
            pltpu.VMEM((H // 4 + 2, W // 4 + 2, c2), jnp.float32),  # pad buf L3
        ],
        compiler_params=pltpu.CompilerParams(
            dimension_semantics=("parallel",)),
    )(x, w1, b1, w2, b2, w3, b3)

    return jnp.transpose(out, (0, 3, 1, 2))                       # NHWC -> NCHW


def _init_conv_params(key, cin, cout, ksize=3):
    """PyTorch-default-style init; weight returned im2col-flattened (9*Cin, Cout)."""
    kw, kb = jax.random.split(key)
    fan_in = cin * ksize * ksize
    bound = 1.0 / (fan_in ** 0.5)
    # torch layout (Cout, Cin, kh, kw) -> (kh, kw, Cin, Cout) -> (kh*kw*Cin, Cout)
    w_torch = jax.random.uniform(kw, (cout, cin, ksize, ksize), jnp.float32,
                                 minval=-bound, maxval=bound)
    w_flat = jnp.transpose(w_torch, (2, 3, 1, 0)).reshape(ksize * ksize * cin, cout)
    b = jax.random.uniform(kb, (1, cout), jnp.float32, minval=-bound, maxval=bound)
    return w_flat, b


def _reference_forward(x_nchw, params):
    """Pure-JAX (XLA) f32 reference of the same CNN for a correctness check."""
    x = jnp.transpose(x_nchw, (0, 2, 3, 1))
    for w_flat, b in params:
        cout = w_flat.shape[1]
        cin = w_flat.shape[0] // 9
        w_hwio = w_flat.reshape(3, 3, cin, cout)
        x = jax.lax.conv_general_dilated(
            x, w_hwio, window_strides=(1, 1), padding="SAME",
            dimension_numbers=("NHWC", "HWIO", "NHWC"),
            precision=jax.lax.Precision.HIGHEST)
        x = jnp.maximum(x + b.reshape(1, 1, 1, cout), 0.0)
        x = jax.lax.reduce_window(x, -jnp.inf, jax.lax.max,
                                  (1, 2, 2, 1), (1, 2, 2, 1), "VALID")
    return jnp.transpose(x, (0, 3, 1, 2))


if __name__ == "__main__":
    key = jax.random.PRNGKey(0)
    k_in, k1, k2, k3 = jax.random.split(key, 4)

    # shapes consistent with the module: N=2, C=3, H=W=16
    x = jax.random.normal(k_in, (2, 3, 16, 16), jnp.float32)
    params = [
        _init_conv_params(k1, 3, 32),
        _init_conv_params(k2, 32, 64),
        _init_conv_params(k3, 64, 128),
    ]

    out = jax.jit(cnn_forward)(x, params)
    out = jax.block_until_ready(out)
    assert out.shape == (2, 128, 2, 2), out.shape

    # correctness vs. a pure-JAX f32 reference (kernel uses bf16 matmuls, f32 accum)
    ref = _reference_forward(x, params)
    max_err = float(jnp.max(jnp.abs(out - ref)))
    assert max_err < 5e-2, f"max abs error {max_err}"

    print("KERNEL_OK")
</pallas_src>

<mosaic_0001>
module attributes {stable_mosaic.version = 11 : i64} {
  func.func @_cnn_fused_kernel(%arg0: i32, %arg1: memref<1x16x16x3xf32, #tpu.memory_space<vmem>>, %arg2: memref<27x32xbf16, #tpu.memory_space<vmem>>, %arg3: memref<1x32xf32, #tpu.memory_space<vmem>>, %arg4: memref<288x64xbf16, #tpu.memory_space<vmem>>, %arg5: memref<1x64xf32, #tpu.memory_space<vmem>>, %arg6: memref<576x128xbf16, #tpu.memory_space<vmem>>, %arg7: memref<1x128xf32, #tpu.memory_space<vmem>>, %arg8: memref<1x2x2x128xf32, #tpu.memory_space<vmem>>, %arg9: memref<18x18x3xf32, #tpu.memory_space<vmem>>, %arg10: memref<10x10x32xf32, #tpu.memory_space<vmem>>, %arg11: memref<6x6x64xf32, #tpu.memory_space<vmem>>) attributes {dimension_semantics = [#tpu.dimension_semantics<parallel>], iteration_bounds = array<i64: 2>, scalar_prefetch = 0 : i64, scratch_operands = 3 : i64, tpu.core_type = #tpu.core_type<tc>, window_params = [{transform_indices = @transform_0, window_bounds = array<i64: 1, 16, 16, 3>}, {pipeline_mode = #tpu.pipeline_mode<synchronous>, transform_indices = @transform_1, window_bounds = array<i64: 27, 32>}, {pipeline_mode = #tpu.pipeline_mode<synchronous>, transform_indices = @transform_2, window_bounds = array<i64: 1, 32>}, {pipeline_mode = #tpu.pipeline_mode<synchronous>, transform_indices = @transform_3, window_bounds = array<i64: 288, 64>}, {pipeline_mode = #tpu.pipeline_mode<synchronous>, transform_indices = @transform_4, window_bounds = array<i64: 1, 64>}, {pipeline_mode = #tpu.pipeline_mode<synchronous>, transform_indices = @transform_5, window_bounds = array<i64: 576, 128>}, {pipeline_mode = #tpu.pipeline_mode<synchronous>, transform_indices = @transform_6, window_bounds = array<i64: 1, 128>}, {transform_indices = @transform_7, window_bounds = array<i64: 1, 2, 2, 128>}]} {
    %c0 = arith.constant 0 : index
    %c0_0 = arith.constant 0 : index
    %c0_1 = arith.constant 0 : index
    %c0_2 = arith.constant 0 : index
    %0 = vector.load %arg1[%c0, %c0_0, %c0_1, %c0_2] : memref<1x16x16x3xf32, #tpu.memory_space<vmem>>, vector<1x16x16x3xf32>
    %1 = vector.shape_cast %0 : vector<1x16x16x3xf32> to vector<16x16x3xf32>
    %cst = arith.constant 0.000000e+00 : f32
    %2 = vector.broadcast %cst : f32 to vector<18x18x3xf32>
    %c0_3 = arith.constant 0 : index
    %c0_4 = arith.constant 0 : index
    %c0_5 = arith.constant 0 : index
    %3 = vector.load %arg9[%c0_3, %c0_4, %c0_5] : memref<18x18x3xf32, #tpu.memory_space<vmem>>, vector<18x18x3xf32>
    tpu.vector_store %arg9[%c0_3, %c0_4, %c0_5], %2 {strides = array<i32>} : memref<18x18x3xf32, #tpu.memory_space<vmem>>, vector<18x18x3xf32>,
    %c1 = arith.constant 1 : index
    %c1_6 = arith.constant 1 : index
    %c0_7 = arith.constant 0 : index
    %4 = vector.load %arg9[%c1, %c1_6, %c0_7] : memref<18x18x3xf32, #tpu.memory_space<vmem>>, vector<16x16x3xf32>
    tpu.vector_store %arg9[%c1, %c1_6, %c0_7], %1 {strides = array<i32>} : memref<18x18x3xf32, #tpu.memory_space<vmem>>, vector<16x16x3xf32>,
    %c0_8 = arith.constant 0 : index
    %c0_9 = arith.constant 0 : index
    %c0_10 = arith.constant 0 : index
    %5 = vector.load %arg9[%c0_8, %c0_9, %c0_10] : memref<18x18x3xf32, #tpu.memory_space<vmem>>, vector<18x18x3xf32>
    %6 = vector.extract_strided_slice %5 {offsets = [0, 0, 0], sizes = [16, 16, 3], strides = [1, 1, 1]} : vector<18x18x3xf32> to vector<16x16x3xf32>
    %7 = vector.extract_strided_slice %5 {offsets = [0, 1, 0], sizes = [16, 16, 3], strides = [1, 1, 1]} : vector<18x18x3xf32> to vector<16x16x3xf32>
    %8 = vector.extract_strided_slice %5 {offsets = [0, 2, 0], sizes = [16, 16, 3], strides = [1, 1, 1]} : vector<18x18x3xf32> to vector<16x16x3xf32>
    %9 = vector.extract_strided_slice %5 {offsets = [1, 0, 0], sizes = [16, 16, 3], strides = [1, 1, 1]} : vector<18x18x3xf32> to vector<16x16x3xf32>
    %10 = vector.extract_strided_slice %5 {offsets = [1, 1, 0], sizes = [16, 16, 3], strides = [1, 1, 1]} : vector<18x18x3xf32> to vector<16x16x3xf32>
    %11 = vector.extract_strided_slice %5 {offsets = [1, 2, 0], sizes = [16, 16, 3], strides = [1, 1, 1]} : vector<18x18x3xf32> to vector<16x16x3xf32>
    %12 = vector.extract_strided_slice %5 {offsets = [2, 0, 0], sizes = [16, 16, 3], strides = [1, 1, 1]} : vector<18x18x3xf32> to vector<16x16x3xf32>
    %13 = vector.extract_strided_slice %5 {offsets = [2, 1, 0], sizes = [16, 16, 3], strides = [1, 1, 1]} : vector<18x18x3xf32> to vector<16x16x3xf32>
    %14 = vector.extract_strided_slice %5 {offsets = [2, 2, 0], sizes = [16, 16, 3], strides = [1, 1, 1]} : vector<18x18x3xf32> to vector<16x16x3xf32>
    %15 = tpu.concatenate %6, %7, %8, %9, %10, %11, %12, %13, %14 in 2 : vector<16x16x3xf32>, vector<16x16x3xf32>, vector<16x16x3xf32>, vector<16x16x3xf32>, vector<16x16x3xf32>, vector<16x16x3xf32>, vector<16x16x3xf32>, vector<16x16x3xf32>, vector<16x16x3xf32> -> vector<16x16x27xf32>
    %16 = vector.shape_cast %15 : vector<16x16x27xf32> to vector<256x27xf32>
    %17 = arith.truncf %16 : vector<256x27xf32> to vector<256x27xbf16>
    %c0_11 = arith.constant 0 : index
    %c0_12 = arith.constant 0 : index
    %18 = vector.load %arg2[%c0_11, %c0_12] : memref<27x32xbf16, #tpu.memory_space<vmem>>, vector<27x32xbf16>
    %cst_13 = arith.constant dense<0.000000e+00> : vector<256x32xf32>
    %19 = tpu.matmul %17, %18, %cst_13 {dimension_numbers = #tpu.dot_dimension_numbers<[1], [0], [0], [1], [0, 0, 1, 1], [], []>} : vector<256x27xbf16>, vector<27x32xbf16>, vector<256x32xf32> -> vector<256x32xf32>
    %c0_14 = arith.constant 0 : index
    %c0_15 = arith.constant 0 : index
    %20 = vector.load %arg3[%c0_14, %c0_15] : memref<1x32xf32, #tpu.memory_space<vmem>>, vector<1x32xf32>
    %21 = vector.broadcast %20 : vector<1x32xf32> to vector<256x32xf32>
    %22 = arith.addf %19, %21 : vector<256x32xf32>
    %cst_16 = arith.constant 0.000000e+00 : f32
    %23 = vector.broadcast %cst_16 : f32 to vector<256x32xf32>
    %24 = arith.maximumf %22, %23 : vector<256x32xf32>
    %25 = vector.shape_cast %24 : vector<256x32xf32> to vector<8x2x8x2x32xf32>
    %cst_17 = arith.constant dense<0xFF800000> : vector<8x2x8x32xf32>
    %26 = vector.multi_reduction <maximumf>, %25, %cst_17 [3] : vector<8x2x8x2x32xf32> to vector<8x2x8x32xf32>
    %cst_18 = arith.constant dense<0xFF800000> : vector<8x8x32xf32>
    %27 = vector.multi_reduction <maximumf>, %26, %cst_18 [1] : vector<8x2x8x32xf32> to vector<8x8x32xf32>
    %cst_19 = arith.constant 0.000000e+00 : f32
    %28 = vector.broadcast %cst_19 : f32 to vector<10x10x32xf32>
    %c0_20 = arith.constant 0 : index
    %c0_21 = arith.constant 0 : index
    %c0_22 = arith.constant 0 : index
    %29 = vector.load %arg10[%c0_20, %c0_21, %c0_22] : memref<10x10x32xf32, #tpu.memory_space<vmem>>, vector<10x10x32xf32>
    tpu.vector_store %arg10[%c0_20, %c0_21, %c0_22], %28 {strides = array<i32>} : memref<10x10x32xf32, #tpu.memory_space<vmem>>, vector<10x10x32xf32>,
    %c1_23 = arith.constant 1 : index
    %c1_24 = arith.constant 1 : index
    %c0_25 = arith.constant 0 : index
    %30 = vector.load %arg10[%c1_23, %c1_24, %c0_25] : memref<10x10x32xf32, #tpu.memory_space<vmem>>, vector<8x8x32xf32>
    tpu.vector_store %arg10[%c1_23, %c1_24, %c0_25], %27 {strides = array<i32>} : memref<10x10x32xf32, #tpu.memory_space<vmem>>, vector<8x8x32xf32>,
    %c0_26 = arith.constant 0 : index
    %c0_27 = arith.constant 0 : index
    %c0_28 = arith.constant 0 : index
    %31 = vector.load %arg10[%c0_26, %c0_27, %c0_28] : memref<10x10x32xf32, #tpu.memory_space<vmem>>, vector<10x10x32xf32>
    %32 = vector.extract_strided_slice %31 {offsets = [0, 0, 0], sizes = [8, 8, 32], strides = [1, 1, 1]} : vector<10x10x32xf32> to vector<8x8x32xf32>
    %33 = vector.extract_strided_slice %31 {offsets = [0, 1, 0], sizes = [8, 8, 32], strides = [1, 1, 1]} : vector<10x10x32xf32> to vector<8x8x32xf32>
    %34 = vector.extract_strided_slice %31 {offsets = [0, 2, 0], sizes = [8, 8, 32], strides = [1, 1, 1]} : vector<10x10x32xf32> to vector<8x8x32xf32>
    %35 = vector.extract_strided_slice %31 {offsets = [1, 0, 0], sizes = [8, 8, 32], strides = [1, 1, 1]} : vector<10x10x32xf32> to vector<8x8x32xf32>
    %36 = vector.extract_strided_slice %31 {offsets = [1, 1, 0], sizes = [8, 8, 32], strides = [1, 1, 1]} : vector<10x10x32xf32> to vector<8x8x32xf32>
    %37 = vector.extract_strided_slice %31 {offsets = [1, 2, 0], sizes = [8, 8, 32], strides = [1, 1, 1]} : vector<10x10x32xf32> to vector<8x8x32xf32>
    %38 = vector.extract_strided_slice %31 {offsets = [2, 0, 0], sizes = [8, 8, 32], strides = [1, 1, 1]} : vector<10x10x32xf32> to vector<8x8x32xf32>
    %39 = vector.extract_strided_slice %31 {offsets = [2, 1, 0], sizes = [8, 8, 32], strides = [1, 1, 1]} : vector<10x10x32xf32> to vector<8x8x32xf32>
    %40 = vector.extract_strided_slice %31 {offsets = [2, 2, 0], sizes = [8, 8, 32], strides = [1, 1, 1]} : vector<10x10x32xf32> to vector<8x8x32xf32>
    %41 = tpu.concatenate %32, %33, %34, %35, %36, %37, %38, %39, %40 in 2 : vector<8x8x32xf32>, vector<8x8x32xf32>, vector<8x8x32xf32>, vector<8x8x32xf32>, vector<8x8x32xf32>, vector<8x8x32xf32>, vector<8x8x32xf32>, vector<8x8x32xf32>, vector<8x8x32xf32> -> vector<8x8x288xf32>
    %42 = vector.shape_cast %41 : vector<8x8x288xf32> to vector<64x288xf32>
    %43 = arith.truncf %42 : vector<64x288xf32> to vector<64x288xbf16>
    %c0_29 = arith.constant 0 : index
    %c0_30 = arith.constant 0 : index
    %44 = vector.load %arg4[%c0_29, %c0_30] : memref<288x64xbf16, #tpu.memory_space<vmem>>, vector<288x64xbf16>
    %cst_31 = arith.constant dense<0.000000e+00> : vector<64x64xf32>
    %45 = tpu.matmul %43, %44, %cst_31 {dimension_numbers = #tpu.dot_dimension_numbers<[1], [0], [0], [1], [0, 0, 1, 1], [], []>} : vector<64x288xbf16>, vector<288x64xbf16>, vector<64x64xf32> -> vector<64x64xf32>
    %c0_32 = arith.constant 0 : index
    %c0_33 = arith.constant 0 : index
    %46 = vector.load %arg5[%c0_32, %c0_33] : memref<1x64xf32, #tpu.memory_space<vmem>>, vector<1x64xf32>
    %47 = vector.broadcast %46 : vector<1x64xf32> to vector<64x64xf32>
    %48 = arith.addf %45, %47 : vector<64x64xf32>
    %cst_34 = arith.constant 0.000000e+00 : f32
    %49 = vector.broadcast %cst_34 : f32 to vector<64x64xf32>
    %50 = arith.maximumf %48, %49 : vector<64x64xf32>
    %51 = vector.shape_cast %50 : vector<64x64xf32> to vector<4x2x4x2x64xf32>
    %cst_35 = arith.constant dense<0xFF800000> : vector<4x2x4x64xf32>
    %52 = vector.multi_reduction <maximumf>, %51, %cst_35 [3] : vector<4x2x4x2x64xf32> to vector<4x2x4x64xf32>
    %cst_36 = arith.constant dense<0xFF800000> : vector<4x4x64xf32>
    %53 = vector.multi_reduction <maximumf>, %52, %cst_36 [1] : vector<4x2x4x64xf32> to vector<4x4x64xf32>
    %cst_37 = arith.constant 0.000000e+00 : f32
    %54 = vector.broadcast %cst_37 : f32 to vector<6x6x64xf32>
    %c0_38 = arith.constant 0 : index
    %c0_39 = arith.constant 0 : index
    %c0_40 = arith.constant 0 : index
    %55 = vector.load %arg11[%c0_38, %c0_39, %c0_40] : memref<6x6x64xf32, #tpu.memory_space<vmem>>, vector<6x6x64xf32>
    tpu.vector_store %arg11[%c0_38, %c0_39, %c0_40], %54 {strides = array<i32>} : memref<6x6x64xf32, #tpu.memory_space<vmem>>, vector<6x6x64xf32>,
    %c1_41 = arith.constant 1 : index
    %c1_42 = arith.constant 1 : index
    %c0_43 = arith.constant 0 : index
    %56 = vector.load %arg11[%c1_41, %c1_42, %c0_43] : memref<6x6x64xf32, #tpu.memory_space<vmem>>, vector<4x4x64xf32>
    tpu.vector_store %arg11[%c1_41, %c1_42, %c0_43], %53 {strides = array<i32>} : memref<6x6x64xf32, #tpu.memory_space<vmem>>, vector<4x4x64xf32>,
    %c0_44 = arith.constant 0 : index
    %c0_45 = arith.constant 0 : index
    %c0_46 = arith.constant 0 : index
    %57 = vector.load %arg11[%c0_44, %c0_45, %c0_46] : memref<6x6x64xf32, #tpu.memory_space<vmem>>, vector<6x6x64xf32>
    %58 = vector.extract_strided_slice %57 {offsets = [0, 0, 0], sizes = [4, 4, 64], strides = [1, 1, 1]} : vector<6x6x64xf32> to vector<4x4x64xf32>
    %59 = vector.extract_strided_slice %57 {offsets = [0, 1, 0], sizes = [4, 4, 64], strides = [1, 1, 1]} : vector<6x6x64xf32> to vector<4x4x64xf32>
    %60 = vector.extract_strided_slice %57 {offsets = [0, 2, 0], sizes = [4, 4, 64], strides = [1, 1, 1]} : vector<6x6x64xf32> to vector<4x4x64xf32>
    %61 = vector.extract_strided_slice %57 {offsets = [1, 0, 0], sizes = [4, 4, 64], strides = [1, 1, 1]} : vector<6x6x64xf32> to vector<4x4x64xf32>
    %62 = vector.extract_strided_slice %57 {offsets = [1, 1, 0], sizes = [4, 4, 64], strides = [1, 1, 1]} : vector<6x6x64xf32> to vector<4x4x64xf32>
    %63 = vector.extract_strided_slice %57 {offsets = [1, 2, 0], sizes = [4, 4, 64], strides = [1, 1, 1]} : vector<6x6x64xf32> to vector<4x4x64xf32>
    %64 = vector.extract_strided_slice %57 {offsets = [2, 0, 0], sizes = [4, 4, 64], strides = [1, 1, 1]} : vector<6x6x64xf32> to vector<4x4x64xf32>
    %65 = vector.extract_strided_slice %57 {offsets = [2, 1, 0], sizes = [4, 4, 64], strides = [1, 1, 1]} : vector<6x6x64xf32> to vector<4x4x64xf32>
    %66 = vector.extract_strided_slice %57 {offsets = [2, 2, 0], sizes = [4, 4, 64], strides = [1, 1, 1]} : vector<6x6x64xf32> to vector<4x4x64xf32>
    %67 = tpu.concatenate %58, %59, %60, %61, %62, %63, %64, %65, %66 in 2 : vector<4x4x64xf32>, vector<4x4x64xf32>, vector<4x4x64xf32>, vector<4x4x64xf32>, vector<4x4x64xf32>, vector<4x4x64xf32>, vector<4x4x64xf32>, vector<4x4x64xf32>, vector<4x4x64xf32> -> vector<4x4x576xf32>
    %68 = vector.shape_cast %67 : vector<4x4x576xf32> to vector<16x576xf32>
    %69 = arith.truncf %68 : vector<16x576xf32> to vector<16x576xbf16>
    %c0_47 = arith.constant 0 : index
    %c0_48 = arith.constant 0 : index
    %70 = vector.load %arg6[%c0_47, %c0_48] : memref<576x128xbf16, #tpu.memory_space<vmem>>, vector<576x128xbf16>
    %cst_49 = arith.constant dense<0.000000e+00> : vector<16x128xf32>
    %71 = tpu.matmul %69, %70, %cst_49 {dimension_numbers = #tpu.dot_dimension_numbers<[1], [0], [0], [1], [0, 0, 1, 1], [], []>} : vector<16x576xbf16>, vector<576x128xbf16>, vector<16x128xf32> -> vector<16x128xf32>
    %c0_50 = arith.constant 0 : index
    %c0_51 = arith.constant 0 : index
    %72 = vector.load %arg7[%c0_50, %c0_51] : memref<1x128xf32, #tpu.memory_space<vmem>>, vector<1x128xf32>
    %73 = vector.broadcast %72 : vector<1x128xf32> to vector<16x128xf32>
    %74 = arith.addf %71, %73 : vector<16x128xf32>
    %cst_52 = arith.constant 0.000000e+00 : f32
    %75 = vector.broadcast %cst_52 : f32 to vector<16x128xf32>
    %76 = arith.maximumf %74, %75 : vector<16x128xf32>
    %77 = vector.shape_cast %76 : vector<16x128xf32> to vector<2x2x2x2x128xf32>
    %cst_53 = arith.constant dense<0xFF800000> : vector<2x2x2x128xf32>
    %78 = vector.multi_reduction <maximumf>, %77, %cst_53 [3] : vector<2x2x2x2x128xf32> to vector<2x2x2x128xf32>
    %cst_54 = arith.constant dense<0xFF800000> : vector<2x2x128xf32>
    %79 = vector.multi_reduction <maximumf>, %78, %cst_54 [1] : vector<2x2x2x128xf32> to vector<2x2x128xf32>
    %c0_55 = arith.constant 0 : index
    %c0_56 = arith.constant 0 : index
    %c0_57 = arith.constant 0 : index
    %c0_58 = arith.constant 0 : index
    %80 = vector.load %arg8[%c0_55, %c0_56, %c0_57, %c0_58] : memref<1x2x2x128xf32, #tpu.memory_space<vmem>>, vector<1x2x2x128xf32>
    %81 = vector.shape_cast %80 : vector<1x2x2x128xf32> to vector<2x2x128xf32>
    %82 = vector.shape_cast %79 : vector<2x2x128xf32> to vector<1x2x2x128xf32>
    tpu.vector_store %arg8[%c0_55, %c0_56, %c0_57, %c0_58], %82 {strides = array<i32>} : memref<1x2x2x128xf32, #tpu.memory_space<vmem>>, vector<1x2x2x128xf32>,
    return
  }
  func.func @transform_0(%arg0: i32) -> (i32, i32, i32, i32) {
    %c0_i32 = arith.constant 0 : i32
    %c0_i32_0 = arith.constant 0 : i32
    %c0_i32_1 = arith.constant 0 : i32
    %c0_i32_2 = arith.constant 0 : i32
    return %arg0, %c0_i32, %c0_i32_0, %c0_i32_1 : i32, i32, i32, i32
  }
  func.func @transform_1(%arg0: i32) -> (i32, i32) {
    %c0_i32 = arith.constant 0 : i32
    %c0_i32_0 = arith.constant 0 : i32
    %c0_i32_1 = arith.constant 0 : i32
    return %c0_i32, %c0_i32_0 : i32, i32
  }
  func.func @transform_2(%arg0: i32) -> (i32, i32) {
    %c0_i32 = arith.constant 0 : i32
    %c0_i32_0 = arith.constant 0 : i32
    %c0_i32_1 = arith.constant 0 : i32
    return %c0_i32, %c0_i32_0 : i32, i32
  }
  func.func @transform_3(%arg0: i32) -> (i32, i32) {
    %c0_i32 = arith.constant 0 : i32
    %c0_i32_0 = arith.constant 0 : i32
    %c0_i32_1 = arith.constant 0 : i32
    return %c0_i32, %c0_i32_0 : i32, i32
  }
  func.func @transform_4(%arg0: i32) -> (i32, i32) {
    %c0_i32 = arith.constant 0 : i32
    %c0_i32_0 = arith.constant 0 : i32
    %c0_i32_1 = arith.constant 0 : i32
    return %c0_i32, %c0_i32_0 : i32, i32
  }
  func.func @transform_5(%arg0: i32) -> (i32, i32) {
    %c0_i32 = arith.constant 0 : i32
    %c0_i32_0 = arith.constant 0 : i32
    %c0_i32_1 = arith.constant 0 : i32
    return %c0_i32, %c0_i32_0 : i32, i32
  }
  func.func @transform_6(%arg0: i32) -> (i32, i32) {
    %c0_i32 = arith.constant 0 : i32
    %c0_i32_0 = arith.constant 0 : i32
    %c0_i32_1 = arith.constant 0 : i32
    return %c0_i32, %c0_i32_0 : i32, i32
  }
  func.func @transform_7(%arg0: i32) -> (i32, i32, i32, i32) {
    %c0_i32 = arith.constant 0 : i32
    %c0_i32_0 = arith.constant 0 : i32
    %c0_i32_1 = arith.constant 0 : i32
    %c0_i32_2 = arith.constant 0 : i32
    return %arg0, %c0_i32, %c0_i32_0, %c0_i32_1 : i32, i32, i32, i32
  }
}

</mosaic_0001>

<llo_original>
// kernel: cnn_forward.1
$region0: #{cnn_forward.1}
  #allocation0 [shape = 'u32[]', space=smem, size = 0x4, offset = 0x4, fixed_abs, tag = 'smem constant byte address 0x4 - core index']
  #allocation1 [shape = 'u32[144,128]{1,0:T(1,128)}', space=vmem, size = 0x12000, scoped, tag = 'internal scratch']
  #allocation2 [shape = 'f32[18,18,3]{2,1,0:T(8,128)}', space=vmem, size = 0x36000, scoped, tag = 'scratch operand']
  #allocation3 [shape = 'f32[10,10,32]{2,1,0:T(8,128)}', space=vmem, size = 0x14000, scoped, tag = 'scratch operand']
  #allocation4 [shape = 'f32[6,6,64]{2,1,0:T(8,128)}', space=vmem, size = 0x6000, scoped, tag = 'scratch operand']
  %s0 = inlined_call_operand.vmem [shape: f32[2,16,16,3], index: 0, kind: input, shape index: {}]
  %s1 = inlined_call_operand.vmem [shape: bf16[27,32], index: 1, kind: input, shape index: {}]
  %s2 = inlined_call_operand.vmem [shape: f32[1,32], index: 2, kind: input, shape index: {}]
  %s3 = inlined_call_operand.vmem [shape: bf16[288,64], index: 3, kind: input, shape index: {}]
  %s4 = inlined_call_operand.vmem [shape: f32[1,64], index: 4, kind: input, shape index: {}]
  %s5 = inlined_call_operand.vmem [shape: bf16[576,128], index: 5, kind: input, shape index: {}]
  %s6 = inlined_call_operand.vmem [shape: f32[1,128], index: 6, kind: input, shape index: {}]
  %s7 = inlined_call_operand.hbm [shape: f32[2,2,2,128], index: 7, kind: output, shape index: {}]
  %s8 = sld [smem:[#allocation0]]
  $region61: #{cnn_forward.1} parent=0
    _
  %s10 = ssub.s32 1, %s8
  %s11 = scalar_select 0, %s10, %s8
  $region1: #{cnn_forward.1} parent=0
    #allocation5 [shape = 'u8[4096]{0}', space=vmem, size = 0x1000, scoped, tag = 'output window, operand 0']
    #allocation6 [shape = 's32[2]{0}', space=sflag, size = 0x8, scoped, tag = 'scoped memory for cnn_forward.1']
    %12 = vsyncpa [#allocation6], 0
    %s13 = scalar_lea.sflag [#allocation6], 1
    %14 = vsyncpa %s13, 0
    loop: start=0, step=1, limit=4
    $region2: #{cnn_forward.1} parent=1 // loop_pre_header
      _
    $region3: #{cnn_forward.1} parent=1 // loop_header
      %s16 = sphi 0, %s20
      %p17 = scmp.ge.s32.totalorder %s16, 4
      %s26 = sphi 0, %s28
      %s29 = sphi 0, %s26
      %s30 = sphi 0, %s29
      %s46 = sphi 0, %s30
      %s50 = sphi 0, %s50
      %s52 = sphi 0, %s50
      %s53 = sphi 0, %s52
      %s67 = sphi 0, %s53
      %s71 = sphi 0, %s71
      %s73 = sphi 0, %s71
      %s74 = sphi 0, %s73
      %s88 = sphi 0, %s74
      %s92 = sphi 0, %s92
      %s94 = sphi 0, %s92
      %s95 = sphi 0, %s94
      %s109 = sphi 0, %s95
      %s113 = sphi 0, %s113
      %s115 = sphi 0, %s113
      %s116 = sphi 0, %s115
      %s130 = sphi 0, %s116
      %s134 = sphi 0, %s134
      %s136 = sphi 0, %s134
      %s137 = sphi 0, %s136
      %s151 = sphi 0, %s137
      %s155 = sphi 0, %s155
      %s157 = sphi 0, %s155
      %s158 = sphi 0, %s157
      %s172 = sphi 0, %s158
      %s178 = sphi 0, %s180
      %s181 = sphi 0, %s178
      %s182 = sphi 0, %s181
      %s198 = sphi 0, %s182
    $region4: #{cnn_forward.1} parent=1 // loop_header_branch
      %19 = sbr.rel (%p17) target = $region8
    $region5: #{cnn_forward.1} parent=1 // loop_body
      %s21 = ssub.s32 %s16, 1
      %s22 = ssub.s32 %s16, 2
      %s23 = sadd.s32 %s16, 1
      %s24 = ssub.s32 %s16, %s23
      %p25 = scmp.eq.s32.totalorder %s24, 0
      %s27 = sadd.s32 %s26, 1
      %s28 = scalar_select %p25, %s26, %s27
      %p31 = pneg %p25
      %p32 = scmp.eq.s32.totalorder %s16, 1
      %p33 = por %p31, %p32
      %p34 = scmp.ne.s32.totalorder %s26, %s29
      %p35 = scmp.eq.s32.totalorder %s16, 0
      %p36 = por %p34, %p35
      %p37 = scmp.ne.s32.totalorder %s26, %s29
      %p38 = scmp.eq.s32.totalorder %s21, 1
      %p39 = por %p37, %p38
      %p40 = scmp.ne.s32.totalorder %s29, %s30
      %p41 = scmp.eq.s32.totalorder %s21, 0
      %p42 = por %p40, %p41
      %p43 = scmp.ne.s32.totalorder %s29, %s30
      %p44 = scmp.eq.s32.totalorder %s22, 1
      %p45 = por %p43, %p44
      %p47 = scmp.ne.s32.totalorder %s30, %s46
      %p48 = scmp.eq.s32.totalorder %s22, 0
      %p49 = por %p47, %p48
      %s51 = sadd.s32 %s50, 1
      %p54 = scmp.eq.s32.totalorder %s16, 1
      %p55 = scmp.ne.s32.totalorder %s50, %s52
      %p56 = scmp.eq.s32.totalorder %s16, 0
      %p57 = por %p55, %p56
      %p58 = scmp.ne.s32.totalorder %s50, %s52
      %p59 = scmp.eq.s32.totalorder %s21, 1
      %p60 = por %p58, %p59
      %p61 = scmp.ne.s32.totalorder %s52, %s53
      %p62 = scmp.eq.s32.totalorder %s21, 0
      %p63 = por %p61, %p62
      %p64 = scmp.ne.s32.totalorder %s52, %s53
      %p65 = scmp.eq.s32.totalorder %s22, 1
      %p66 = por %p64, %p65
      %p68 = scmp.ne.s32.totalorder %s53, %s67
      %p69 = scmp.eq.s32.totalorder %s22, 0
      %p70 = por %p68, %p69
      %s72 = sadd.s32 %s71, 1
      %p75 = scmp.eq.s32.totalorder %s16, 1
      %p76 = scmp.ne.s32.totalorder %s71, %s73
      %p77 = scmp.eq.s32.totalorder %s16, 0
      %p78 = por %p76, %p77
      %p79 = scmp.ne.s32.totalorder %s71, %s73
      %p80 = scmp.eq.s32.totalorder %s21, 1
      %p81 = por %p79, %p80
      %p82 = scmp.ne.s32.totalorder %s73, %s74
      %p83 = scmp.eq.s32.totalorder %s21, 0
      %p84 = por %p82, %p83
      %p85 = scmp.ne.s32.totalorder %s73, %s74
      %p86 = scmp.eq.s32.totalorder %s22, 1
      %p87 = por %p85, %p86
      %p89 = scmp.ne.s32.totalorder %s74, %s88
      %p90 = scmp.eq.s32.totalorder %s22, 0
      %p91 = por %p89, %p90
      %s93 = sadd.s32 %s92, 1
      %p96 = scmp.eq.s32.totalorder %s16, 1
      %p97 = scmp.ne.s32.totalorder %s92, %s94
      %p98 = scmp.eq.s32.totalorder %s16, 0
      %p99 = por %p97, %p98
      %p100 = scmp.ne.s32.totalorder %s92, %s94
      %p101 = scmp.eq.s32.totalorder %s21, 1
      %p102 = por %p100, %p101
      %p103 = scmp.ne.s32.totalorder %s94, %s95
      %p104 = scmp.eq.s32.totalorder %s21, 0
      %p105 = por %p103, %p104
      %p106 = scmp.ne.s32.totalorder %s94, %s95
      %p107 = scmp.eq.s32.totalorder %s22, 1
      %p108 = por %p106, %p107
      %p110 = scmp.ne.s32.totalorder %s95, %s109
      %p111 = scmp.eq.s32.totalorder %s22, 0
      %p112 = por %p110, %p111
      %s114 = sadd.s32 %s113, 1
      %p117 = scmp.eq.s32.totalorder %s16, 1
      %p118 = scmp.ne.s32.totalorder %s113, %s115
      %p119 = scmp.eq.s32.totalorder %s16, 0
      %p120 = por %p118, %p119
      %p121 = scmp.ne.s32.totalorder %s113, %s115
      %p122 = scmp.eq.s32.totalorder %s21, 1
      %p123 = por %p121, %p122
      %p124 = scmp.ne.s32.totalorder %s115, %s116
      %p125 = scmp.eq.s32.totalorder %s21, 0
      %p126 = por %p124, %p125
      %p127 = scmp.ne.s32.totalorder %s115, %s116
      %p128 = scmp.eq.s32.totalorder %s22, 1
      %p129 = por %p127, %p128
      %p131 = scmp.ne.s32.totalorder %s116, %s130
      %p132 = scmp.eq.s32.totalorder %s22, 0
      %p133 = por %p131, %p132
      %s135 = sadd.s32 %s134, 1
      %p138 = scmp.eq.s32.totalorder %s16, 1
      %p139 = scmp.ne.s32.totalorder %s134, %s136
      %p140 = scmp.eq.s32.totalorder %s16, 0
      %p141 = por %p139, %p140
      %p142 = scmp.ne.s32.totalorder %s134, %s136
      %p143 = scmp.eq.s32.totalorder %s21, 1
      %p144 = por %p142, %p143
      %p145 = scmp.ne.s32.totalorder %s136, %s137
      %p146 = scmp.eq.s32.totalorder %s21, 0
      %p147 = por %p145, %p146
      %p148 = scmp.ne.s32.totalorder %s136, %s137
      %p149 = scmp.eq.s32.totalorder %s22, 1
      %p150 = por %p148, %p149
      %p152 = scmp.ne.s32.totalorder %s137, %s151
      %p153 = scmp.eq.s32.totalorder %s22, 0
      %p154 = por %p152, %p153
      %s156 = sadd.s32 %s155, 1
      %p159 = scmp.eq.s32.totalorder %s16, 1
      %p160 = scmp.ne.s32.totalorder %s155, %s157
      %p161 = scmp.eq.s32.totalorder %s16, 0
      %p162 = por %p160, %p161
      %p163 = scmp.ne.s32.totalorder %s155, %s157
      %p164 = scmp.eq.s32.totalorder %s21, 1
      %p165 = por %p163, %p164
      %p166 = scmp.ne.s32.totalorder %s157, %s158
      %p167 = scmp.eq.s32.totalorder %s21, 0
      %p168 = por %p166, %p167
      %p169 = scmp.ne.s32.totalorder %s157, %s158
      %p170 = scmp.eq.s32.totalorder %s22, 1
      %p171 = por %p169, %p170
      %p173 = scmp.ne.s32.totalorder %s158, %s172
      %p174 = scmp.eq.s32.totalorder %s22, 0
      %p175 = por %p173, %p174
      %s176 = ssub.s32 %s16, %s23
      %p177 = scmp.eq.s32.totalorder %s176, 0
      %s179 = sadd.s32 %s178, 1
      %s180 = scalar_select %p177, %s178, %s179
      %p183 = pneg %p177
      %p184 = scmp.eq.s32.totalorder %s16, 1
      %p185 = por %p183, %p184
      %p186 = scmp.ne.s32.totalorder %s178, %s181
      %p187 = scmp.eq.s32.totalorder %s16, 0
      %p188 = por %p186, %p187
      %p189 = scmp.ne.s32.totalorder %s178, %s181
      %p190 = scmp.eq.s32.totalorder %s21, 1
      %p191 = por %p189, %p190
      %p192 = scmp.ne.s32.totalorder %s181, %s182
      %p193 = scmp.eq.s32.totalorder %s21, 0
      %p194 = por %p192, %p193
      %p195 = scmp.ne.s32.totalorder %s181, %s182
      %p196 = scmp.eq.s32.totalorder %s22, 1
      %p197 = por %p195, %p196
      %p199 = scmp.ne.s32.totalorder %s182, %s198
      %p200 = scmp.eq.s32.totalorder %s22, 0
      %p201 = por %p199, %p200
      %p202 = scmp.le.s32.totalorder 1, %s16
      %p203 = scmp.lt.s32.totalorder %s16, 3
      %p204 = pnand %p202, %p203
      %p205 = pneg %p204
      // Predicated region
      $region9: #{cnn_forward.1} parent=5 // pred_check
        _
      $region10: #{cnn_forward.1} parent=5 // pred_check_branch
        %207 = sbr.rel (%p204) target = $region12
      $region11: #{cnn_forward.1} parent=5 // pred_region
        %s208 = ssub.s32 %s16, 1
        // Predicated region
        $region13: #{cnn_forward.1} parent=11 // pred_check
          %p209 = pneg %p63
        $region14: #{cnn_forward.1} parent=11 // pred_check_branch
          %211 = sbr.rel (%p209) target = $region16
        $region15: #{cnn_forward.1} parent=11 // pred_region
          _
        $region16: #{cnn_forward.1} parent=11 // pred_fallthru
          _
        // Predicated region
        $region17: #{cnn_forward.1} parent=11 // pred_check
          %p212 = pneg %p84
        $region18: #{cnn_forward.1} parent=11 // pred_check_branch
          %214 = sbr.rel (%p212) target = $region20
        $region19: #{cnn_forward.1} parent=11 // pred_region
          _
        $region20: #{cnn_forward.1} parent=11 // pred_fallthru
          _
        // Predicated region
        $region21: #{cnn_forward.1} parent=11 // pred_check
          %p215 = pneg %p105
        $region22: #{cnn_forward.1} parent=11 // pred_check_branch
          %217 = sbr.rel (%p215) target = $region24
        $region23: #{cnn_forward.1} parent=11 // pred_region
          _
        $region24: #{cnn_forward.1} parent=11 // pred_fallthru
          _
        // Predicated region
        $region25: #{cnn_forward.1} parent=11 // pred_check
          %p218 = pneg %p126
        $region26: #{cnn_forward.1} parent=11 // pred_check_branch
          %220 = sbr.rel (%p218) target = $region28
        $region27: #{cnn_forward.1} parent=11 // pred_region
          _
        $region28: #{cnn_forward.1} parent=11 // pred_fallthru
          _
        // Predicated region
        $region29: #{cnn_forward.1} parent=11 // pred_check
          %p221 = pneg %p147
        $region30: #{cnn_forward.1} parent=11 // pred_check_branch
          %223 = sbr.rel (%p221) target = $region32
        $region31: #{cnn_forward.1} parent=11 // pred_region
          _
        $region32: #{cnn_forward.1} parent=11 // pred_fallthru
          _
        // Predicated region
        $region33: #{cnn_forward.1} parent=11 // pred_check
          %p224 = pneg %p168
        $region34: #{cnn_forward.1} parent=11 // pred_check_branch
          %226 = sbr.rel (%p224) target = $region36
        $region35: #{cnn_forward.1} parent=11 // pred_region
          _
        $region36: #{cnn_forward.1} parent=11 // pred_fallthru
          _
      $region12: #{cnn_forward.1} parent=5 // pred_fallthru
        _
      %p227 = scmp.lt.s32.totalorder %s16, 2
      // Predicated region
      $region37: #{cnn_forward.1} parent=5 // pred_check
        %p228 = pneg %p227
      $region38: #{cnn_forward.1} parent=5 // pred_check_branch
        %230 = sbr.rel (%p228) target = $region40
      $region39: #{cnn_forward.1} parent=5 // pred_region
        // Predicated region
        $region41: #{cnn_forward.1} parent=39 // pred_check
          %p231 = pneg %p36
        $region42: #{cnn_forward.1} parent=39 // pred_check_branch
          %233 = sbr.rel (%p231) target = $region44
        $region43: #{cnn_forward.1} parent=39 // pred_region
          %p234 = scmp.lt.s32.totalorder %s16, 1
          %s235 = scalar_select %p234, %s16, 1
          %s236 = smul.addr %s235, 32
          %s237 = smul.addr %s236, 8
          %s238 = scalar_lea.vmem %s0, %s237
        $region44: #{cnn_forward.1} parent=39 // pred_fallthru
          _
      $region40: #{cnn_forward.1} parent=5 // pred_fallthru
        _
      %p239 = scmp.le.s32.totalorder 1, %s16
      %p240 = scmp.lt.s32.totalorder %s16, 3
      %p241 = pnand %p239, %p240
      %p242 = pneg %p241
      // Predicated region
      $region45: #{cnn_forward.1} parent=5 // pred_check
        _
      $region46: #{cnn_forward.1} parent=5 // pred_check_branch
        %244 = sbr.rel (%p241) target = $region48
      $region47: #{cnn_forward.1} parent=5 // pred_region
        %s245 = ssub.s32 %s16, 1
        %p246 = scmp.lt.s32.totalorder %s21, 1
        %s247 = scalar_select %p246, %s21, 1
        %s248 = smul.addr %s247, 32
        %s249 = smul.addr %s248, 8
        %s250 = scalar_lea.vmem %s0, %s249
        %p251 = pneg %p42
        %p252 = pneg %p39
        %p253 = pneg %p63
        %p254 = pneg %p60
        %p255 = pneg %p84
        %p256 = pneg %p81
        %p257 = pneg %p105
        %p258 = pneg %p102
        %p259 = pneg %p126
        %p260 = pneg %p123
        %p261 = pneg %p147
        %p262 = pneg %p144
        %p263 = pneg %p168
        %p264 = pneg %p165
        %p265 = pneg %p194
        %p266 = pneg %p191
        %s267 = sand.u32 %s181, 1
        %s268 = scalar_lea.sflag [#allocation6], %s267
        %s269 = sand.u32 %s181, 1
        %s270 = smul.addr %s269, 4
        %s271 = scalar_lea.vmem [#allocation5], %s270
        %p272 = scmp.lt.s32.totalorder %s21, 1
        %s273 = scalar_select %p272, %s21, 1
        %s274 = smul.addr %s273, 32
        %s275 = smul.addr %s274, 8
        %s276 = scalar_lea.vmem %s0, %s275
        %v278 = vld [vmem:[%s276] sm:$0xff]
        %v279 = vld [vmem:[%s276 + $0x8] sm:$0xff]
        %v280 = vld [vmem:[%s276 + $0x10] sm:$0xff]
        %v281 = vld [vmem:[%s276 + $0x18] sm:$0xff]
        %v282 = vld [vmem:[%s276 + $0x20] sm:$0xff]
        %v283 = vld [vmem:[%s276 + $0x28] sm:$0xff]
        %v284 = vld [vmem:[%s276 + $0x30] sm:$0xff]
        %v285 = vld [vmem:[%s276 + $0x38] sm:$0xff]
        %v286 = vld [vmem:[%s276 + $0x40] sm:$0xff]
        %v287 = vld [vmem:[%s276 + $0x48] sm:$0xff]
        %v288 = vld [vmem:[%s276 + $0x50] sm:$0xff]
        %v289 = vld [vmem:[%s276 + $0x58] sm:$0xff]
        %v290 = vld [vmem:[%s276 + $0x60] sm:$0xff]
        %v291 = vld [vmem:[%s276 + $0x68] sm:$0xff]
        %v292 = vld [vmem:[%s276 + $0x70] sm:$0xff]
        %v293 = vld [vmem:[%s276 + $0x78] sm:$0xff]
        %v294 = vld [vmem:[%s276 + $0x80] sm:$0xff]
        %v295 = vld [vmem:[%s276 + $0x88] sm:$0xff]
        %v296 = vld [vmem:[%s276 + $0x90] sm:$0xff]
        %v297 = vld [vmem:[%s276 + $0x98] sm:$0xff]
        %v298 = vld [vmem:[%s276 + $0xa0] sm:$0xff]
        %v299 = vld [vmem:[%s276 + $0xa8] sm:$0xff]
        %v300 = vld [vmem:[%s276 + $0xb0] sm:$0xff]
        %v301 = vld [vmem:[%s276 + $0xb8] sm:$0xff]
        %v302 = vld [vmem:[%s276 + $0xc0] sm:$0xff]
        %v303 = vld [vmem:[%s276 + $0xc8] sm:$0xff]
        %v304 = vld [vmem:[%s276 + $0xd0] sm:$0xff]
        %v305 = vld [vmem:[%s276 + $0xd8] sm:$0xff]
        %v306 = vld [vmem:[%s276 + $0xe0] sm:$0xff]
        %v307 = vld [vmem:[%s276 + $0xe8] sm:$0xff]
        %v308 = vld [vmem:[%s276 + $0xf0] sm:$0xff]
        %v309 = vld [vmem:[%s276 + $0xf8] sm:$0xff]
        %vm310 = vcmask 23552
        %311 = vst.msk [vmem:[#allocation2] sm:$0xff] %vm310, 0.0
        %312 = vst.msk [vmem:[#allocation2 + $0x8] sm:$0xff] %vm310, 0.0
        %vm313 = vcmask 17408
        %314 = vst.msk [vmem:[#allocation2 + $0x10] sm:$0x3] %vm313, 0.0
        %315 = vst.msk [vmem:[#allocation2 + $0x18] sm:$0xff] %vm310, 0.0
        %316 = vst.msk [vmem:[#allocation2 + $0x20] sm:$0xff] %vm310, 0.0
        %317 = vst.msk [vmem:[#allocation2 + $0x28] sm:$0x3] %vm313, 0.0
        %318 = vst.msk [vmem:[#allocation2 + $0x30] sm:$0xff] %vm310, 0.0
        %319 = vst.msk [vmem:[#allocation2 + $0x38] sm:$0xff] %vm310, 0.0
        %320 = vst.msk [vmem:[#allocation2 + $0x40] sm:$0x3] %vm313, 0.0
        %321 = vst.msk [vmem:[#allocation2 + $0x48] sm:$0xff] %vm310, 0.0
        %322 = vst.msk [vmem:[#allocation2 + $0x50] sm:$0xff] %vm310, 0.0
        %323 = vst.msk [vmem:[#allocation2 + $0x58] sm:$0x3] %vm313, 0.0
        %324 = vst.msk [vmem:[#allocation2 + $0x60] sm:$0xff] %vm310, 0.0
        %325 = vst.msk [vmem:[#allocation2 + $0x68] sm:$0xff] %vm310, 0.0
        %326 = vst.msk [vmem:[#allocation2 + $0x70] sm:$0x3] %vm313, 0.0
        %327 = vst.msk [vmem:[#allocation2 + $0x78] sm:$0xff] %vm310, 0.0
        %328 = vst.msk [vmem:[#allocation2 + $0x80] sm:$0xff] %vm310, 0.0
        %329 = vst.msk [vmem:[#allocation2 + $0x88] sm:$0x3] %vm313, 0.0
        %330 = vst.msk [vmem:[#allocation2 + $0x90] sm:$0xff] %vm310, 0.0
        %331 = vst.msk [vmem:[#allocation2 + $0x98] sm:$0xff] %vm310, 0.0
        %332 = vst.msk [vmem:[#allocation2 + $0xa0] sm:$0x3] %vm313, 0.0
        %333 = vst.msk [vmem:[#allocation2 + $0xa8] sm:$0xff] %vm310, 0.0
        %334 = vst.msk [vmem:[#allocation2 + $0xb0] sm:$0xff] %vm310, 0.0
        %335 = vst.msk [vmem:[#allocation2 + $0xb8] sm:$0x3] %vm313, 0.0
        %336 = vst.msk [vmem:[#allocation2 + $0xc0] sm:$0xff] %vm310, 0.0
        %337 = vst.msk [vmem:[#allocation2 + $0xc8] sm:$0xff] %vm310, 0.0
        %338 = vst.msk [vmem:[#allocation2 + $0xd0] sm:$0x3] %vm313, 0.0
        %339 = vst.msk [vmem:[#allocation2 + $0xd8] sm:$0xff] %vm310, 0.0
        %340 = vst.msk [vmem:[#allocation2 + $0xe0] sm:$0xff] %vm310, 0.0
        %341 = vst.msk [vmem:[#allocation2 + $0xe8] sm:$0x3] %vm313, 0.0
        %342 = vst.msk [vmem:[#allocation2 + $0xf0] sm:$0xff] %vm310, 0.0
        %343 = vst.msk [vmem:[#allocation2 + $0xf8] sm:$0xff] %vm310, 0.0
        %344 = vst.msk [vmem:[#allocation2 + $0x100] sm:$0x3] %vm313, 0.0
        %345 = vst.msk [vmem:[#allocation2 + $0x108] sm:$0xff] %vm310, 0.0
        %346 = vst.msk [vmem:[#allocation2 + $0x110] sm:$0xff] %vm310, 0.0
        %347 = vst.msk [vmem:[#allocation2 + $0x118] sm:$0x3] %vm313, 0.0
        %348 = vst.msk [vmem:[#allocation2 + $0x120] sm:$0xff] %vm310, 0.0
        %349 = vst.msk [vmem:[#allocation2 + $0x128] sm:$0xff] %vm310, 0.0
        %350 = vst.msk [vmem:[#allocation2 + $0x130] sm:$0x3] %vm313, 0.0
        %351 = vst.msk [vmem:[#allocation2 + $0x138] sm:$0xff] %vm310, 0.0
        %352 = vst.msk [vmem:[#allocation2 + $0x140] sm:$0xff] %vm310, 0.0
        %353 = vst.msk [vmem:[#allocation2 + $0x148] sm:$0x3] %vm313, 0.0
        %354 = vst.msk [vmem:[#allocation2 + $0x150] sm:$0xff] %vm310, 0.0
        %355 = vst.msk [vmem:[#allocation2 + $0x158] sm:$0xff] %vm310, 0.0
        %356 = vst.msk [vmem:[#allocation2 + $0x160] sm:$0x3] %vm313, 0.0
        %357 = vst.msk [vmem:[#allocation2 + $0x168] sm:$0xff] %vm310, 0.0
        %358 = vst.msk [vmem:[#allocation2 + $0x170] sm:$0xff] %vm310, 0.0
        %359 = vst.msk [vmem:[#allocation2 + $0x178] sm:$0x3] %vm313, 0.0
        %360 = vst.msk [vmem:[#allocation2 + $0x180] sm:$0xff] %vm310, 0.0
        %361 = vst.msk [vmem:[#allocation2 + $0x188] sm:$0xff] %vm310, 0.0
        %362 = vst.msk [vmem:[#allocation2 + $0x190] sm:$0x3] %vm313, 0.0
        %363 = vst.msk [vmem:[#allocation2 + $0x198] sm:$0xff] %vm310, 0.0
        %364 = vst.msk [vmem:[#allocation2 + $0x1a0] sm:$0xff] %vm310, 0.0
        %365 = vst.msk [vmem:[#allocation2 + $0x1a8] sm:$0x3] %vm313, 0.0
        %s366 = scalar_lea.vmem [#allocation2], 24
        %367 = vst.msk [vmem:[%s366 + $0x1] sm:$0xff] %vm310, %v278
        %368 = vst.msk [vmem:[%s366 + $0x9] sm:$0xff] %vm310, %v279
        %369 = vst.msk [vmem:[%s366 + $0x19] sm:$0xff] %vm310, %v280
        %370 = vst.msk [vmem:[%s366 + $0x21] sm:$0xff] %vm310, %v281
        %371 = vst.msk [vmem:[%s366 + $0x31] sm:$0xff] %vm310, %v282
        %372 = vst.msk [vmem:[%s366 + $0x39] sm:$0xff] %vm310, %v283
        %373 = vst.msk [vmem:[%s366 + $0x49] sm:$0xff] %vm310, %v284
        %374 = vst.msk [vmem:[%s366 + $0x51] sm:$0xff] %vm310, %v285
        %375 = vst.msk [vmem:[%s366 + $0x61] sm:$0xff] %vm310, %v286
        %376 = vst.msk [vmem:[%s366 + $0x69] sm:$0xff] %vm310, %v287
        %377 = vst.msk [vmem:[%s366 + $0x79] sm:$0xff] %vm310, %v288
        %378 = vst.msk [vmem:[%s366 + $0x81] sm:$0xff] %vm310, %v289
        %379 = vst.msk [vmem:[%s366 + $0x91] sm:$0xff] %vm310, %v290
        %380 = vst.msk [vmem:[%s366 + $0x99] sm:$0xff] %vm310, %v291
        %381 = vst.msk [vmem:[%s366 + $0xa9] sm:$0xff] %vm310, %v292
        %382 = vst.msk [vmem:[%s366 + $0xb1] sm:$0xff] %vm310, %v293
        %383 = vst.msk [vmem:[%s366 + $0xc1] sm:$0xff] %vm310, %v294
        %384 = vst.msk [vmem:[%s366 + $0xc9] sm:$0xff] %vm310, %v295
        %385 = vst.msk [vmem:[%s366 + $0xd9] sm:$0xff] %vm310, %v296
        %386 = vst.msk [vmem:[%s366 + $0xe1] sm:$0xff] %vm310, %v297
        %387 = vst.msk [vmem:[%s366 + $0xf1] sm:$0xff] %vm310, %v298
        %388 = vst.msk [vmem:[%s366 + $0xf9] sm:$0xff] %vm310, %v299
        %389 = vst.msk [vmem:[%s366 + $0x109] sm:$0xff] %vm310, %v300
        %390 = vst.msk [vmem:[%s366 + $0x111] sm:$0xff] %vm310, %v301
        %391 = vst.msk [vmem:[%s366 + $0x121] sm:$0xff] %vm310, %v302
        %392 = vst.msk [vmem:[%s366 + $0x129] sm:$0xff] %vm310, %v303
        %393 = vst.msk [vmem:[%s366 + $0x139] sm:$0xff] %vm310, %v304
        %394 = vst.msk [vmem:[%s366 + $0x141] sm:$0xff] %vm310, %v305
        %395 = vst.msk [vmem:[%s366 + $0x151] sm:$0xff] %vm310, %v306
        %396 = vst.msk [vmem:[%s366 + $0x159] sm:$0xff] %vm310, %v307
        %397 = vst.msk [vmem:[%s366 + $0x169] sm:$0xff] %vm310, %v308
        %398 = vst.msk [vmem:[%s366 + $0x171] sm:$0xff] %vm310, %v309
        %v399 = vld [vmem:[#allocation2] sm:$0xff]
        %v400 = vld [vmem:[#allocation2 + $0x8] sm:$0xff]
        %v401 = vld [vmem:[#allocation2 + $0x10] sm:$0x3]
        %v402 = vld [vmem:[#allocation2 + $0x18] sm:$0xff]
        %v403 = vld [vmem:[#allocation2 + $0x20] sm:$0xff]
        %v404 = vld [vmem:[#allocation2 + $0x28] sm:$0x3]
        %v405 = vld [vmem:[#allocation2 + $0x30] sm:$0xff]
        %v406 = vld [vmem:[#allocation2 + $0x38] sm:$0xff]
        %v407 = vld [vmem:[#allocation2 + $0x40] sm:$0x3]
        %v408 = vld [vmem:[#allocation2 + $0x48] sm:$0xff]
        %v409 = vld [vmem:[#allocation2 + $0x50] sm:$0xff]
        %v410 = vld [vmem:[#allocation2 + $0x58] sm:$0x3]
        %v411 = vld [vmem:[#allocation2 + $0x60] sm:$0xff]
        %v412 = vld [vmem:[#allocation2 + $0x68] sm:$0xff]
        %v413 = vld [vmem:[#allocation2 + $0x70] sm:$0x3]
        %v414 = vld [vmem:[#allocation2 + $0x78] sm:$0xff]
        %v415 = vld [vmem:[#allocation2 + $0x80] sm:$0xff]
        %v416 = vld [vmem:[#allocation2 + $0x88] sm:$0x3]
        %v417 = vld [vmem:[#allocation2 + $0x90] sm:$0xff]
        %v418 = vld [vmem:[#allocation2 + $0x98] sm:$0xff]
        %v419 = vld [vmem:[#allocation2 + $0xa0] sm:$0x3]
        %v420 = vld [vmem:[#allocation2 + $0xa8] sm:$0xff]
        %v421 = vld [vmem:[#allocation2 + $0xb0] sm:$0xff]
        %v422 = vld [vmem:[#allocation2 + $0xb8] sm:$0x3]
        %v423 = vld [vmem:[#allocation2 + $0xc0] sm:$0xff]
        %v424 = vld [vmem:[#allocation2 + $0xc8] sm:$0xff]
        %v425 = vld [vmem:[#allocation2 + $0xd0] sm:$0x3]
        %v426 = vld [vmem:[#allocation2 + $0xd8] sm:$0xff]
        %v427 = vld [vmem:[#allocation2 + $0xe0] sm:$0xff]
        %v428 = vld [vmem:[#allocation2 + $0xe8] sm:$0x3]
        %v429 = vld [vmem:[#allocation2 + $0xf0] sm:$0xff]
        %v430 = vld [vmem:[#allocation2 + $0xf8] sm:$0xff]
        %v431 = vld [vmem:[#allocation2 + $0x100] sm:$0x3]
        %v432 = vld [vmem:[#allocation2 + $0x108] sm:$0xff]
        %v433 = vld [vmem:[#allocation2 + $0x110] sm:$0xff]
        %v434 = vld [vmem:[#allocation2 + $0x118] sm:$0x3]
        %v435 = vld [vmem:[#allocation2 + $0x120] sm:$0xff]
        %v436 = vld [vmem:[#allocation2 + $0x128] sm:$0xff]
        %v437 = vld [vmem:[#allocation2 + $0x130] sm:$0x3]
        %v438 = vld [vmem:[#allocation2 + $0x138] sm:$0xff]
        %v439 = vld [vmem:[#allocation2 + $0x140] sm:$0xff]
        %v440 = vld [vmem:[#allocation2 + $0x148] sm:$0x3]
        %v441 = vld [vmem:[#allocation2 + $0x150] sm:$0xff]
        %v442 = vld [vmem:[#allocation2 + $0x158] sm:$0xff]
        %v443 = vld [vmem:[#allocation2 + $0x160] sm:$0x3]
        %v444 = vld [vmem:[#allocation2 + $0x168] sm:$0xff]
        %v445 = vld [vmem:[#allocation2 + $0x170] sm:$0xff]
        %v446 = vld [vmem:[#allocation2 + $0x178] sm:$0x3]
        %v447 = vld [vmem:[#allocation2 + $0x180] sm:$0xff]
        %v448 = vld [vmem:[#allocation2 + $0x188] sm:$0xff]
        %v449 = vld [vmem:[#allocation2 + $0x190] sm:$0x3]
        %v450 = vld [vmem:[#allocation2 + $0x198] sm:$0xff]
        %v451 = vld [vmem:[#allocation2 + $0x1a0] sm:$0xff]
        %v452 = vld [vmem:[#allocation2 + $0x1a8] sm:$0x3]
        %vm501 = vcmask 1046528
        %v502 = vrot.slane %v399, 1
        %v503 = vrot.slane %v400, 1
        %v504 = vsel %vm501, %v502, %v503
        %v505 = vrot.slane %v401, 1
        %v506 = vsel %vm501, %v503, %v505
        %v507 = vrot.slane %v402, 1
        %v508 = vrot.slane %v403, 1
        %v509 = vsel %vm501, %v507, %v508
        %v510 = vrot.slane %v404, 1
        %v511 = vsel %vm501, %v508, %v510
        %v512 = vrot.slane %v405, 1
        %v513 = vrot.slane %v406, 1
        %v514 = vsel %vm501, %v512, %v513
        %v515 = vrot.slane %v407, 1
        %v516 = vsel %vm501, %v513, %v515
        %v517 = vrot.slane %v408, 1
        %v518 = vrot.slane %v409, 1
        %v519 = vsel %vm501, %v517, %v518
        %v520 = vrot.slane %v410, 1
        %v521 = vsel %vm501, %v518, %v520
        %v522 = vrot.slane %v411, 1
        %v523 = vrot.slane %v412, 1
        %v524 = vsel %vm501, %v522, %v523
        %v525 = vrot.slane %v413, 1
        %v526 = vsel %vm501, %v523, %v525
        %v527 = vrot.slane %v414, 1
        %v528 = vrot.slane %v415, 1
        %v529 = vsel %vm501, %v527, %v528
        %v530 = vrot.slane %v416, 1
        %v531 = vsel %vm501, %v528, %v530
        %v532 = vrot.slane %v417, 1
        %v533 = vrot.slane %v418, 1
        %v534 = vsel %vm501, %v532, %v533
        %v535 = vrot.slane %v419, 1
        %v536 = vsel %vm501, %v533, %v535
        %v537 = vrot.slane %v420, 1
        %v538 = vrot.slane %v421, 1
        %v539 = vsel %vm501, %v537, %v538
        %v540 = vrot.slane %v422, 1
        %v541 = vsel %vm501, %v538, %v540
        %v542 = vrot.slane %v423, 1
        %v543 = vrot.slane %v424, 1
        %v544 = vsel %vm501, %v542, %v543
        %v545 = vrot.slane %v425, 1
        %v546 = vsel %vm501, %v543, %v545
        %v547 = vrot.slane %v426, 1
        %v548 = vrot.slane %v427, 1
        %v549 = vsel %vm501, %v547, %v548
        %v550 = vrot.slane %v428, 1
        %v551 = vsel %vm501, %v548, %v550
        %v552 = vrot.slane %v429, 1
        %v553 = vrot.slane %v430, 1
        %v554 = vsel %vm501, %v552, %v553
        %v555 = vrot.slane %v431, 1
        %v556 = vsel %vm501, %v553, %v555
        %v557 = vrot.slane %v432, 1
        %v558 = vrot.slane %v433, 1
        %v559 = vsel %vm501, %v557, %v558
        %v560 = vrot.slane %v434, 1
        %v561 = vsel %vm501, %v558, %v560
        %v562 = vrot.slane %v435, 1
        %v563 = vrot.slane %v436, 1
        %v564 = vsel %vm501, %v562, %v563
        %v565 = vrot.slane %v437, 1
        %v566 = vsel %vm501, %v563, %v565
        %v567 = vrot.slane %v438, 1
        %v568 = vrot.slane %v439, 1
        %v569 = vsel %vm501, %v567, %v568
        %v570 = vrot.slane %v440, 1
        %v571 = vsel %vm501, %v568, %v570
        %v572 = vrot.slane %v441, 1
        %v573 = vrot.slane %v442, 1
        %v574 = vsel %vm501, %v572, %v573
        %v575 = vrot.slane %v443, 1
        %v576 = vsel %vm501, %v573, %v575
        %v577 = vrot.slane %v444, 1
        %v578 = vrot.slane %v445, 1
        %v579 = vsel %vm501, %v577, %v578
        %v580 = vrot.slane %v446, 1
        %v581 = vsel %vm501, %v578, %v580
        %582 = vrot.lane.b32.xlu0 %v504, 3
        %v583 = vpop.permute.xlu0 %582
        %584 = vrot.lane.b32.xlu0 %v506, 3
        %v585 = vpop.permute.xlu0 %584
        %586 = vrot.lane.b32.xlu0 %v509, 3
        %v587 = vpop.permute.xlu0 %586
        %588 = vrot.lane.b32.xlu0 %v511, 3
        %v589 = vpop.permute.xlu0 %588
        %590 = vrot.lane.b32.xlu0 %v514, 3
        %v591 = vpop.permute.xlu0 %590
        %592 = vrot.lane.b32.xlu0 %v516, 3
        %v593 = vpop.permute.xlu0 %592
        %594 = vrot.lane.b32.xlu0 %v519, 3
        %v595 = vpop.permute.xlu0 %594
        %596 = vrot.lane.b32.xlu0 %v521, 3
        %v597 = vpop.permute.xlu0 %596
        %598 = vrot.lane.b32.xlu0 %v524, 3
        %v599 = vpop.permute.xlu0 %598
        %600 = vrot.lane.b32.xlu0 %v526, 3
        %v601 = vpop.permute.xlu0 %600
        %602 = vrot.lane.b32.xlu0 %v529, 3
        %v603 = vpop.permute.xlu0 %602
        %604 = vrot.lane.b32.xlu0 %v531, 3
        %v605 = vpop.permute.xlu0 %604
        %606 = vrot.lane.b32.xlu0 %v534, 3
        %v607 = vpop.permute.xlu0 %606
        %608 = vrot.lane.b32.xlu0 %v536, 3
        %v609 = vpop.permute.xlu0 %608
        %610 = vrot.lane.b32.xlu0 %v539, 3
        %v611 = vpop.permute.xlu0 %610
        %612 = vrot.lane.b32.xlu0 %v541, 3
        %v613 = vpop.permute.xlu0 %612
        %614 = vrot.lane.b32.xlu0 %v544, 3
        %v615 = vpop.permute.xlu0 %614
        %616 = vrot.lane.b32.xlu0 %v546, 3
        %v617 = vpop.permute.xlu0 %616
        %618 = vrot.lane.b32.xlu0 %v549, 3
        %v619 = vpop.permute.xlu0 %618
        %620 = vrot.lane.b32.xlu0 %v551, 3
        %v621 = vpop.permute.xlu0 %620
        %622 = vrot.lane.b32.xlu0 %v554, 3
        %v623 = vpop.permute.xlu0 %622
        %624 = vrot.lane.b32.xlu0 %v556, 3
        %v625 = vpop.permute.xlu0 %624
        %626 = vrot.lane.b32.xlu0 %v559, 3
        %v627 = vpop.permute.xlu0 %626
        %628 = vrot.lane.b32.xlu0 %v561, 3
        %v629 = vpop.permute.xlu0 %628
        %630 = vrot.lane.b32.xlu0 %v564, 3
        %v631 = vpop.permute.xlu0 %630
        %632 = vrot.lane.b32.xlu0 %v566, 3
        %v633 = vpop.permute.xlu0 %632
        %634 = vrot.lane.b32.xlu0 %v569, 3
        %v635 = vpop.permute.xlu0 %634
        %636 = vrot.lane.b32.xlu0 %v571, 3
        %v637 = vpop.permute.xlu0 %636
        %638 = vrot.lane.b32.xlu0 %v574, 3
        %v639 = vpop.permute.xlu0 %638
        %640 = vrot.lane.b32.xlu0 %v576, 3
        %v641 = vpop.permute.xlu0 %640
        %642 = vrot.lane.b32.xlu0 %v579, 3
        %v643 = vpop.permute.xlu0 %642
        %644 = vrot.lane.b32.xlu0 %v581, 3
        %v645 = vpop.permute.xlu0 %644
        %vm678 = vcmask 1045504
        %v679 = vrot.slane %v399, 2
        %v680 = vrot.slane %v400, 2
        %v681 = vsel %vm678, %v679, %v680
        %v682 = vrot.slane %v401, 2
        %v683 = vsel %vm678, %v680, %v682
        %v684 = vrot.slane %v402, 2
        %v685 = vrot.slane %v403, 2
        %v686 = vsel %vm678, %v684, %v685
        %v687 = vrot.slane %v404, 2
        %v688 = vsel %vm678, %v685, %v687
        %v689 = vrot.slane %v405, 2
        %v690 = vrot.slane %v406, 2
        %v691 = vsel %vm678, %v689, %v690
        %v692 = vrot.slane %v407, 2
        %v693 = vsel %vm678, %v690, %v692
        %v694 = vrot.slane %v408, 2
        %v695 = vrot.slane %v409, 2
        %v696 = vsel %vm678, %v694, %v695
        %v697 = vrot.slane %v410, 2
        %v698 = vsel %vm678, %v695, %v697
        %v699 = vrot.slane %v411, 2
        %v700 = vrot.slane %v412, 2
        %v701 = vsel %vm678, %v699, %v700
        %v702 = vrot.slane %v413, 2
        %v703 = vsel %vm678, %v700, %v702
        %v704 = vrot.slane %v414, 2
        %v705 = vrot.slane %v415, 2
        %v706 = vsel %vm678, %v704, %v705
        %v707 = vrot.slane %v416, 2
        %v708 = vsel %vm678, %v705, %v707
        %v709 = vrot.slane %v417, 2
        %v710 = vrot.slane %v418, 2
        %v711 = vsel %vm678, %v709, %v710
        %v712 = vrot.slane %v419, 2
        %v713 = vsel %vm678, %v710, %v712
        %v714 = vrot.slane %v420, 2
        %v715 = vrot.slane %v421, 2
        %v716 = vsel %vm678, %v714, %v715
        %v717 = vrot.slane %v422, 2
        %v718 = vsel %vm678, %v715, %v717
        %v719 = vrot.slane %v423, 2
        %v720 = vrot.slane %v424, 2
        %v721 = vsel %vm678, %v719, %v720
        %v722 = vrot.slane %v425, 2
        %v723 = vsel %vm678, %v720, %v722
        %v724 = vrot.slane %v426, 2
        %v725 = vrot.slane %v427, 2
        %v726 = vsel %vm678, %v724, %v725
        %v727 = vrot.slane %v428, 2
        %v728 = vsel %vm678, %v725, %v727
        %v729 = vrot.slane %v429, 2
        %v730 = vrot.slane %v430, 2
        %v731 = vsel %vm678, %v729, %v730
        %v732 = vrot.slane %v431, 2
        %v733 = vsel %vm678, %v730, %v732
        %v734 = vrot.slane %v432, 2
        %v735 = vrot.slane %v433, 2
        %v736 = vsel %vm678, %v734, %v735
        %v737 = vrot.slane %v434, 2
        %v738 = vsel %vm678, %v735, %v737
        %v739 = vrot.slane %v435, 2
        %v740 = vrot.slane %v436, 2
        %v741 = vsel %vm678, %v739, %v740
        %v742 = vrot.slane %v437, 2
        %v743 = vsel %vm678, %v740, %v742
        %v744 = vrot.slane %v438, 2
        %v745 = vrot.slane %v439, 2
        %v746 = vsel %vm678, %v744, %v745
        %v747 = vrot.slane %v440, 2
        %v748 = vsel %vm678, %v745, %v747
        %v749 = vrot.slane %v441, 2
        %v750 = vrot.slane %v442, 2
        %v751 = vsel %vm678, %v749, %v750
        %v752 = vrot.slane %v443, 2
        %v753 = vsel %vm678, %v750, %v752
        %v754 = vrot.slane %v444, 2
        %v755 = vrot.slane %v445, 2
        %v756 = vsel %vm678, %v754, %v755
        %v757 = vrot.slane %v446, 2
        %v758 = vsel %vm678, %v755, %v757
        %759 = vrot.lane.b32.xlu0 %v681, 6
        %v760 = vpop.permute.xlu0 %759
        %761 = vrot.lane.b32.xlu0 %v683, 6
        %v762 = vpop.permute.xlu0 %761
        %763 = vrot.lane.b32.xlu0 %v686, 6
        %v764 = vpop.permute.xlu0 %763
        %765 = vrot.lane.b32.xlu0 %v688, 6
        %v766 = vpop.permute.xlu0 %765
        %767 = vrot.lane.b32.xlu0 %v691, 6
        %v768 = vpop.permute.xlu0 %767
        %769 = vrot.lane.b32.xlu0 %v693, 6
        %v770 = vpop.permute.xlu0 %769
        %771 = vrot.lane.b32.xlu0 %v696, 6
        %v772 = vpop.permute.xlu0 %771
        %773 = vrot.lane.b32.xlu0 %v698, 6
        %v774 = vpop.permute.xlu0 %773
        %775 = vrot.lane.b32.xlu0 %v701, 6
        %v776 = vpop.permute.xlu0 %775
        %777 = vrot.lane.b32.xlu0 %v703, 6
        %v778 = vpop.permute.xlu0 %777
        %779 = vrot.lane.b32.xlu0 %v706, 6
        %v780 = vpop.permute.xlu0 %779
        %781 = vrot.lane.b32.xlu0 %v708, 6
        %v782 = vpop.permute.xlu0 %781
        %783 = vrot.lane.b32.xlu0 %v711, 6
        %v784 = vpop.permute.xlu0 %783
        %785 = vrot.lane.b32.xlu0 %v713, 6
        %v786 = vpop.permute.xlu0 %785
        %787 = vrot.lane.b32.xlu0 %v716, 6
        %v788 = vpop.permute.xlu0 %787
        %789 = vrot.lane.b32.xlu0 %v718, 6
        %v790 = vpop.permute.xlu0 %789
        %791 = vrot.lane.b32.xlu0 %v721, 6
        %v792 = vpop.permute.xlu0 %791
        %793 = vrot.lane.b32.xlu0 %v723, 6
        %v794 = vpop.permute.xlu0 %793
        %795 = vrot.lane.b32.xlu0 %v726, 6
        %v796 = vpop.permute.xlu0 %795
        %797 = vrot.lane.b32.xlu0 %v728, 6
        %v798 = vpop.permute.xlu0 %797
        %799 = vrot.lane.b32.xlu0 %v731, 6
        %v800 = vpop.permute.xlu0 %799
        %801 = vrot.lane.b32.xlu0 %v733, 6
        %v802 = vpop.permute.xlu0 %801
        %803 = vrot.lane.b32.xlu0 %v736, 6
        %v804 = vpop.permute.xlu0 %803
        %805 = vrot.lane.b32.xlu0 %v738, 6
        %v806 = vpop.permute.xlu0 %805
        %807 = vrot.lane.b32.xlu0 %v741, 6
        %v808 = vpop.permute.xlu0 %807
        %809 = vrot.lane.b32.xlu0 %v743, 6
        %v810 = vpop.permute.xlu0 %809
        %811 = vrot.lane.b32.xlu0 %v746, 6
        %v812 = vpop.permute.xlu0 %811
        %813 = vrot.lane.b32.xlu0 %v748, 6
        %v814 = vpop.permute.xlu0 %813
        %815 = vrot.lane.b32.xlu0 %v751, 6
        %v816 = vpop.permute.xlu0 %815
        %817 = vrot.lane.b32.xlu0 %v753, 6
        %v818 = vpop.permute.xlu0 %817
        %819 = vrot.lane.b32.xlu0 %v756, 6
        %v820 = vpop.permute.xlu0 %819
        %821 = vrot.lane.b32.xlu0 %v758, 6
        %v822 = vpop.permute.xlu0 %821
        %857 = vrot.lane.b32.xlu0 %v402, 9
        %v858 = vpop.permute.xlu0 %857
        %859 = vrot.lane.b32.xlu0 %v403, 9
        %v860 = vpop.permute.xlu0 %859
        %861 = vrot.lane.b32.xlu0 %v405, 9
        %v862 = vpop.permute.xlu0 %861
        %863 = vrot.lane.b32.xlu0 %v406, 9
        %v864 = vpop.permute.xlu0 %863
        %865 = vrot.lane.b32.xlu0 %v408, 9
        %v866 = vpop.permute.xlu0 %865
        %867 = vrot.lane.b32.xlu0 %v409, 9
        %v868 = vpop.permute.xlu0 %867
        %869 = vrot.lane.b32.xlu0 %v411, 9
        %v870 = vpop.permute.xlu0 %869
        %871 = vrot.lane.b32.xlu0 %v412, 9
        %v872 = vpop.permute.xlu0 %871
        %873 = vrot.lane.b32.xlu0 %v414, 9
        %v874 = vpop.permute.xlu0 %873
        %875 = vrot.lane.b32.xlu0 %v415, 9
        %v876 = vpop.permute.xlu0 %875
        %877 = vrot.lane.b32.xlu0 %v417, 9
        %v878 = vpop.permute.xlu0 %877
        %879 = vrot.lane.b32.xlu0 %v418, 9
        %v880 = vpop.permute.xlu0 %879
        %881 = vrot.lane.b32.xlu0 %v420, 9
        %v882 = vpop.permute.xlu0 %881
        %883 = vrot.lane.b32.xlu0 %v421, 9
        %v884 = vpop.permute.xlu0 %883
        %885 = vrot.lane.b32.xlu0 %v423, 9
        %v886 = vpop.permute.xlu0 %885
        %887 = vrot.lane.b32.xlu0 %v424, 9
        %v888 = vpop.permute.xlu0 %887
        %889 = vrot.lane.b32.xlu0 %v426, 9
        %v890 = vpop.permute.xlu0 %889
        %891 = vrot.lane.b32.xlu0 %v427, 9
        %v892 = vpop.permute.xlu0 %891
        %893 = vrot.lane.b32.xlu0 %v429, 9
        %v894 = vpop.permute.xlu0 %893
        %895 = vrot.lane.b32.xlu0 %v430, 9
        %v896 = vpop.permute.xlu0 %895
        %897 = vrot.lane.b32.xlu0 %v432, 9
        %v898 = vpop.permute.xlu0 %897
        %899 = vrot.lane.b32.xlu0 %v433, 9
        %v900 = vpop.permute.xlu0 %899
        %901 = vrot.lane.b32.xlu0 %v435, 9
        %v902 = vpop.permute.xlu0 %901
        %903 = vrot.lane.b32.xlu0 %v436, 9
        %v904 = vpop.permute.xlu0 %903
        %905 = vrot.lane.b32.xlu0 %v438, 9
        %v906 = vpop.permute.xlu0 %905
        %907 = vrot.lane.b32.xlu0 %v439, 9
        %v908 = vpop.permute.xlu0 %907
        %909 = vrot.lane.b32.xlu0 %v441, 9
        %v910 = vpop.permute.xlu0 %909
        %911 = vrot.lane.b32.xlu0 %v442, 9
        %v912 = vpop.permute.xlu0 %911
        %913 = vrot.lane.b32.xlu0 %v444, 9
        %v914 = vpop.permute.xlu0 %913
        %915 = vrot.lane.b32.xlu0 %v445, 9
        %v916 = vpop.permute.xlu0 %915
        %917 = vrot.lane.b32.xlu0 %v447, 9
        %v918 = vpop.permute.xlu0 %917
        %919 = vrot.lane.b32.xlu0 %v448, 9
        %v920 = vpop.permute.xlu0 %919
        %v954 = vrot.slane %v447, 1
        %v955 = vrot.slane %v448, 1
        %v956 = vsel %vm501, %v954, %v955
        %v957 = vrot.slane %v449, 1
        %v958 = vsel %vm501, %v955, %v957
        %959 = vrot.lane.b32.xlu0 %v509, 12
        %v960 = vpop.permute.xlu0 %959
        %961 = vrot.lane.b32.xlu0 %v511, 12
        %v962 = vpop.permute.xlu0 %961
        %963 = vrot.lane.b32.xlu0 %v514, 12
        %v964 = vpop.permute.xlu0 %963
        %965 = vrot.lane.b32.xlu0 %v516, 12
        %v966 = vpop.permute.xlu0 %965
        %967 = vrot.lane.b32.xlu0 %v519, 12
        %v968 = vpop.permute.xlu0 %967
        %969 = vrot.lane.b32.xlu0 %v521, 12
        %v970 = vpop.permute.xlu0 %969
        %971 = vrot.lane.b32.xlu0 %v524, 12
        %v972 = vpop.permute.xlu0 %971
        %973 = vrot.lane.b32.xlu0 %v526, 12
        %v974 = vpop.permute.xlu0 %973
        %975 = vrot.lane.b32.xlu0 %v529, 12
        %v976 = vpop.permute.xlu0 %975
        %977 = vrot.lane.b32.xlu0 %v531, 12
        %v978 = vpop.permute.xlu0 %977
        %979 = vrot.lane.b32.xlu0 %v534, 12
        %v980 = vpop.permute.xlu0 %979
        %981 = vrot.lane.b32.xlu0 %v536, 12
        %v982 = vpop.permute.xlu0 %981
        %983 = vrot.lane.b32.xlu0 %v539, 12
        %v984 = vpop.permute.xlu0 %983
        %985 = vrot.lane.b32.xlu0 %v541, 12
        %v986 = vpop.permute.xlu0 %985
        %987 = vrot.lane.b32.xlu0 %v544, 12
        %v988 = vpop.permute.xlu0 %987
        %989 = vrot.lane.b32.xlu0 %v546, 12
        %v990 = vpop.permute.xlu0 %989
        %991 = vrot.lane.b32.xlu0 %v549, 12
        %v992 = vpop.permute.xlu0 %991
        %993 = vrot.lane.b32.xlu0 %v551, 12
        %v994 = vpop.permute.xlu0 %993
        %995 = vrot.lane.b32.xlu0 %v554, 12
        %v996 = vpop.permute.xlu0 %995
        %997 = vrot.lane.b32.xlu0 %v556, 12
        %v998 = vpop.permute.xlu0 %997
        %999 = vrot.lane.b32.xlu0 %v559, 12
        %v1000 = vpop.permute.xlu0 %999
        %1001 = vrot.lane.b32.xlu0 %v561, 12
        %v1002 = vpop.permute.xlu0 %1001
        %1003 = vrot.lane.b32.xlu0 %v564, 12
        %v1004 = vpop.permute.xlu0 %1003
        %1005 = vrot.lane.b32.xlu0 %v566, 12
        %v1006 = vpop.permute.xlu0 %1005
        %1007 = vrot.lane.b32.xlu0 %v569, 12
        %v1008 = vpop.permute.xlu0 %1007
        %1009 = vrot.lane.b32.xlu0 %v571, 12
        %v1010 = vpop.permute.xlu0 %1009
        %1011 = vrot.lane.b32.xlu0 %v574, 12
        %v1012 = vpop.permute.xlu0 %1011
        %1013 = vrot.lane.b32.xlu0 %v576, 12
        %v1014 = vpop.permute.xlu0 %1013
        %1015 = vrot.lane.b32.xlu0 %v579, 12
        %v1016 = vpop.permute.xlu0 %1015
        %1017 = vrot.lane.b32.xlu0 %v581, 12
        %v1018 = vpop.permute.xlu0 %1017
        %1019 = vrot.lane.b32.xlu0 %v956, 12
        %v1020 = vpop.permute.xlu0 %1019
        %1021 = vrot.lane.b32.xlu0 %v958, 12
        %v1022 = vpop.permute.xlu0 %1021
        %v1055 = vrot.slane %v447, 2
        %v1056 = vrot.slane %v448, 2
        %v1057 = vsel %vm678, %v1055, %v1056
        %v1058 = vrot.slane %v449, 2
        %v1059 = vsel %vm678, %v1056, %v1058
        %1060 = vrot.lane.b32.xlu0 %v686, 15
        %v1061 = vpop.permute.xlu0 %1060
        %1062 = vrot.lane.b32.xlu0 %v688, 15
        %v1063 = vpop.permute.xlu0 %1062
        %1064 = vrot.lane.b32.xlu0 %v691, 15
        %v1065 = vpop.permute.xlu0 %1064
        %1066 = vrot.lane.b32.xlu0 %v693, 15
        %v1067 = vpop.permute.xlu0 %1066
        %1068 = vrot.lane.b32.xlu0 %v696, 15
        %v1069 = vpop.permute.xlu0 %1068
        %1070 = vrot.lane.b32.xlu0 %v698, 15
        %v1071 = vpop.permute.xlu0 %1070
        %1072 = vrot.lane.b32.xlu0 %v701, 15
        %v1073 = vpop.permute.xlu0 %1072
        %1074 = vrot.lane.b32.xlu0 %v703, 15
        %v1075 = vpop.permute.xlu0 %1074
        %1076 = vrot.lane.b32.xlu0 %v706, 15
        %v1077 = vpop.permute.xlu0 %1076
        %1078 = vrot.lane.b32.xlu0 %v708, 15
        %v1079 = vpop.permute.xlu0 %1078
        %1080 = vrot.lane.b32.xlu0 %v711, 15
        %v1081 = vpop.permute.xlu0 %1080
        %1082 = vrot.lane.b32.xlu0 %v713, 15
        %v1083 = vpop.permute.xlu0 %1082
        %1084 = vrot.lane.b32.xlu0 %v716, 15
        %v1085 = vpop.permute.xlu0 %1084
        %1086 = vrot.lane.b32.xlu0 %v718, 15
        %v1087 = vpop.permute.xlu0 %1086
        %1088 = vrot.lane.b32.xlu0 %v721, 15
        %v1089 = vpop.permute.xlu0 %1088
        %1090 = vrot.lane.b32.xlu0 %v723, 15
        %v1091 = vpop.permute.xlu0 %1090
        %1092 = vrot.lane.b32.xlu0 %v726, 15
        %v1093 = vpop.permute.xlu0 %1092
        %1094 = vrot.lane.b32.xlu0 %v728, 15
        %v1095 = vpop.permute.xlu0 %1094
        %1096 = vrot.lane.b32.xlu0 %v731, 15
        %v1097 = vpop.permute.xlu0 %1096
        %1098 = vrot.lane.b32.xlu0 %v733, 15
        %v1099 = vpop.permute.xlu0 %1098
        %1100 = vrot.lane.b32.xlu0 %v736, 15
        %v1101 = vpop.permute.xlu0 %1100
        %1102 = vrot.lane.b32.xlu0 %v738, 15
        %v1103 = vpop.permute.xlu0 %1102
        %1104 = vrot.lane.b32.xlu0 %v741, 15
        %v1105 = vpop.permute.xlu0 %1104
        %1106 = vrot.lane.b32.xlu0 %v743, 15
        %v1107 = vpop.permute.xlu0 %1106
        %1108 = vrot.lane.b32.xlu0 %v746, 15
        %v1109 = vpop.permute.xlu0 %1108
        %1110 = vrot.lane.b32.xlu0 %v748, 15
        %v1111 = vpop.permute.xlu0 %1110
        %1112 = vrot.lane.b32.xlu0 %v751, 15
        %v1113 = vpop.permute.xlu0 %1112
        %1114 = vrot.lane.b32.xlu0 %v753, 15
        %v1115 = vpop.permute.xlu0 %1114
        %1116 = vrot.lane.b32.xlu0 %v756, 15
        %v1117 = vpop.permute.xlu0 %1116
        %1118 = vrot.lane.b32.xlu0 %v758, 15
        %v1119 = vpop.permute.xlu0 %1118
        %1120 = vrot.lane.b32.xlu0 %v1057, 15
        %v1121 = vpop.permute.xlu0 %1120
        %1122 = vrot.lane.b32.xlu0 %v1059, 15
        %v1123 = vpop.permute.xlu0 %1122
        %1158 = vrot.lane.b32.xlu0 %v405, 18
        %v1159 = vpop.permute.xlu0 %1158
        %1160 = vrot.lane.b32.xlu0 %v406, 18
        %v1161 = vpop.permute.xlu0 %1160
        %1162 = vrot.lane.b32.xlu0 %v408, 18
        %v1163 = vpop.permute.xlu0 %1162
        %1164 = vrot.lane.b32.xlu0 %v409, 18
        %v1165 = vpop.permute.xlu0 %1164
        %1166 = vrot.lane.b32.xlu0 %v411, 18
        %v1167 = vpop.permute.xlu0 %1166
        %1168 = vrot.lane.b32.xlu0 %v412, 18
        %v1169 = vpop.permute.xlu0 %1168
        %1170 = vrot.lane.b32.xlu0 %v414, 18
        %v1171 = vpop.permute.xlu0 %1170
        %1172 = vrot.lane.b32.xlu0 %v415, 18
        %v1173 = vpop.permute.xlu0 %1172
        %1174 = vrot.lane.b32.xlu0 %v417, 18
        %v1175 = vpop.permute.xlu0 %1174
        %1176 = vrot.lane.b32.xlu0 %v418, 18
        %v1177 = vpop.permute.xlu0 %1176
        %1178 = vrot.lane.b32.xlu0 %v420, 18
        %v1179 = vpop.permute.xlu0 %1178
        %1180 = vrot.lane.b32.xlu0 %v421, 18
        %v1181 = vpop.permute.xlu0 %1180
        %1182 = vrot.lane.b32.xlu0 %v423, 18
        %v1183 = vpop.permute.xlu0 %1182
        %1184 = vrot.lane.b32.xlu0 %v424, 18
        %v1185 = vpop.permute.xlu0 %1184
        %1186 = vrot.lane.b32.xlu0 %v426, 18
        %v1187 = vpop.permute.xlu0 %1186
        %1188 = vrot.lane.b32.xlu0 %v427, 18
        %v1189 = vpop.permute.xlu0 %1188
        %1190 = vrot.lane.b32.xlu0 %v429, 18
        %v1191 = vpop.permute.xlu0 %1190
        %1192 = vrot.lane.b32.xlu0 %v430, 18
        %v1193 = vpop.permute.xlu0 %1192
        %1194 = vrot.lane.b32.xlu0 %v432, 18
        %v1195 = vpop.permute.xlu0 %1194
        %1196 = vrot.lane.b32.xlu0 %v433, 18
        %v1197 = vpop.permute.xlu0 %1196
        %1198 = vrot.lane.b32.xlu0 %v435, 18
        %v1199 = vpop.permute.xlu0 %1198
        %1200 = vrot.lane.b32.xlu0 %v436, 18
        %v1201 = vpop.permute.xlu0 %1200
        %1202 = vrot.lane.b32.xlu0 %v438, 18
        %v1203 = vpop.permute.xlu0 %1202
        %1204 = vrot.lane.b32.xlu0 %v439, 18
        %v1205 = vpop.permute.xlu0 %1204
        %1206 = vrot.lane.b32.xlu0 %v441, 18
        %v1207 = vpop.permute.xlu0 %1206
        %1208 = vrot.lane.b32.xlu0 %v442, 18
        %v1209 = vpop.permute.xlu0 %1208
        %1210 = vrot.lane.b32.xlu0 %v444, 18
        %v1211 = vpop.permute.xlu0 %1210
        %1212 = vrot.lane.b32.xlu0 %v445, 18
        %v1213 = vpop.permute.xlu0 %1212
        %1214 = vrot.lane.b32.xlu0 %v447, 18
        %v1215 = vpop.permute.xlu0 %1214
        %1216 = vrot.lane.b32.xlu0 %v448, 18
        %v1217 = vpop.permute.xlu0 %1216
        %1218 = vrot.lane.b32.xlu0 %v450, 18
        %v1219 = vpop.permute.xlu0 %1218
        %1220 = vrot.lane.b32.xlu0 %v451, 18
        %v1221 = vpop.permute.xlu0 %1220
        %v1255 = vrot.slane %v450, 1
        %v1256 = vrot.slane %v451, 1
        %v1257 = vsel %vm501, %v1255, %v1256
        %v1258 = vrot.slane %v452, 1
        %v1259 = vsel %vm501, %v1256, %v1258
        %1260 = vrot.lane.b32.xlu0 %v514, 21
        %v1261 = vpop.permute.xlu0 %1260
        %1262 = vrot.lane.b32.xlu0 %v516, 21
        %v1263 = vpop.permute.xlu0 %1262
        %1264 = vrot.lane.b32.xlu0 %v519, 21
        %v1265 = vpop.permute.xlu0 %1264
        %1266 = vrot.lane.b32.xlu0 %v521, 21
        %v1267 = vpop.permute.xlu0 %1266
        %1268 = vrot.lane.b32.xlu0 %v524, 21
        %v1269 = vpop.permute.xlu0 %1268
        %1270 = vrot.lane.b32.xlu0 %v526, 21
        %v1271 = vpop.permute.xlu0 %1270
        %1272 = vrot.lane.b32.xlu0 %v529, 21
        %v1273 = vpop.permute.xlu0 %1272
        %1274 = vrot.lane.b32.xlu0 %v531, 21
        %v1275 = vpop.permute.xlu0 %1274
        %1276 = vrot.lane.b32.xlu0 %v534, 21
        %v1277 = vpop.permute.xlu0 %1276
        %1278 = vrot.lane.b32.xlu0 %v536, 21
        %v1279 = vpop.permute.xlu0 %1278
        %1280 = vrot.lane.b32.xlu0 %v539, 21
        %v1281 = vpop.permute.xlu0 %1280
        %1282 = vrot.lane.b32.xlu0 %v541, 21
        %v1283 = vpop.permute.xlu0 %1282
        %1284 = vrot.lane.b32.xlu0 %v544, 21
        %v1285 = vpop.permute.xlu0 %1284
        %1286 = vrot.lane.b32.xlu0 %v546, 21
        %v1287 = vpop.permute.xlu0 %1286
        %1288 = vrot.lane.b32.xlu0 %v549, 21
        %v1289 = vpop.permute.xlu0 %1288
        %1290 = vrot.lane.b32.xlu0 %v551, 21
        %v1291 = vpop.permute.xlu0 %1290
        %1292 = vrot.lane.b32.xlu0 %v554, 21
        %v1293 = vpop.permute.xlu0 %1292
        %1294 = vrot.lane.b32.xlu0 %v556, 21
        %v1295 = vpop.permute.xlu0 %1294
        %1296 = vrot.lane.b32.xlu0 %v559, 21
        %v1297 = vpop.permute.xlu0 %1296
        %1298 = vrot.lane.b32.xlu0 %v561, 21
        %v1299 = vpop.permute.xlu0 %1298
        %1300 = vrot.lane.b32.xlu0 %v564, 21
        %v1301 = vpop.permute.xlu0 %1300
        %1302 = vrot.lane.b32.xlu0 %v566, 21
        %v1303 = vpop.permute.xlu0 %1302
        %1304 = vrot.lane.b32.xlu0 %v569, 21
        %v1305 = vpop.permute.xlu0 %1304
        %1306 = vrot.lane.b32.xlu0 %v571, 21
        %v1307 = vpop.permute.xlu0 %1306
        %1308 = vrot.lane.b32.xlu0 %v574, 21
        %v1309 = vpop.permute.xlu0 %1308
        %1310 = vrot.lane.b32.xlu0 %v576, 21
        %v1311 = vpop.permute.xlu0 %1310
        %1312 = vrot.lane.b32.xlu0 %v579, 21
        %v1313 = vpop.permute.xlu0 %1312
        %1314 = vrot.lane.b32.xlu0 %v581, 21
        %v1315 = vpop.permute.xlu0 %1314
        %1316 = vrot.lane.b32.xlu0 %v956, 21
        %v1317 = vpop.permute.xlu0 %1316
        %1318 = vrot.lane.b32.xlu0 %v958, 21
        %v1319 = vpop.permute.xlu0 %1318
        %1320 = vrot.lane.b32.xlu0 %v1257, 21
        %v1321 = vpop.permute.xlu0 %1320
        %1322 = vrot.lane.b32.xlu0 %v1259, 21
        %v1323 = vpop.permute.xlu0 %1322
        %v1356 = vrot.slane %v450, 2
        %v1357 = vrot.slane %v451, 2
        %v1358 = vsel %vm678, %v1356, %v1357
        %v1359 = vrot.slane %v452, 2
        %v1360 = vsel %vm678, %v1357, %v1359
        %1361 = vrot.lane.b32.xlu0 %v691, 24
        %v1362 = vpop.permute.xlu0 %1361
        %1363 = vrot.lane.b32.xlu0 %v693, 24
        %v1364 = vpop.permute.xlu0 %1363
        %1365 = vrot.lane.b32.xlu0 %v696, 24
        %v1366 = vpop.permute.xlu0 %1365
        %1367 = vrot.lane.b32.xlu0 %v698, 24
        %v1368 = vpop.permute.xlu0 %1367
        %1369 = vrot.lane.b32.xlu0 %v701, 24
        %v1370 = vpop.permute.xlu0 %1369
        %1371 = vrot.lane.b32.xlu0 %v703, 24
        %v1372 = vpop.permute.xlu0 %1371
        %1373 = vrot.lane.b32.xlu0 %v706, 24
        %v1374 = vpop.permute.xlu0 %1373
        %1375 = vrot.lane.b32.xlu0 %v708, 24
        %v1376 = vpop.permute.xlu0 %1375
        %1377 = vrot.lane.b32.xlu0 %v711, 24
        %v1378 = vpop.permute.xlu0 %1377
        %1379 = vrot.lane.b32.xlu0 %v713, 24
        %v1380 = vpop.permute.xlu0 %1379
        %1381 = vrot.lane.b32.xlu0 %v716, 24
        %v1382 = vpop.permute.xlu0 %1381
        %1383 = vrot.lane.b32.xlu0 %v718, 24
        %v1384 = vpop.permute.xlu0 %1383
        %1385 = vrot.lane.b32.xlu0 %v721, 24
        %v1386 = vpop.permute.xlu0 %1385
        %1387 = vrot.lane.b32.xlu0 %v723, 24
        %v1388 = vpop.permute.xlu0 %1387
        %1389 = vrot.lane.b32.xlu0 %v726, 24
        %v1390 = vpop.permute.xlu0 %1389
        %1391 = vrot.lane.b32.xlu0 %v728, 24
        %v1392 = vpop.permute.xlu0 %1391
        %1393 = vrot.lane.b32.xlu0 %v731, 24
        %v1394 = vpop.permute.xlu0 %1393
        %1395 = vrot.lane.b32.xlu0 %v733, 24
        %v1396 = vpop.permute.xlu0 %1395
        %1397 = vrot.lane.b32.xlu0 %v736, 24
        %v1398 = vpop.permute.xlu0 %1397
        %1399 = vrot.lane.b32.xlu0 %v738, 24
        %v1400 = vpop.permute.xlu0 %1399
        %1401 = vrot.lane.b32.xlu0 %v741, 24
        %v1402 = vpop.permute.xlu0 %1401
        %1403 = vrot.lane.b32.xlu0 %v743, 24
        %v1404 = vpop.permute.xlu0 %1403
        %1405 = vrot.lane.b32.xlu0 %v746, 24
        %v1406 = vpop.permute.xlu0 %1405
        %1407 = vrot.lane.b32.xlu0 %v748, 24
        %v1408 = vpop.permute.xlu0 %1407
        %1409 = vrot.lane.b32.xlu0 %v751, 24
        %v1410 = vpop.permute.xlu0 %1409
        %1411 = vrot.lane.b32.xlu0 %v753, 24
        %v1412 = vpop.permute.xlu0 %1411
        %1413 = vrot.lane.b32.xlu0 %v756, 24
        %v1414 = vpop.permute.xlu0 %1413
        %1415 = vrot.lane.b32.xlu0 %v758, 24
        %v1416 = vpop.permute.xlu0 %1415
        %1417 = vrot.lane.b32.xlu0 %v1057, 24
        %v1418 = vpop.permute.xlu0 %1417
        %1419 = vrot.lane.b32.xlu0 %v1059, 24
        %v1420 = vpop.permute.xlu0 %1419
        %1421 = vrot.lane.b32.xlu0 %v1358, 24
        %v1422 = vpop.permute.xlu0 %1421
        %1423 = vrot.lane.b32.xlu0 %v1360, 24
        %v1424 = vpop.permute.xlu0 %1423
        %v1457 = vsel %vm310, %v399, %v583
        %v1458 = vsel %vm310, %v400, %v585
        %v1459 = vsel %vm310, %v402, %v587
        %v1460 = vsel %vm310, %v403, %v589
        %v1461 = vsel %vm310, %v405, %v591
        %v1462 = vsel %vm310, %v406, %v593
        %v1463 = vsel %vm310, %v408, %v595
        %v1464 = vsel %vm310, %v409, %v597
        %v1465 = vsel %vm310, %v411, %v599
        %v1466 = vsel %vm310, %v412, %v601
        %v1467 = vsel %vm310, %v414, %v603
        %v1468 = vsel %vm310, %v415, %v605
        %v1469 = vsel %vm310, %v417, %v607
        %v1470 = vsel %vm310, %v418, %v609
        %v1471 = vsel %vm310, %v420, %v611
        %v1472 = vsel %vm310, %v421, %v613
        %v1473 = vsel %vm310, %v423, %v615
        %v1474 = vsel %vm310, %v424, %v617
        %v1475 = vsel %vm310, %v426, %v619
        %v1476 = vsel %vm310, %v427, %v621
        %v1477 = vsel %vm310, %v429, %v623
        %v1478 = vsel %vm310, %v430, %v625
        %v1479 = vsel %vm310, %v432, %v627
        %v1480 = vsel %vm310, %v433, %v629
        %v1481 = vsel %vm310, %v435, %v631
        %v1482 = vsel %vm310, %v436, %v633
        %v1483 = vsel %vm310, %v438, %v635
        %v1484 = vsel %vm310, %v439, %v637
        %v1485 = vsel %vm310, %v441, %v639
        %v1486 = vsel %vm310, %v442, %v641
        %v1487 = vsel %vm310, %v444, %v643
        %v1488 = vsel %vm310, %v445, %v645
        %vm1489 = vcmask 48128
        %v1490 = vsel %vm1489, %v1457, %v760
        %v1491 = vsel %vm1489, %v1458, %v762
        %v1492 = vsel %vm1489, %v1459, %v764
        %v1493 = vsel %vm1489, %v1460, %v766
        %v1494 = vsel %vm1489, %v1461, %v768
        %v1495 = vsel %vm1489, %v1462, %v770
        %v1496 = vsel %vm1489, %v1463, %v772
        %v1497 = vsel %vm1489, %v1464, %v774
        %v1498 = vsel %vm1489, %v1465, %v776
        %v1499 = vsel %vm1489, %v1466, %v778
        %v1500 = vsel %vm1489, %v1467, %v780
        %v1501 = vsel %vm1489, %v1468, %v782
        %v1502 = vsel %vm1489, %v1469, %v784
        %v1503 = vsel %vm1489, %v1470, %v786
        %v1504 = vsel %vm1489, %v1471, %v788
        %v1505 = vsel %vm1489, %v1472, %v790
        %v1506 = vsel %vm1489, %v1473, %v792
        %v1507 = vsel %vm1489, %v1474, %v794
        %v1508 = vsel %vm1489, %v1475, %v796
        %v1509 = vsel %vm1489, %v1476, %v798
        %v1510 = vsel %vm1489, %v1477, %v800
        %v1511 = vsel %vm1489, %v1478, %v802
        %v1512 = vsel %vm1489, %v1479, %v804
        %v1513 = vsel %vm1489, %v1480, %v806
        %v1514 = vsel %vm1489, %v1481, %v808
        %v1515 = vsel %vm1489, %v1482, %v810
        %v1516 = vsel %vm1489, %v1483, %v812
        %v1517 = vsel %vm1489, %v1484, %v814
        %v1518 = vsel %vm1489, %v1485, %v816
        %v1519 = vsel %vm1489, %v1486, %v818
        %v1520 = vsel %vm1489, %v1487, %v820
        %v1521 = vsel %vm1489, %v1488, %v822
        %vm1522 = vcmask 72704
        %v1523 = vsel %vm1522, %v1490, %v858
        %v1524 = vsel %vm1522, %v1491, %v860
        %v1525 = vsel %vm1522, %v1492, %v862
        %v1526 = vsel %vm1522, %v1493, %v864
        %v1527 = vsel %vm1522, %v1494, %v866
        %v1528 = vsel %vm1522, %v1495, %v868
        %v1529 = vsel %vm1522, %v1496, %v870
        %v1530 = vsel %vm1522, %v1497, %v872
        %v1531 = vsel %vm1522, %v1498, %v874
        %v1532 = vsel %vm1522, %v1499, %v876
        %v1533 = vsel %vm1522, %v1500, %v878
        %v1534 = vsel %vm1522, %v1501, %v880
        %v1535 = vsel %vm1522, %v1502, %v882
        %v1536 = vsel %vm1522, %v1503, %v884
        %v1537 = vsel %vm1522, %v1504, %v886
        %v1538 = vsel %vm1522, %v1505, %v888
        %v1539 = vsel %vm1522, %v1506, %v890
        %v1540 = vsel %vm1522, %v1507, %v892
        %v1541 = vsel %vm1522, %v1508, %v894
        %v1542 = vsel %vm1522, %v1509, %v896
        %v1543 = vsel %vm1522, %v1510, %v898
        %v1544 = vsel %vm1522, %v1511, %v900
        %v1545 = vsel %vm1522, %v1512, %v902
        %v1546 = vsel %vm1522, %v1513, %v904
        %v1547 = vsel %vm1522, %v1514, %v906
        %v1548 = vsel %vm1522, %v1515, %v908
        %v1549 = vsel %vm1522, %v1516, %v910
        %v1550 = vsel %vm1522, %v1517, %v912
        %v1551 = vsel %vm1522, %v1518, %v914
        %v1552 = vsel %vm1522, %v1519, %v916
        %v1553 = vsel %vm1522, %v1520, %v918
        %v1554 = vsel %vm1522, %v1521, %v920
        %vm1555 = vcmask 97280
        %v1556 = vsel %vm1555, %v1523, %v960
        %v1557 = vsel %vm1555, %v1524, %v962
        %v1558 = vsel %vm1555, %v1525, %v964
        %v1559 = vsel %vm1555, %v1526, %v966
        %v1560 = vsel %vm1555, %v1527, %v968
        %v1561 = vsel %vm1555, %v1528, %v970
        %v1562 = vsel %vm1555, %v1529, %v972
        %v1563 = vsel %vm1555, %v1530, %v974
        %v1564 = vsel %vm1555, %v1531, %v976
        %v1565 = vsel %vm1555, %v1532, %v978
        %v1566 = vsel %vm1555, %v1533, %v980
        %v1567 = vsel %vm1555, %v1534, %v982
        %v1568 = vsel %vm1555, %v1535, %v984
        %v1569 = vsel %vm1555, %v1536, %v986
        %v1570 = vsel %vm1555, %v1537, %v988
        %v1571 = vsel %vm1555, %v1538, %v990
        %v1572 = vsel %vm1555, %v1539, %v992
        %v1573 = vsel %vm1555, %v1540, %v994
        %v1574 = vsel %vm1555, %v1541, %v996
        %v1575 = vsel %vm1555, %v1542, %v998
        %v1576 = vsel %vm1555, %v1543, %v1000
        %v1577 = vsel %vm1555, %v1544, %v1002
        %v1578 = vsel %vm1555, %v1545, %v1004
        %v1579 = vsel %vm1555, %v1546, %v1006
        %v1580 = vsel %vm1555, %v1547, %v1008
        %v1581 = vsel %vm1555, %v1548, %v1010
        %v1582 = vsel %vm1555, %v1549, %v1012
        %v1583 = vsel %vm1555, %v1550, %v1014
        %v1584 = vsel %vm1555, %v1551, %v1016
        %v1585 = vsel %vm1555, %v1552, %v1018
        %v1586 = vsel %vm1555, %v1553, %v1020
        %v1587 = vsel %vm1555, %v1554, %v1022
        %vm1588 = vcmask 121856
        %v1589 = vsel %vm1588, %v1556, %v1061
        %v1590 = vsel %vm1588, %v1557, %v1063
        %v1591 = vsel %vm1588, %v1558, %v1065
        %v1592 = vsel %vm1588, %v1559, %v1067
        %v1593 = vsel %vm1588, %v1560, %v1069
        %v1594 = vsel %vm1588, %v1561, %v1071
        %v1595 = vsel %vm1588, %v1562, %v1073
        %v1596 = vsel %vm1588, %v1563, %v1075
        %v1597 = vsel %vm1588, %v1564, %v1077
        %v1598 = vsel %vm1588, %v1565, %v1079
        %v1599 = vsel %vm1588, %v1566, %v1081
        %v1600 = vsel %vm1588, %v1567, %v1083
        %v1601 = vsel %vm1588, %v1568, %v1085
        %v1602 = vsel %vm1588, %v1569, %v1087
        %v1603 = vsel %vm1588, %v1570, %v1089
        %v1604 = vsel %vm1588, %v1571, %v1091
        %v1605 = vsel %vm1588, %v1572, %v1093
        %v1606 = vsel %vm1588, %v1573, %v1095
        %v1607 = vsel %vm1588, %v1574, %v1097
        %v1608 = vsel %vm1588, %v1575, %v1099
        %v1609 = vsel %vm1588, %v1576, %v1101
        %v1610 = vsel %vm1588, %v1577, %v1103
        %v1611 = vsel %vm1588, %v1578, %v1105
        %v1612 = vsel %vm1588, %v1579, %v1107
        %v1613 = vsel %vm1588, %v1580, %v1109
        %v1614 = vsel %vm1588, %v1581, %v1111
        %v1615 = vsel %vm1588, %v1582, %v1113
        %v1616 = vsel %vm1588, %v1583, %v1115
        %v1617 = vsel %vm1588, %v1584, %v1117
        %v1618 = vsel %vm1588, %v1585, %v1119
        %v1619 = vsel %vm1588, %v1586, %v1121
        %v1620 = vsel %vm1588, %v1587, %v1123
        %vm1621 = vcmask 146432
        %v1622 = vsel %vm1621, %v1589, %v1159
        %v1623 = vsel %vm1621, %v1590, %v1161
        %v1624 = vsel %vm1621, %v1591, %v1163
        %v1625 = vsel %vm1621, %v1592, %v1165
        %v1626 = vsel %vm1621, %v1593, %v1167
        %v1627 = vsel %vm1621, %v1594, %v1169
        %v1628 = vsel %vm1621, %v1595, %v1171
        %v1629 = vsel %vm1621, %v1596, %v1173
        %v1630 = vsel %vm1621, %v1597, %v1175
        %v1631 = vsel %vm1621, %v1598, %v1177
        %v1632 = vsel %vm1621, %v1599, %v1179
        %v1633 = vsel %vm1621, %v1600, %v1181
        %v1634 = vsel %vm1621, %v1601, %v1183
        %v1635 = vsel %vm1621, %v1602, %v1185
        %v1636 = vsel %vm1621, %v1603, %v1187
        %v1637 = vsel %vm1621, %v1604, %v1189
        %v1638 = vsel %vm1621, %v1605, %v1191
        %v1639 = vsel %vm1621, %v1606, %v1193
        %v1640 = vsel %vm1621, %v1607, %v1195
        %v1641 = vsel %vm1621, %v1608, %v1197
        %v1642 = vsel %vm1621, %v1609, %v1199
        %v1643 = vsel %vm1621, %v1610, %v1201
        %v1644 = vsel %vm1621, %v1611, %v1203
        %v1645 = vsel %vm1621, %v1612, %v1205
        %v1646 = vsel %vm1621, %v1613, %v1207
        %v1647 = vsel %vm1621, %v1614, %v1209
        %v1648 = vsel %vm1621, %v1615, %v1211
        %v1649 = vsel %vm1621, %v1616, %v1213
        %v1650 = vsel %vm1621, %v1617, %v1215
        %v1651 = vsel %vm1621, %v1618, %v1217
        %v1652 = vsel %vm1621, %v1619, %v1219
        %v1653 = vsel %vm1621, %v1620, %v1221
        %vm1654 = vcmask 171008
        %v1655 = vsel %vm1654, %v1622, %v1261
        %v1656 = vsel %vm1654, %v1623, %v1263
        %v1657 = vsel %vm1654, %v1624, %v1265
        %v1658 = vsel %vm1654, %v1625, %v1267
        %v1659 = vsel %vm1654, %v1626, %v1269
        %v1660 = vsel %vm1654, %v1627, %v1271
        %v1661 = vsel %vm1654, %v1628, %v1273
        %v1662 = vsel %vm1654, %v1629, %v1275
        %v1663 = vsel %vm1654, %v1630, %v1277
        %v1664 = vsel %vm1654, %v1631, %v1279
        %v1665 = vsel %vm1654, %v1632, %v1281
        %v1666 = vsel %vm1654, %v1633, %v1283
        %v1667 = vsel %vm1654, %v1634, %v1285
        %v1668 = vsel %vm1654, %v1635, %v1287
        %v1669 = vsel %vm1654, %v1636, %v1289
        %v1670 = vsel %vm1654, %v1637, %v1291
        %v1671 = vsel %vm1654, %v1638, %v1293
        %v1672 = vsel %vm1654, %v1639, %v1295
        %v1673 = vsel %vm1654, %v1640, %v1297
        %v1674 = vsel %vm1654, %v1641, %v1299
        %v1675 = vsel %vm1654, %v1642, %v1301
        %v1676 = vsel %vm1654, %v1643, %v1303
        %v1677 = vsel %vm1654, %v1644, %v1305
        %v1678 = vsel %vm1654, %v1645, %v1307
        %v1679 = vsel %vm1654, %v1646, %v1309
        %v1680 = vsel %vm1654, %v1647, %v1311
        %v1681 = vsel %vm1654, %v1648, %v1313
        %v1682 = vsel %vm1654, %v1649, %v1315
        %v1683 = vsel %vm1654, %v1650, %v1317
        %v1684 = vsel %vm1654, %v1651, %v1319
        %v1685 = vsel %vm1654, %v1652, %v1321
        %v1686 = vsel %vm1654, %v1653, %v1323
        %vm1687 = vcmask 195584
        %v1688 = vsel %vm1687, %v1655, %v1362
        %v1689 = vsel %vm1687, %v1656, %v1364
        %v1690 = vsel %vm1687, %v1657, %v1366
        %v1691 = vsel %vm1687, %v1658, %v1368
        %v1692 = vsel %vm1687, %v1659, %v1370
        %v1693 = vsel %vm1687, %v1660, %v1372
        %v1694 = vsel %vm1687, %v1661, %v1374
        %v1695 = vsel %vm1687, %v1662, %v1376
        %v1696 = vsel %vm1687, %v1663, %v1378
        %v1697 = vsel %vm1687, %v1664, %v1380
        %v1698 = vsel %vm1687, %v1665, %v1382
        %v1699 = vsel %vm1687, %v1666, %v1384
        %v1700 = vsel %vm1687, %v1667, %v1386
        %v1701 = vsel %vm1687, %v1668, %v1388
        %v1702 = vsel %vm1687, %v1669, %v1390
        %v1703 = vsel %vm1687, %v1670, %v1392
        %v1704 = vsel %vm1687, %v1671, %v1394
        %v1705 = vsel %vm1687, %v1672, %v1396
        %v1706 = vsel %vm1687, %v1673, %v1398
        %v1707 = vsel %vm1687, %v1674, %v1400
        %v1708 = vsel %vm1687, %v1675, %v1402
        %v1709 = vsel %vm1687, %v1676, %v1404
        %v1710 = vsel %vm1687, %v1677, %v1406
        %v1711 = vsel %vm1687, %v1678, %v1408
        %v1712 = vsel %vm1687, %v1679, %v1410
        %v1713 = vsel %vm1687, %v1680, %v1412
        %v1714 = vsel %vm1687, %v1681, %v1414
        %v1715 = vsel %vm1687, %v1682, %v1416
        %v1716 = vsel %vm1687, %v1683, %v1418
        %v1717 = vsel %vm1687, %v1684, %v1420
        %v1718 = vsel %vm1687, %v1685, %v1422
        %v1719 = vsel %vm1687, %v1686, %v1424
        %v1720 = vpack.c.bf16 %v1689, %v1688
        %v1721 = vpack.c.bf16 %v1691, %v1690
        %v1722 = vpack.c.bf16 %v1693, %v1692
        %v1723 = vpack.c.bf16 %v1695, %v1694
        %v1724 = vpack.c.bf16 %v1697, %v1696
        %v1725 = vpack.c.bf16 %v1699, %v1698
        %v1726 = vpack.c.bf16 %v1701, %v1700
        %v1727 = vpack.c.bf16 %v1703, %v1702
        %v1728 = vpack.c.bf16 %v1705, %v1704
        %v1729 = vpack.c.bf16 %v1707, %v1706
        %v1730 = vpack.c.bf16 %v1709, %v1708
        %v1731 = vpack.c.bf16 %v1711, %v1710
        %v1732 = vpack.c.bf16 %v1713, %v1712
        %v1733 = vpack.c.bf16 %v1715, %v1714
        %v1734 = vpack.c.bf16 %v1717, %v1716
        %v1735 = vpack.c.bf16 %v1719, %v1718
        %v1736 = vld [vmem:[%s1] sm:$0xf]
        %v1737 = vld [vmem:[%s1 + $0x4] sm:$0xf]
        %v1738 = vld [vmem:[%s1 + $0x8] sm:$0xf]
        %v1739 = vld [vmem:[%s1 + $0xc] sm:$0x3]
        %v1740 = vld [vmem:[%s2] sm:$0x1]
        %v1742 = vlaneseq
        %v1743 = vshrl.u32 %v1742, 7
        %v1744 = vsub.s32 0, %v1743
        %v1745 = vrot.slane %v1740, %v1744
        %v1751 = vunpack.c.l.b16 %v1736
        %v1752 = vunpack.c.l.b16 %v1737
        %v1753 = vunpack.c.l.b16 %v1738
        %v1754 = vunpack.c.l.b16 %v1739
        %v1755 = vpack.c.b16 %v1752, %v1751
        %v1756 = vpack.c.b16 %v1754, %v1753
        %vm1758 = vcmask 220160
        %v1760 = vsel %vm1758, %v1720, 0
        %v1763 = vsel %vm1758, %v1721, 0
        %v1766 = vsel %vm1758, %v1722, 0
        %v1769 = vsel %vm1758, %v1723, 0
        %v1772 = vsel %vm1758, %v1724, 0
        %v1775 = vsel %vm1758, %v1725, 0
        %v1778 = vsel %vm1758, %v1726, 0
        %v1781 = vsel %vm1758, %v1727, 0
        %v1784 = vsel %vm1758, %v1728, 0
        %v1787 = vsel %vm1758, %v1729, 0
        %v1790 = vsel %vm1758, %v1730, 0
        %v1793 = vsel %vm1758, %v1731, 0
        %v1796 = vsel %vm1758, %v1732, 0
        %v1799 = vsel %vm1758, %v1733, 0
        %v1802 = vsel %vm1758, %v1734, 0
        %v1805 = vsel %vm1758, %v1735, 0
        %vm1807 = vcmask 1044480
        %v1808 = vsel %vm1807, 4294967295, 65535
        %v1809 = vsel %vm678, %v1808, 0
        %v1811 = vand.u32 %v1756, %v1809
        %1813 = vmatprep.subr.bf16.mxu0 0
        %1814 = vmatpush1.bf16.msra.mxu0 0
        %1815 = vmatprep.subr.bf16.mxu0 0
        %1816 = vmatpush1.bf16.msra.mxu0 0
        %1817 = vmatprep.subr.bf16.mxu0 0
        %1818 = vmatpush1.bf16.msra.mxu0 0
        %1819 = vmatprep.subr.bf16.mxu0 0
        %1820 = vmatpush1.bf16.msra.mxu0 0
        %1821 = vmatprep.subr.bf16.mxu0 0
        %1822 = vmatpush1.bf16.msra.mxu0 0
        %1823 = vmatprep.subr.bf16.mxu0 0
        %1824 = vmatpush1.bf16.msra.mxu0 0
        %1825 = vmatprep.subr.bf16.mxu0 0
        %1826 = vmatpush1.bf16.msra.mxu0 %v1811
        %1827 = vmatprep.subr.bf16.mxu0 0
        %1828 = vmatpush1.bf16.msra.mxu0 %v1755
        %1829 = vmatprep.subr.bf16.mxu0 0
        %1830 = vmatpush2.bf16.msra.mxu0 0
        %1831 = vmatprep.subr.bf16.mxu0 0
        %1832 = vmatpush2.bf16.msra.mxu0 0
        %1833 = vmatprep.subr.bf16.mxu0 0
        %1834 = vmatpush2.bf16.msra.mxu0 0
        %1835 = vmatprep.subr.bf16.mxu0 0
        %1836 = vmatpush2.bf16.msra.mxu0 0
        %1837 = vmatprep.subr.bf16.mxu0 0
        %1838 = vmatpush2.bf16.msra.mxu0 0
        %1839 = vmatprep.subr.bf16.mxu0 0
        %1840 = vmatpush2.bf16.msra.mxu0 0
        %1841 = vmatprep.subr.bf16.mxu0 0
        %1842 = vmatpush2.bf16.msra.mxu0 0
        %1843 = vmatprep.subr.bf16.mxu0 0
        %1844 = vmatpush2.bf16.msra.mxu0 0
        %1845 = vmatprep.mubr.bf16.mxu0 0
        %1846 = vmatmul.mubr.bf16.gmra.mxu0 %v1760
        %v1847 = vpop.f32.mrf.mxu0
        %v1848 = vadd.f32 %v1745, %v1847
        %v1849 = vpop.f32.mrf.mxu0
        %v1850 = vpop.f32.mrf.mxu0
        %v1851 = vadd.f32 %v1745, %v1850
        %v1852 = vpop.f32.mrf.mxu0
        %1853 = vmatprep.mubr.bf16.mxu0 0
        %1854 = vmatmul.mubr.bf16.gmra.mxu0 %v1763
        %v1855 = vpop.f32.mrf.mxu0
        %v1856 = vadd.f32 %v1745, %v1855
        %v1857 = vpop.f32.mrf.mxu0
        %v1858 = vpop.f32.mrf.mxu0
        %v1859 = vadd.f32 %v1745, %v1858
        %v1860 = vpop.f32.mrf.mxu0
        %1861 = vmatprep.mubr.bf16.mxu0 0
        %1862 = vmatmul.mubr.bf16.gmra.mxu0 %v1766
        %v1863 = vpop.f32.mrf.mxu0
        %v1864 = vadd.f32 %v1745, %v1863
        %v1865 = vpop.f32.mrf.mxu0
        %v1866 = vpop.f32.mrf.mxu0
        %v1867 = vadd.f32 %v1745, %v1866
        %v1868 = vpop.f32.mrf.mxu0
        %1869 = vmatprep.mubr.bf16.mxu0 0
        %1870 = vmatmul.mubr.bf16.gmra.mxu0 %v1769
        %v1871 = vpop.f32.mrf.mxu0
        %v1872 = vadd.f32 %v1745, %v1871
        %v1873 = vpop.f32.mrf.mxu0
        %v1874 = vpop.f32.mrf.mxu0
        %v1875 = vadd.f32 %v1745, %v1874
        %v1876 = vpop.f32.mrf.mxu0
        %1877 = vmatprep.mubr.bf16.mxu0 0
        %1878 = vmatmul.mubr.bf16.gmra.mxu0 %v1772
        %v1879 = vpop.f32.mrf.mxu0
        %v1880 = vadd.f32 %v1745, %v1879
        %v1881 = vpop.f32.mrf.mxu0
        %v1882 = vpop.f32.mrf.mxu0
        %v1883 = vadd.f32 %v1745, %v1882
        %v1884 = vpop.f32.mrf.mxu0
        %1885 = vmatprep.mubr.bf16.mxu0 0
        %1886 = vmatmul.mubr.bf16.gmra.mxu0 %v1775
        %v1887 = vpop.f32.mrf.mxu0
        %v1888 = vadd.f32 %v1745, %v1887
        %v1889 = vpop.f32.mrf.mxu0
        %v1890 = vpop.f32.mrf.mxu0
        %v1891 = vadd.f32 %v1745, %v1890
        %v1892 = vpop.f32.mrf.mxu0
        %1893 = vmatprep.mubr.bf16.mxu0 0
        %1894 = vmatmul.mubr.bf16.gmra.mxu0 %v1778
        %v1895 = vpop.f32.mrf.mxu0
        %v1896 = vadd.f32 %v1745, %v1895
        %v1897 = vpop.f32.mrf.mxu0
        %v1898 = vpop.f32.mrf.mxu0
        %v1899 = vadd.f32 %v1745, %v1898
        %v1900 = vpop.f32.mrf.mxu0
        %1901 = vmatprep.mubr.bf16.mxu0 0
        %1902 = vmatmul.mubr.bf16.gmra.mxu0 %v1781
        %v1903 = vpop.f32.mrf.mxu0
        %v1904 = vadd.f32 %v1745, %v1903
        %v1905 = vpop.f32.mrf.mxu0
        %v1906 = vpop.f32.mrf.mxu0
        %v1907 = vadd.f32 %v1745, %v1906
        %v1908 = vpop.f32.mrf.mxu0
        %1909 = vmatprep.mubr.bf16.mxu0 0
        %1910 = vmatmul.mubr.bf16.gmra.mxu0 %v1784
        %v1911 = vpop.f32.mrf.mxu0
        %v1912 = vadd.f32 %v1745, %v1911
        %v1913 = vpop.f32.mrf.mxu0
        %v1914 = vpop.f32.mrf.mxu0
        %v1915 = vadd.f32 %v1745, %v1914
        %v1916 = vpop.f32.mrf.mxu0
        %1917 = vmatprep.mubr.bf16.mxu0 0
        %1918 = vmatmul.mubr.bf16.gmra.mxu0 %v1787
        %v1919 = vpop.f32.mrf.mxu0
        %v1920 = vadd.f32 %v1745, %v1919
        %v1921 = vpop.f32.mrf.mxu0
        %v1922 = vpop.f32.mrf.mxu0
        %v1923 = vadd.f32 %v1745, %v1922
        %v1924 = vpop.f32.mrf.mxu0
        %1925 = vmatprep.mubr.bf16.mxu0 0
        %1926 = vmatmul.mubr.bf16.gmra.mxu0 %v1790
        %v1927 = vpop.f32.mrf.mxu0
        %v1928 = vadd.f32 %v1745, %v1927
        %v1929 = vpop.f32.mrf.mxu0
        %v1930 = vpop.f32.mrf.mxu0
        %v1931 = vadd.f32 %v1745, %v1930
        %v1932 = vpop.f32.mrf.mxu0
        %1933 = vmatprep.mubr.bf16.mxu0 0
        %1934 = vmatmul.mubr.bf16.gmra.mxu0 %v1793
        %v1935 = vpop.f32.mrf.mxu0
        %v1936 = vadd.f32 %v1745, %v1935
        %v1937 = vpop.f32.mrf.mxu0
        %v1938 = vpop.f32.mrf.mxu0
        %v1939 = vadd.f32 %v1745, %v1938
        %v1940 = vpop.f32.mrf.mxu0
        %1941 = vmatprep.mubr.bf16.mxu0 0
        %1942 = vmatmul.mubr.bf16.gmra.mxu0 %v1796
        %v1943 = vpop.f32.mrf.mxu0
        %v1944 = vadd.f32 %v1745, %v1943
        %v1945 = vpop.f32.mrf.mxu0
        %v1946 = vpop.f32.mrf.mxu0
        %v1947 = vadd.f32 %v1745, %v1946
        %v1948 = vpop.f32.mrf.mxu0
        %1949 = vmatprep.mubr.bf16.mxu0 0
        %1950 = vmatmul.mubr.bf16.gmra.mxu0 %v1799
        %v1951 = vpop.f32.mrf.mxu0
        %v1952 = vadd.f32 %v1745, %v1951
        %v1953 = vpop.f32.mrf.mxu0
        %v1954 = vpop.f32.mrf.mxu0
        %v1955 = vadd.f32 %v1745, %v1954
        %v1956 = vpop.f32.mrf.mxu0
        %1957 = vmatprep.mubr.bf16.mxu0 0
        %1958 = vmatmul.mubr.bf16.gmra.mxu0 %v1802
        %v1959 = vpop.f32.mrf.mxu0
        %v1960 = vadd.f32 %v1745, %v1959
        %v1961 = vpop.f32.mrf.mxu0
        %v1962 = vpop.f32.mrf.mxu0
        %v1963 = vadd.f32 %v1745, %v1962
        %v1964 = vpop.f32.mrf.mxu0
        %1965 = vmatprep.mubr.bf16.mxu0 0
        %1966 = vmatmul.mubr.bf16.gmra.mxu0 %v1805
        %v1967 = vpop.f32.mrf.mxu0
        %v1968 = vadd.f32 %v1745, %v1967
        %v1969 = vpop.f32.mrf.mxu0
        %v1970 = vpop.f32.mrf.mxu0
        %v1971 = vadd.f32 %v1745, %v1970
        %v1972 = vpop.f32.mrf.mxu0
        %1973 = vdwg.mxu0
        %v1974 = vmax.f32 %v1848, 0.0
        %v1975 = vmax.f32 %v1851, 0.0
        %v1976 = vmax.f32 %v1856, 0.0
        %v1977 = vmax.f32 %v1859, 0.0
        %v1978 = vmax.f32 %v1864, 0.0
        %v1979 = vmax.f32 %v1867, 0.0
        %v1980 = vmax.f32 %v1872, 0.0
        %v1981 = vmax.f32 %v1875, 0.0
        %v1982 = vmax.f32 %v1880, 0.0
        %v1983 = vmax.f32 %v1883, 0.0
        %v1984 = vmax.f32 %v1888, 0.0
        %v1985 = vmax.f32 %v1891, 0.0
        %v1986 = vmax.f32 %v1896, 0.0
        %v1987 = vmax.f32 %v1899, 0.0
        %v1988 = vmax.f32 %v1904, 0.0
        %v1989 = vmax.f32 %v1907, 0.0
        %v1990 = vmax.f32 %v1912, 0.0
        %v1991 = vmax.f32 %v1915, 0.0
        %v1992 = vmax.f32 %v1920, 0.0
        %v1993 = vmax.f32 %v1923, 0.0
        %v1994 = vmax.f32 %v1928, 0.0
        %v1995 = vmax.f32 %v1931, 0.0
        %v1996 = vmax.f32 %v1936, 0.0
        %v1997 = vmax.f32 %v1939, 0.0
        %v1998 = vmax.f32 %v1944, 0.0
        %v1999 = vmax.f32 %v1947, 0.0
        %v2000 = vmax.f32 %v1952, 0.0
        %v2001 = vmax.f32 %v1955, 0.0
        %v2002 = vmax.f32 %v1960, 0.0
        %v2003 = vmax.f32 %v1963, 0.0
        %v2004 = vmax.f32 %v1968, 0.0
        %v2005 = vmax.f32 %v1971, 0.0
        %v2038 = vcombine.high %v1974, %v1974
        %v2040 = vunpack.c.l.s4 1983009808
        %v2041 = vunpack.c.0.s8 %v2040
        %v2042 = vlaneseq
        %v2043 = vshrl.u32 %v2042, 7
        %v2044 = vsub.s32 %v2041, %v2043
        %v2045 = vrot.slane %v1974, %v2044
        %v2047 = vunpack.c.l.s4 1983009808
        %v2048 = vunpack.c.0.s8 %v2047
        %v2049 = vlaneseq
        %v2050 = vshrl.u32 %v2049, 7
        %v2051 = vsub.s32 %v2048, %v2050
        %v2052 = vrot.slane %v2038, %v2051
        %v2053 = vcombine.high %v2045, %v2045
        %v2054 = vcombine.high %v2052, %v2052
        %v2055 = vcombine.high %v1975, %v1975
        %v2057 = vunpack.c.l.s4 1983009808
        %v2058 = vunpack.c.0.s8 %v2057
        %v2059 = vlaneseq
        %v2060 = vshrl.u32 %v2059, 7
        %v2061 = vsub.s32 %v2058, %v2060
        %v2062 = vrot.slane %v1975, %v2061
        %v2064 = vunpack.c.l.s4 1983009808
        %v2065 = vunpack.c.0.s8 %v2064
        %v2066 = vlaneseq
        %v2067 = vshrl.u32 %v2066, 7
        %v2068 = vsub.s32 %v2065, %v2067
        %v2069 = vrot.slane %v2055, %v2068
        %v2070 = vcombine.high %v2062, %v2062
        %v2071 = vcombine.high %v2069, %v2069
        %v2072 = vcombine.high %v1976, %v1976
        %v2074 = vunpack.c.l.s4 1983009808
        %v2075 = vunpack.c.0.s8 %v2074
        %v2076 = vlaneseq
        %v2077 = vshrl.u32 %v2076, 7
        %v2078 = vsub.s32 %v2075, %v2077
        %v2079 = vrot.slane %v1976, %v2078
        %v2081 = vunpack.c.l.s4 1983009808
        %v2082 = vunpack.c.0.s8 %v2081
        %v2083 = vlaneseq
        %v2084 = vshrl.u32 %v2083, 7
        %v2085 = vsub.s32 %v2082, %v2084
        %v2086 = vrot.slane %v2072, %v2085
        %v2087 = vcombine.high %v2079, %v2079
        %v2088 = vcombine.high %v2086, %v2086
        %v2089 = vcombine.high %v1977, %v1977
        %v2091 = vunpack.c.l.s4 1983009808
        %v2092 = vunpack.c.0.s8 %v2091
        %v2093 = vlaneseq
        %v2094 = vshrl.u32 %v2093, 7
        %v2095 = vsub.s32 %v2092, %v2094
        %v2096 = vrot.slane %v1977, %v2095
        %v2098 = vunpack.c.l.s4 1983009808
        %v2099 = vunpack.c.0.s8 %v2098
        %v2100 = vlaneseq
        %v2101 = vshrl.u32 %v2100, 7
        %v2102 = vsub.s32 %v2099, %v2101
        %v2103 = vrot.slane %v2089, %v2102
        %v2104 = vcombine.high %v2096, %v2096
        %v2105 = vcombine.high %v2103, %v2103
        %v2106 = vcombine.high %v1978, %v1978
        %v2108 = vunpack.c.l.s4 1983009808
        %v2109 = vunpack.c.0.s8 %v2108
        %v2110 = vlaneseq
        %v2111 = vshrl.u32 %v2110, 7
        %v2112 = vsub.s32 %v2109, %v2111
        %v2113 = vrot.slane %v1978, %v2112
        %v2115 = vunpack.c.l.s4 1983009808
        %v2116 = vunpack.c.0.s8 %v2115
        %v2117 = vlaneseq
        %v2118 = vshrl.u32 %v2117, 7
        %v2119 = vsub.s32 %v2116, %v2118
        %v2120 = vrot.slane %v2106, %v2119
        %v2121 = vcombine.high %v2113, %v2113
        %v2122 = vcombine.high %v2120, %v2120
        %v2123 = vcombine.high %v1979, %v1979
        %v2125 = vunpack.c.l.s4 1983009808
        %v2126 = vunpack.c.0.s8 %v2125
        %v2127 = vlaneseq
        %v2128 = vshrl.u32 %v2127, 7
        %v2129 = vsub.s32 %v2126, %v2128
        %v2130 = vrot.slane %v1979, %v2129
        %v2132 = vunpack.c.l.s4 1983009808
        %v2133 = vunpack.c.0.s8 %v2132
        %v2134 = vlaneseq
        %v2135 = vshrl.u32 %v2134, 7
        %v2136 = vsub.s32 %v2133, %v2135
        %v2137 = vrot.slane %v2123, %v2136
        %v2138 = vcombine.high %v2130, %v2130
        %v2139 = vcombine.high %v2137, %v2137
        %v2140 = vcombine.high %v1980, %v1980
        %v2142 = vunpack.c.l.s4 1983009808
        %v2143 = vunpack.c.0.s8 %v2142
        %v2144 = vlaneseq
        %v2145 = vshrl.u32 %v2144, 7
        %v2146 = vsub.s32 %v2143, %v2145
        %v2147 = vrot.slane %v1980, %v2146
        %v2149 = vunpack.c.l.s4 1983009808
        %v2150 = vunpack.c.0.s8 %v2149
        %v2151 = vlaneseq
        %v2152 = vshrl.u32 %v2151, 7
        %v2153 = vsub.s32 %v2150, %v2152
        %v2154 = vrot.slane %v2140, %v2153
        %v2155 = vcombine.high %v2147, %v2147
        %v2156 = vcombine.high %v2154, %v2154
        %v2157 = vcombine.high %v1981, %v1981
        %v2159 = vunpack.c.l.s4 1983009808
        %v2160 = vunpack.c.0.s8 %v2159
        %v2161 = vlaneseq
        %v2162 = vshrl.u32 %v2161, 7
        %v2163 = vsub.s32 %v2160, %v2162
        %v2164 = vrot.slane %v1981, %v2163
        %v2166 = vunpack.c.l.s4 1983009808
        %v2167 = vunpack.c.0.s8 %v2166
        %v2168 = vlaneseq
        %v2169 = vshrl.u32 %v2168, 7
        %v2170 = vsub.s32 %v2167, %v2169
        %v2171 = vrot.slane %v2157, %v2170
        %v2172 = vcombine.high %v2164, %v2164
        %v2173 = vcombine.high %v2171, %v2171
        %v2174 = vcombine.high %v1982, %v1982
        %v2176 = vunpack.c.l.s4 1983009808
        %v2177 = vunpack.c.0.s8 %v2176
        %v2178 = vlaneseq
        %v2179 = vshrl.u32 %v2178, 7
        %v2180 = vsub.s32 %v2177, %v2179
        %v2181 = vrot.slane %v1982, %v2180
        %v2183 = vunpack.c.l.s4 1983009808
        %v2184 = vunpack.c.0.s8 %v2183
        %v2185 = vlaneseq
        %v2186 = vshrl.u32 %v2185, 7
        %v2187 = vsub.s32 %v2184, %v2186
        %v2188 = vrot.slane %v2174, %v2187
        %v2189 = vcombine.high %v2181, %v2181
        %v2190 = vcombine.high %v2188, %v2188
        %v2191 = vcombine.high %v1983, %v1983
        %v2193 = vunpack.c.l.s4 1983009808
        %v2194 = vunpack.c.0.s8 %v2193
        %v2195 = vlaneseq
        %v2196 = vshrl.u32 %v2195, 7
        %v2197 = vsub.s32 %v2194, %v2196
        %v2198 = vrot.slane %v1983, %v2197
        %v2200 = vunpack.c.l.s4 1983009808
        %v2201 = vunpack.c.0.s8 %v2200
        %v2202 = vlaneseq
        %v2203 = vshrl.u32 %v2202, 7
        %v2204 = vsub.s32 %v2201, %v2203
        %v2205 = vrot.slane %v2191, %v2204
        %v2206 = vcombine.high %v2198, %v2198
        %v2207 = vcombine.high %v2205, %v2205
        %v2208 = vcombine.high %v1984, %v1984
        %v2210 = vunpack.c.l.s4 1983009808
        %v2211 = vunpack.c.0.s8 %v2210
        %v2212 = vlaneseq
        %v2213 = vshrl.u32 %v2212, 7
        %v2214 = vsub.s32 %v2211, %v2213
        %v2215 = vrot.slane %v1984, %v2214
        %v2217 = vunpack.c.l.s4 1983009808
        %v2218 = vunpack.c.0.s8 %v2217
        %v2219 = vlaneseq
        %v2220 = vshrl.u32 %v2219, 7
        %v2221 = vsub.s32 %v2218, %v2220
        %v2222 = vrot.slane %v2208, %v2221
        %v2223 = vcombine.high %v2215, %v2215
        %v2224 = vcombine.high %v2222, %v2222
        %v2225 = vcombine.high %v1985, %v1985
        %v2227 = vunpack.c.l.s4 1983009808
        %v2228 = vunpack.c.0.s8 %v2227
        %v2229 = vlaneseq
        %v2230 = vshrl.u32 %v2229, 7
        %v2231 = vsub.s32 %v2228, %v2230
        %v2232 = vrot.slane %v1985, %v2231
        %v2234 = vunpack.c.l.s4 1983009808
        %v2235 = vunpack.c.0.s8 %v2234
        %v2236 = vlaneseq
        %v2237 = vshrl.u32 %v2236, 7
        %v2238 = vsub.s32 %v2235, %v2237
        %v2239 = vrot.slane %v2225, %v2238
        %v2240 = vcombine.high %v2232, %v2232
        %v2241 = vcombine.high %v2239, %v2239
        %v2242 = vcombine.high %v1986, %v1986
        %v2244 = vunpack.c.l.s4 1983009808
        %v2245 = vunpack.c.0.s8 %v2244
        %v2246 = vlaneseq
        %v2247 = vshrl.u32 %v2246, 7
        %v2248 = vsub.s32 %v2245, %v2247
        %v2249 = vrot.slane %v1986, %v2248
        %v2251 = vunpack.c.l.s4 1983009808
        %v2252 = vunpack.c.0.s8 %v2251
        %v2253 = vlaneseq
        %v2254 = vshrl.u32 %v2253, 7
        %v2255 = vsub.s32 %v2252, %v2254
        %v2256 = vrot.slane %v2242, %v2255
        %v2257 = vcombine.high %v2249, %v2249
        %v2258 = vcombine.high %v2256, %v2256
        %v2259 = vcombine.high %v1987, %v1987
        %v2261 = vunpack.c.l.s4 1983009808
        %v2262 = vunpack.c.0.s8 %v2261
        %v2263 = vlaneseq
        %v2264 = vshrl.u32 %v2263, 7
        %v2265 = vsub.s32 %v2262, %v2264
        %v2266 = vrot.slane %v1987, %v2265
        %v2268 = vunpack.c.l.s4 1983009808
        %v2269 = vunpack.c.0.s8 %v2268
        %v2270 = vlaneseq
        %v2271 = vshrl.u32 %v2270, 7
        %v2272 = vsub.s32 %v2269, %v2271
        %v2273 = vrot.slane %v2259, %v2272
        %v2274 = vcombine.high %v2266, %v2266
        %v2275 = vcombine.high %v2273, %v2273
        %v2276 = vcombine.high %v1988, %v1988
        %v2278 = vunpack.c.l.s4 1983009808
        %v2279 = vunpack.c.0.s8 %v2278
        %v2280 = vlaneseq
        %v2281 = vshrl.u32 %v2280, 7
        %v2282 = vsub.s32 %v2279, %v2281
        %v2283 = vrot.slane %v1988, %v2282
        %v2285 = vunpack.c.l.s4 1983009808
        %v2286 = vunpack.c.0.s8 %v2285
        %v2287 = vlaneseq
        %v2288 = vshrl.u32 %v2287, 7
        %v2289 = vsub.s32 %v2286, %v2288
        %v2290 = vrot.slane %v2276, %v2289
        %v2291 = vcombine.high %v2283, %v2283
        %v2292 = vcombine.high %v2290, %v2290
        %v2293 = vcombine.high %v1989, %v1989
        %v2295 = vunpack.c.l.s4 1983009808
        %v2296 = vunpack.c.0.s8 %v2295
        %v2297 = vlaneseq
        %v2298 = vshrl.u32 %v2297, 7
        %v2299 = vsub.s32 %v2296, %v2298
        %v2300 = vrot.slane %v1989, %v2299
        %v2302 = vunpack.c.l.s4 1983009808
        %v2303 = vunpack.c.0.s8 %v2302
        %v2304 = vlaneseq
        %v2305 = vshrl.u32 %v2304, 7
        %v2306 = vsub.s32 %v2303, %v2305
        %v2307 = vrot.slane %v2293, %v2306
        %v2308 = vcombine.high %v2300, %v2300
        %v2309 = vcombine.high %v2307, %v2307
        %v2310 = vcombine.high %v1990, %v1990
        %v2312 = vunpack.c.l.s4 1983009808
        %v2313 = vunpack.c.0.s8 %v2312
        %v2314 = vlaneseq
        %v2315 = vshrl.u32 %v2314, 7
        %v2316 = vsub.s32 %v2313, %v2315
        %v2317 = vrot.slane %v1990, %v2316
        %v2319 = vunpack.c.l.s4 1983009808
        %v2320 = vunpack.c.0.s8 %v2319
        %v2321 = vlaneseq
        %v2322 = vshrl.u32 %v2321, 7
        %v2323 = vsub.s32 %v2320, %v2322
        %v2324 = vrot.slane %v2310, %v2323
        %v2325 = vcombine.high %v2317, %v2317
        %v2326 = vcombine.high %v2324, %v2324
        %v2327 = vcombine.high %v1991, %v1991
        %v2329 = vunpack.c.l.s4 1983009808
        %v2330 = vunpack.c.0.s8 %v2329
        %v2331 = vlaneseq
        %v2332 = vshrl.u32 %v2331, 7
        %v2333 = vsub.s32 %v2330, %v2332
        %v2334 = vrot.slane %v1991, %v2333
        %v2336 = vunpack.c.l.s4 1983009808
        %v2337 = vunpack.c.0.s8 %v2336
        %v2338 = vlaneseq
        %v2339 = vshrl.u32 %v2338, 7
        %v2340 = vsub.s32 %v2337, %v2339
        %v2341 = vrot.slane %v2327, %v2340
        %v2342 = vcombine.high %v2334, %v2334
        %v2343 = vcombine.high %v2341, %v2341
        %v2344 = vcombine.high %v1992, %v1992
        %v2346 = vunpack.c.l.s4 1983009808
        %v2347 = vunpack.c.0.s8 %v2346
        %v2348 = vlaneseq
        %v2349 = vshrl.u32 %v2348, 7
        %v2350 = vsub.s32 %v2347, %v2349
        %v2351 = vrot.slane %v1992, %v2350
        %v2353 = vunpack.c.l.s4 1983009808
        %v2354 = vunpack.c.0.s8 %v2353
        %v2355 = vlaneseq
        %v2356 = vshrl.u32 %v2355, 7
        %v2357 = vsub.s32 %v2354, %v2356
        %v2358 = vrot.slane %v2344, %v2357
        %v2359 = vcombine.high %v2351, %v2351
        %v2360 = vcombine.high %v2358, %v2358
        %v2361 = vcombine.high %v1993, %v1993
        %v2363 = vunpack.c.l.s4 1983009808
        %v2364 = vunpack.c.0.s8 %v2363
        %v2365 = vlaneseq
        %v2366 = vshrl.u32 %v2365, 7
        %v2367 = vsub.s32 %v2364, %v2366
        %v2368 = vrot.slane %v1993, %v2367
        %v2370 = vunpack.c.l.s4 1983009808
        %v2371 = vunpack.c.0.s8 %v2370
        %v2372 = vlaneseq
        %v2373 = vshrl.u32 %v2372, 7
        %v2374 = vsub.s32 %v2371, %v2373
        %v2375 = vrot.slane %v2361, %v2374
        %v2376 = vcombine.high %v2368, %v2368
        %v2377 = vcombine.high %v2375, %v2375
        %v2378 = vcombine.high %v1994, %v1994
        %v2380 = vunpack.c.l.s4 1983009808
        %v2381 = vunpack.c.0.s8 %v2380
        %v2382 = vlaneseq
        %v2383 = vshrl.u32 %v2382, 7
        %v2384 = vsub.s32 %v2381, %v2383
        %v2385 = vrot.slane %v1994, %v2384
        %v2387 = vunpack.c.l.s4 1983009808
        %v2388 = vunpack.c.0.s8 %v2387
        %v2389 = vlaneseq
        %v2390 = vshrl.u32 %v2389, 7
        %v2391 = vsub.s32 %v2388, %v2390
        %v2392 = vrot.slane %v2378, %v2391
        %v2393 = vcombine.high %v2385, %v2385
        %v2394 = vcombine.high %v2392, %v2392
        %v2395 = vcombine.high %v1995, %v1995
        %v2397 = vunpack.c.l.s4 1983009808
        %v2398 = vunpack.c.0.s8 %v2397
        %v2399 = vlaneseq
        %v2400 = vshrl.u32 %v2399, 7
        %v2401 = vsub.s32 %v2398, %v2400
        %v2402 = vrot.slane %v1995, %v2401
        %v2404 = vunpack.c.l.s4 1983009808
        %v2405 = vunpack.c.0.s8 %v2404
        %v2406 = vlaneseq
        %v2407 = vshrl.u32 %v2406, 7
        %v2408 = vsub.s32 %v2405, %v2407
        %v2409 = vrot.slane %v2395, %v2408
        %v2410 = vcombine.high %v2402, %v2402
        %v2411 = vcombine.high %v2409, %v2409
        %v2412 = vcombine.high %v1996, %v1996
        %v2414 = vunpack.c.l.s4 1983009808
        %v2415 = vunpack.c.0.s8 %v2414
        %v2416 = vlaneseq
        %v2417 = vshrl.u32 %v2416, 7
        %v2418 = vsub.s32 %v2415, %v2417
        %v2419 = vrot.slane %v1996, %v2418
        %v2421 = vunpack.c.l.s4 1983009808
        %v2422 = vunpack.c.0.s8 %v2421
        %v2423 = vlaneseq
        %v2424 = vshrl.u32 %v2423, 7
        %v2425 = vsub.s32 %v2422, %v2424
        %v2426 = vrot.slane %v2412, %v2425
        %v2427 = vcombine.high %v2419, %v2419
        %v2428 = vcombine.high %v2426, %v2426
        %v2429 = vcombine.high %v1997, %v1997
        %v2431 = vunpack.c.l.s4 1983009808
        %v2432 = vunpack.c.0.s8 %v2431
        %v2433 = vlaneseq
        %v2434 = vshrl.u32 %v2433, 7
        %v2435 = vsub.s32 %v2432, %v2434
        %v2436 = vrot.slane %v1997, %v2435
        %v2438 = vunpack.c.l.s4 1983009808
        %v2439 = vunpack.c.0.s8 %v2438
        %v2440 = vlaneseq
        %v2441 = vshrl.u32 %v2440, 7
        %v2442 = vsub.s32 %v2439, %v2441
        %v2443 = vrot.slane %v2429, %v2442
        %v2444 = vcombine.high %v2436, %v2436
        %v2445 = vcombine.high %v2443, %v2443
        %v2446 = vcombine.high %v1998, %v1998
        %v2448 = vunpack.c.l.s4 1983009808
        %v2449 = vunpack.c.0.s8 %v2448
        %v2450 = vlaneseq
        %v2451 = vshrl.u32 %v2450, 7
        %v2452 = vsub.s32 %v2449, %v2451
        %v2453 = vrot.slane %v1998, %v2452
        %v2455 = vunpack.c.l.s4 1983009808
        %v2456 = vunpack.c.0.s8 %v2455
        %v2457 = vlaneseq
        %v2458 = vshrl.u32 %v2457, 7
        %v2459 = vsub.s32 %v2456, %v2458
        %v2460 = vrot.slane %v2446, %v2459
        %v2461 = vcombine.high %v2453, %v2453
        %v2462 = vcombine.high %v2460, %v2460
        %v2463 = vcombine.high %v1999, %v1999
        %v2465 = vunpack.c.l.s4 1983009808
        %v2466 = vunpack.c.0.s8 %v2465
        %v2467 = vlaneseq
        %v2468 = vshrl.u32 %v2467, 7
        %v2469 = vsub.s32 %v2466, %v2468
        %v2470 = vrot.slane %v1999, %v2469
        %v2472 = vunpack.c.l.s4 1983009808
        %v2473 = vunpack.c.0.s8 %v2472
        %v2474 = vlaneseq
        %v2475 = vshrl.u32 %v2474, 7
        %v2476 = vsub.s32 %v2473, %v2475
        %v2477 = vrot.slane %v2463, %v2476
        %v2478 = vcombine.high %v2470, %v2470
        %v2479 = vcombine.high %v2477, %v2477
        %v2480 = vcombine.high %v2000, %v2000
        %v2482 = vunpack.c.l.s4 1983009808
        %v2483 = vunpack.c.0.s8 %v2482
        %v2484 = vlaneseq
        %v2485 = vshrl.u32 %v2484, 7
        %v2486 = vsub.s32 %v2483, %v2485
        %v2487 = vrot.slane %v2000, %v2486
        %v2489 = vunpack.c.l.s4 1983009808
        %v2490 = vunpack.c.0.s8 %v2489
        %v2491 = vlaneseq
        %v2492 = vshrl.u32 %v2491, 7
        %v2493 = vsub.s32 %v2490, %v2492
        %v2494 = vrot.slane %v2480, %v2493
        %v2495 = vcombine.high %v2487, %v2487
        %v2496 = vcombine.high %v2494, %v2494
        %v2497 = vcombine.high %v2001, %v2001
        %v2499 = vunpack.c.l.s4 1983009808
        %v2500 = vunpack.c.0.s8 %v2499
        %v2501 = vlaneseq
        %v2502 = vshrl.u32 %v2501, 7
        %v2503 = vsub.s32 %v2500, %v2502
        %v2504 = vrot.slane %v2001, %v2503
        %v2506 = vunpack.c.l.s4 1983009808
        %v2507 = vunpack.c.0.s8 %v2506
        %v2508 = vlaneseq
        %v2509 = vshrl.u32 %v2508, 7
        %v2510 = vsub.s32 %v2507, %v2509
        %v2511 = vrot.slane %v2497, %v2510
        %v2512 = vcombine.high %v2504, %v2504
        %v2513 = vcombine.high %v2511, %v2511
        %v2514 = vcombine.high %v2002, %v2002
        %v2516 = vunpack.c.l.s4 1983009808
        %v2517 = vunpack.c.0.s8 %v2516
        %v2518 = vlaneseq
        %v2519 = vshrl.u32 %v2518, 7
        %v2520 = vsub.s32 %v2517, %v2519
        %v2521 = vrot.slane %v2002, %v2520
        %v2523 = vunpack.c.l.s4 1983009808
        %v2524 = vunpack.c.0.s8 %v2523
        %v2525 = vlaneseq
        %v2526 = vshrl.u32 %v2525, 7
        %v2527 = vsub.s32 %v2524, %v2526
        %v2528 = vrot.slane %v2514, %v2527
        %v2529 = vcombine.high %v2521, %v2521
        %v2530 = vcombine.high %v2528, %v2528
        %v2531 = vcombine.high %v2003, %v2003
        %v2533 = vunpack.c.l.s4 1983009808
        %v2534 = vunpack.c.0.s8 %v2533
        %v2535 = vlaneseq
        %v2536 = vshrl.u32 %v2535, 7
        %v2537 = vsub.s32 %v2534, %v2536
        %v2538 = vrot.slane %v2003, %v2537
        %v2540 = vunpack.c.l.s4 1983009808
        %v2541 = vunpack.c.0.s8 %v2540
        %v2542 = vlaneseq
        %v2543 = vshrl.u32 %v2542, 7
        %v2544 = vsub.s32 %v2541, %v2543
        %v2545 = vrot.slane %v2531, %v2544
        %v2546 = vcombine.high %v2538, %v2538
        %v2547 = vcombine.high %v2545, %v2545
        %v2548 = vcombine.high %v2004, %v2004
        %v2550 = vunpack.c.l.s4 1983009808
        %v2551 = vunpack.c.0.s8 %v2550
        %v2552 = vlaneseq
        %v2553 = vshrl.u32 %v2552, 7
        %v2554 = vsub.s32 %v2551, %v2553
        %v2555 = vrot.slane %v2004, %v2554
        %v2557 = vunpack.c.l.s4 1983009808
        %v2558 = vunpack.c.0.s8 %v2557
        %v2559 = vlaneseq
        %v2560 = vshrl.u32 %v2559, 7
        %v2561 = vsub.s32 %v2558, %v2560
        %v2562 = vrot.slane %v2548, %v2561
        %v2563 = vcombine.high %v2555, %v2555
        %v2564 = vcombine.high %v2562, %v2562
        %v2565 = vcombine.high %v2005, %v2005
        %v2567 = vunpack.c.l.s4 1983009808
        %v2568 = vunpack.c.0.s8 %v2567
        %v2569 = vlaneseq
        %v2570 = vshrl.u32 %v2569, 7
        %v2571 = vsub.s32 %v2568, %v2570
        %v2572 = vrot.slane %v2005, %v2571
        %v2574 = vunpack.c.l.s4 1983009808
        %v2575 = vunpack.c.0.s8 %v2574
        %v2576 = vlaneseq
        %v2577 = vshrl.u32 %v2576, 7
        %v2578 = vsub.s32 %v2575, %v2577
        %v2579 = vrot.slane %v2565, %v2578
        %v2580 = vcombine.high %v2572, %v2572
        %v2581 = vcombine.high %v2579, %v2579
        %vm2710 = vcmask 254976
        %v2711 = vsel %vm2710, %v2045, -inf
        %v2712 = vrot.slane %v2711, 4
        %v2713 = vmax.f32 %v2711, %v2712
        %v2714 = vrot.slane %v2713, 2
        %v2715 = vmax.f32 %v2713, %v2714
        %v2716 = vrot.slane %v2715, 1
        %v2717 = vmax.f32 %v2715, %v2716
        %v2718 = vsel %vm2710, %v2053, -inf
        %v2719 = vrot.slane %v2718, 4
        %v2720 = vmax.f32 %v2718, %v2719
        %v2721 = vrot.slane %v2720, 2
        %v2722 = vmax.f32 %v2720, %v2721
        %v2723 = vrot.slane %v2722, 1
        %v2724 = vmax.f32 %v2722, %v2723
        %v2725 = vsel %vm2710, %v2052, -inf
        %v2726 = vrot.slane %v2725, 4
        %v2727 = vmax.f32 %v2725, %v2726
        %v2728 = vrot.slane %v2727, 2
        %v2729 = vmax.f32 %v2727, %v2728
        %v2730 = vrot.slane %v2729, 1
        %v2731 = vmax.f32 %v2729, %v2730
        %v2732 = vsel %vm2710, %v2054, -inf
        %v2733 = vrot.slane %v2732, 4
        %v2734 = vmax.f32 %v2732, %v2733
        %v2735 = vrot.slane %v2734, 2
        %v2736 = vmax.f32 %v2734, %v2735
        %v2737 = vrot.slane %v2736, 1
        %v2738 = vmax.f32 %v2736, %v2737
        %v2739 = vsel %vm2710, %v2062, -inf
        %v2740 = vrot.slane %v2739, 4
        %v2741 = vmax.f32 %v2739, %v2740
        %v2742 = vrot.slane %v2741, 2
        %v2743 = vmax.f32 %v2741, %v2742
        %v2744 = vrot.slane %v2743, 1
        %v2745 = vmax.f32 %v2743, %v2744
        %v2746 = vsel %vm2710, %v2070, -inf
        %v2747 = vrot.slane %v2746, 4
        %v2748 = vmax.f32 %v2746, %v2747
        %v2749 = vrot.slane %v2748, 2
        %v2750 = vmax.f32 %v2748, %v2749
        %v2751 = vrot.slane %v2750, 1
        %v2752 = vmax.f32 %v2750, %v2751
        %v2753 = vsel %vm2710, %v2069, -inf
        %v2754 = vrot.slane %v2753, 4
        %v2755 = vmax.f32 %v2753, %v2754
        %v2756 = vrot.slane %v2755, 2
        %v2757 = vmax.f32 %v2755, %v2756
        %v2758 = vrot.slane %v2757, 1
        %v2759 = vmax.f32 %v2757, %v2758
        %v2760 = vsel %vm2710, %v2071, -inf
        %v2761 = vrot.slane %v2760, 4
        %v2762 = vmax.f32 %v2760, %v2761
        %v2763 = vrot.slane %v2762, 2
        %v2764 = vmax.f32 %v2762, %v2763
        %v2765 = vrot.slane %v2764, 1
        %v2766 = vmax.f32 %v2764, %v2765
        %v2767 = vsel %vm2710, %v2079, -inf
        %v2768 = vrot.slane %v2767, 4
        %v2769 = vmax.f32 %v2767, %v2768
        %v2770 = vrot.slane %v2769, 2
        %v2771 = vmax.f32 %v2769, %v2770
        %v2772 = vrot.slane %v2771, 1
        %v2773 = vmax.f32 %v2771, %v2772
        %v2774 = vsel %vm2710, %v2087, -inf
        %v2775 = vrot.slane %v2774, 4
        %v2776 = vmax.f32 %v2774, %v2775
        %v2777 = vrot.slane %v2776, 2
        %v2778 = vmax.f32 %v2776, %v2777
        %v2779 = vrot.slane %v2778, 1
        %v2780 = vmax.f32 %v2778, %v2779
        %v2781 = vsel %vm2710, %v2086, -inf
        %v2782 = vrot.slane %v2781, 4
        %v2783 = vmax.f32 %v2781, %v2782
        %v2784 = vrot.slane %v2783, 2
        %v2785 = vmax.f32 %v2783, %v2784
        %v2786 = vrot.slane %v2785, 1
        %v2787 = vmax.f32 %v2785, %v2786
        %v2788 = vsel %vm2710, %v2088, -inf
        %v2789 = vrot.slane %v2788, 4
        %v2790 = vmax.f32 %v2788, %v2789
        %v2791 = vrot.slane %v2790, 2
        %v2792 = vmax.f32 %v2790, %v2791
        %v2793 = vrot.slane %v2792, 1
        %v2794 = vmax.f32 %v2792, %v2793
        %v2795 = vsel %vm2710, %v2096, -inf
        %v2796 = vrot.slane %v2795, 4
        %v2797 = vmax.f32 %v2795, %v2796
        %v2798 = vrot.slane %v2797, 2
        %v2799 = vmax.f32 %v2797, %v2798
        %v2800 = vrot.slane %v2799, 1
        %v2801 = vmax.f32 %v2799, %v2800
        %v2802 = vsel %vm2710, %v2104, -inf
        %v2803 = vrot.slane %v2802, 4
        %v2804 = vmax.f32 %v2802, %v2803
        %v2805 = vrot.slane %v2804, 2
        %v2806 = vmax.f32 %v2804, %v2805
        %v2807 = vrot.slane %v2806, 1
        %v2808 = vmax.f32 %v2806, %v2807
        %v2809 = vsel %vm2710, %v2103, -inf
        %v2810 = vrot.slane %v2809, 4
        %v2811 = vmax.f32 %v2809, %v2810
        %v2812 = vrot.slane %v2811, 2
        %v2813 = vmax.f32 %v2811, %v2812
        %v2814 = vrot.slane %v2813, 1
        %v2815 = vmax.f32 %v2813, %v2814
        %v2816 = vsel %vm2710, %v2105, -inf
        %v2817 = vrot.slane %v2816, 4
        %v2818 = vmax.f32 %v2816, %v2817
        %v2819 = vrot.slane %v2818, 2
        %v2820 = vmax.f32 %v2818, %v2819
        %v2821 = vrot.slane %v2820, 1
        %v2822 = vmax.f32 %v2820, %v2821
        %v2823 = vsel %vm2710, %v2113, -inf
        %v2824 = vrot.slane %v2823, 4
        %v2825 = vmax.f32 %v2823, %v2824
        %v2826 = vrot.slane %v2825, 2
        %v2827 = vmax.f32 %v2825, %v2826
        %v2828 = vrot.slane %v2827, 1
        %v2829 = vmax.f32 %v2827, %v2828
        %v2830 = vsel %vm2710, %v2121, -inf
        %v2831 = vrot.slane %v2830, 4
        %v2832 = vmax.f32 %v2830, %v2831
        %v2833 = vrot.slane %v2832, 2
        %v2834 = vmax.f32 %v2832, %v2833
        %v2835 = vrot.slane %v2834, 1
        %v2836 = vmax.f32 %v2834, %v2835
        %v2837 = vsel %vm2710, %v2120, -inf
        %v2838 = vrot.slane %v2837, 4
        %v2839 = vmax.f32 %v2837, %v2838
        %v2840 = vrot.slane %v2839, 2
        %v2841 = vmax.f32 %v2839, %v2840
        %v2842 = vrot.slane %v2841, 1
        %v2843 = vmax.f32 %v2841, %v2842
        %v2844 = vsel %vm2710, %v2122, -inf
        %v2845 = vrot.slane %v2844, 4
        %v2846 = vmax.f32 %v2844, %v2845
        %v2847 = vrot.slane %v2846, 2
        %v2848 = vmax.f32 %v2846, %v2847
        %v2849 = vrot.slane %v2848, 1
        %v2850 = vmax.f32 %v2848, %v2849
        %v2851 = vsel %vm2710, %v2130, -inf
        %v2852 = vrot.slane %v2851, 4
        %v2853 = vmax.f32 %v2851, %v2852
        %v2854 = vrot.slane %v2853, 2
        %v2855 = vmax.f32 %v2853, %v2854
        %v2856 = vrot.slane %v2855, 1
        %v2857 = vmax.f32 %v2855, %v2856
        %v2858 = vsel %vm2710, %v2138, -inf
        %v2859 = vrot.slane %v2858, 4
        %v2860 = vmax.f32 %v2858, %v2859
        %v2861 = vrot.slane %v2860, 2
        %v2862 = vmax.f32 %v2860, %v2861
        %v2863 = vrot.slane %v2862, 1
        %v2864 = vmax.f32 %v2862, %v2863
        %v2865 = vsel %vm2710, %v2137, -inf
        %v2866 = vrot.slane %v2865, 4
        %v2867 = vmax.f32 %v2865, %v2866
        %v2868 = vrot.slane %v2867, 2
        %v2869 = vmax.f32 %v2867, %v2868
        %v2870 = vrot.slane %v2869, 1
        %v2871 = vmax.f32 %v2869, %v2870
        %v2872 = vsel %vm2710, %v2139, -inf
        %v2873 = vrot.slane %v2872, 4
        %v2874 = vmax.f32 %v2872, %v2873
        %v2875 = vrot.slane %v2874, 2
        %v2876 = vmax.f32 %v2874, %v2875
        %v2877 = vrot.slane %v2876, 1
        %v2878 = vmax.f32 %v2876, %v2877
        %v2879 = vsel %vm2710, %v2147, -inf
        %v2880 = vrot.slane %v2879, 4
        %v2881 = vmax.f32 %v2879, %v2880
        %v2882 = vrot.slane %v2881, 2
        %v2883 = vmax.f32 %v2881, %v2882
        %v2884 = vrot.slane %v2883, 1
        %v2885 = vmax.f32 %v2883, %v2884
        %v2886 = vsel %vm2710, %v2155, -inf
        %v2887 = vrot.slane %v2886, 4
        %v2888 = vmax.f32 %v2886, %v2887
        %v2889 = vrot.slane %v2888, 2
        %v2890 = vmax.f32 %v2888, %v2889
        %v2891 = vrot.slane %v2890, 1
        %v2892 = vmax.f32 %v2890, %v2891
        %v2893 = vsel %vm2710, %v2154, -inf
        %v2894 = vrot.slane %v2893, 4
        %v2895 = vmax.f32 %v2893, %v2894
        %v2896 = vrot.slane %v2895, 2
        %v2897 = vmax.f32 %v2895, %v2896
        %v2898 = vrot.slane %v2897, 1
        %v2899 = vmax.f32 %v2897, %v2898
        %v2900 = vsel %vm2710, %v2156, -inf
        %v2901 = vrot.slane %v2900, 4
        %v2902 = vmax.f32 %v2900, %v2901
        %v2903 = vrot.slane %v2902, 2
        %v2904 = vmax.f32 %v2902, %v2903
        %v2905 = vrot.slane %v2904, 1
        %v2906 = vmax.f32 %v2904, %v2905
        %v2907 = vsel %vm2710, %v2164, -inf
        %v2908 = vrot.slane %v2907, 4
        %v2909 = vmax.f32 %v2907, %v2908
        %v2910 = vrot.slane %v2909, 2
        %v2911 = vmax.f32 %v2909, %v2910
        %v2912 = vrot.slane %v2911, 1
        %v2913 = vmax.f32 %v2911, %v2912
        %v2914 = vsel %vm2710, %v2172, -inf
        %v2915 = vrot.slane %v2914, 4
        %v2916 = vmax.f32 %v2914, %v2915
        %v2917 = vrot.slane %v2916, 2
        %v2918 = vmax.f32 %v2916, %v2917
        %v2919 = vrot.slane %v2918, 1
        %v2920 = vmax.f32 %v2918, %v2919
        %v2921 = vsel %vm2710, %v2171, -inf
        %v2922 = vrot.slane %v2921, 4
        %v2923 = vmax.f32 %v2921, %v2922
        %v2924 = vrot.slane %v2923, 2
        %v2925 = vmax.f32 %v2923, %v2924
        %v2926 = vrot.slane %v2925, 1
        %v2927 = vmax.f32 %v2925, %v2926
        %v2928 = vsel %vm2710, %v2173, -inf
        %v2929 = vrot.slane %v2928, 4
        %v2930 = vmax.f32 %v2928, %v2929
        %v2931 = vrot.slane %v2930, 2
        %v2932 = vmax.f32 %v2930, %v2931
        %v2933 = vrot.slane %v2932, 1
        %v2934 = vmax.f32 %v2932, %v2933
        %v2935 = vsel %vm2710, %v2181, -inf
        %v2936 = vrot.slane %v2935, 4
        %v2937 = vmax.f32 %v2935, %v2936
        %v2938 = vrot.slane %v2937, 2
        %v2939 = vmax.f32 %v2937, %v2938
        %v2940 = vrot.slane %v2939, 1
        %v2941 = vmax.f32 %v2939, %v2940
        %v2942 = vsel %vm2710, %v2189, -inf
        %v2943 = vrot.slane %v2942, 4
        %v2944 = vmax.f32 %v2942, %v2943
        %v2945 = vrot.slane %v2944, 2
        %v2946 = vmax.f32 %v2944, %v2945
        %v2947 = vrot.slane %v2946, 1
        %v2948 = vmax.f32 %v2946, %v2947
        %v2949 = vsel %vm2710, %v2188, -inf
        %v2950 = vrot.slane %v2949, 4
        %v2951 = vmax.f32 %v2949, %v2950
        %v2952 = vrot.slane %v2951, 2
        %v2953 = vmax.f32 %v2951, %v2952
        %v2954 = vrot.slane %v2953, 1
        %v2955 = vmax.f32 %v2953, %v2954
        %v2956 = vsel %vm2710, %v2190, -inf
        %v2957 = vrot.slane %v2956, 4
        %v2958 = vmax.f32 %v2956, %v2957
        %v2959 = vrot.slane %v2958, 2
        %v2960 = vmax.f32 %v2958, %v2959
        %v2961 = vrot.slane %v2960, 1
        %v2962 = vmax.f32 %v2960, %v2961
        %v2963 = vsel %vm2710, %v2198, -inf
        %v2964 = vrot.slane %v2963, 4
        %v2965 = vmax.f32 %v2963, %v2964
        %v2966 = vrot.slane %v2965, 2
        %v2967 = vmax.f32 %v2965, %v2966
        %v2968 = vrot.slane %v2967, 1
        %v2969 = vmax.f32 %v2967, %v2968
        %v2970 = vsel %vm2710, %v2206, -inf
        %v2971 = vrot.slane %v2970, 4
        %v2972 = vmax.f32 %v2970, %v2971
        %v2973 = vrot.slane %v2972, 2
        %v2974 = vmax.f32 %v2972, %v2973
        %v2975 = vrot.slane %v2974, 1
        %v2976 = vmax.f32 %v2974, %v2975
        %v2977 = vsel %vm2710, %v2205, -inf
        %v2978 = vrot.slane %v2977, 4
        %v2979 = vmax.f32 %v2977, %v2978
        %v2980 = vrot.slane %v2979, 2
        %v2981 = vmax.f32 %v2979, %v2980
        %v2982 = vrot.slane %v2981, 1
        %v2983 = vmax.f32 %v2981, %v2982
        %v2984 = vsel %vm2710, %v2207, -inf
        %v2985 = vrot.slane %v2984, 4
        %v2986 = vmax.f32 %v2984, %v2985
        %v2987 = vrot.slane %v2986, 2
        %v2988 = vmax.f32 %v2986, %v2987
        %v2989 = vrot.slane %v2988, 1
        %v2990 = vmax.f32 %v2988, %v2989
        %v2991 = vsel %vm2710, %v2215, -inf
        %v2992 = vrot.slane %v2991, 4
        %v2993 = vmax.f32 %v2991, %v2992
        %v2994 = vrot.slane %v2993, 2
        %v2995 = vmax.f32 %v2993, %v2994
        %v2996 = vrot.slane %v2995, 1
        %v2997 = vmax.f32 %v2995, %v2996
        %v2998 = vsel %vm2710, %v2223, -inf
        %v2999 = vrot.slane %v2998, 4
        %v3000 = vmax.f32 %v2998, %v2999
        %v3001 = vrot.slane %v3000, 2
        %v3002 = vmax.f32 %v3000, %v3001
        %v3003 = vrot.slane %v3002, 1
        %v3004 = vmax.f32 %v3002, %v3003
        %v3005 = vsel %vm2710, %v2222, -inf
        %v3006 = vrot.slane %v3005, 4
        %v3007 = vmax.f32 %v3005, %v3006
        %v3008 = vrot.slane %v3007, 2
        %v3009 = vmax.f32 %v3007, %v3008
        %v3010 = vrot.slane %v3009, 1
        %v3011 = vmax.f32 %v3009, %v3010
        %v3012 = vsel %vm2710, %v2224, -inf
        %v3013 = vrot.slane %v3012, 4
        %v3014 = vmax.f32 %v3012, %v3013
        %v3015 = vrot.slane %v3014, 2
        %v3016 = vmax.f32 %v3014, %v3015
        %v3017 = vrot.slane %v3016, 1
        %v3018 = vmax.f32 %v3016, %v3017
        %v3019 = vsel %vm2710, %v2232, -inf
        %v3020 = vrot.slane %v3019, 4
        %v3021 = vmax.f32 %v3019, %v3020
        %v3022 = vrot.slane %v3021, 2
        %v3023 = vmax.f32 %v3021, %v3022
        %v3024 = vrot.slane %v3023, 1
        %v3025 = vmax.f32 %v3023, %v3024
        %v3026 = vsel %vm2710, %v2240, -inf
        %v3027 = vrot.slane %v3026, 4
        %v3028 = vmax.f32 %v3026, %v3027
        %v3029 = vrot.slane %v3028, 2
        %v3030 = vmax.f32 %v3028, %v3029
        %v3031 = vrot.slane %v3030, 1
        %v3032 = vmax.f32 %v3030, %v3031
        %v3033 = vsel %vm2710, %v2239, -inf
        %v3034 = vrot.slane %v3033, 4
        %v3035 = vmax.f32 %v3033, %v3034
        %v3036 = vrot.slane %v3035, 2
        %v3037 = vmax.f32 %v3035, %v3036
        %v3038 = vrot.slane %v3037, 1
        %v3039 = vmax.f32 %v3037, %v3038
        %v3040 = vsel %vm2710, %v2241, -inf
        %v3041 = vrot.slane %v3040, 4
        %v3042 = vmax.f32 %v3040, %v3041
        %v3043 = vrot.slane %v3042, 2
        %v3044 = vmax.f32 %v3042, %v3043
        %v3045 = vrot.slane %v3044, 1
        %v3046 = vmax.f32 %v3044, %v3045
        %v3047 = vsel %vm2710, %v2249, -inf
        %v3048 = vrot.slane %v3047, 4
        %v3049 = vmax.f32 %v3047, %v3048
        %v3050 = vrot.slane %v3049, 2
        %v3051 = vmax.f32 %v3049, %v3050
        %v3052 = vrot.slane %v3051, 1
        %v3053 = vmax.f32 %v3051, %v3052
        %v3054 = vsel %vm2710, %v2257, -inf
        %v3055 = vrot.slane %v3054, 4
        %v3056 = vmax.f32 %v3054, %v3055
        %v3057 = vrot.slane %v3056, 2
        %v3058 = vmax.f32 %v3056, %v3057
        %v3059 = vrot.slane %v3058, 1
        %v3060 = vmax.f32 %v3058, %v3059
        %v3061 = vsel %vm2710, %v2256, -inf
        %v3062 = vrot.slane %v3061, 4
        %v3063 = vmax.f32 %v3061, %v3062
        %v3064 = vrot.slane %v3063, 2
        %v3065 = vmax.f32 %v3063, %v3064
        %v3066 = vrot.slane %v3065, 1
        %v3067 = vmax.f32 %v3065, %v3066
        %v3068 = vsel %vm2710, %v2258, -inf
        %v3069 = vrot.slane %v3068, 4
        %v3070 = vmax.f32 %v3068, %v3069
        %v3071 = vrot.slane %v3070, 2
        %v3072 = vmax.f32 %v3070, %v3071
        %v3073 = vrot.slane %v3072, 1
        %v3074 = vmax.f32 %v3072, %v3073
        %v3075 = vsel %vm2710, %v2266, -inf
        %v3076 = vrot.slane %v3075, 4
        %v3077 = vmax.f32 %v3075, %v3076
        %v3078 = vrot.slane %v3077, 2
        %v3079 = vmax.f32 %v3077, %v3078
        %v3080 = vrot.slane %v3079, 1
        %v3081 = vmax.f32 %v3079, %v3080
        %v3082 = vsel %vm2710, %v2274, -inf
        %v3083 = vrot.slane %v3082, 4
        %v3084 = vmax.f32 %v3082, %v3083
        %v3085 = vrot.slane %v3084, 2
        %v3086 = vmax.f32 %v3084, %v3085
        %v3087 = vrot.slane %v3086, 1
        %v3088 = vmax.f32 %v3086, %v3087
        %v3089 = vsel %vm2710, %v2273, -inf
        %v3090 = vrot.slane %v3089, 4
        %v3091 = vmax.f32 %v3089, %v3090
        %v3092 = vrot.slane %v3091, 2
        %v3093 = vmax.f32 %v3091, %v3092
        %v3094 = vrot.slane %v3093, 1
        %v3095 = vmax.f32 %v3093, %v3094
        %v3096 = vsel %vm2710, %v2275, -inf
        %v3097 = vrot.slane %v3096, 4
        %v3098 = vmax.f32 %v3096, %v3097
        %v3099 = vrot.slane %v3098, 2
        %v3100 = vmax.f32 %v3098, %v3099
        %v3101 = vrot.slane %v3100, 1
        %v3102 = vmax.f32 %v3100, %v3101
        %v3103 = vsel %vm2710, %v2283, -inf
        %v3104 = vrot.slane %v3103, 4
        %v3105 = vmax.f32 %v3103, %v3104
        %v3106 = vrot.slane %v3105, 2
        %v3107 = vmax.f32 %v3105, %v3106
        %v3108 = vrot.slane %v3107, 1
        %v3109 = vmax.f32 %v3107, %v3108
        %v3110 = vsel %vm2710, %v2291, -inf
        %v3111 = vrot.slane %v3110, 4
        %v3112 = vmax.f32 %v3110, %v3111
        %v3113 = vrot.slane %v3112, 2
        %v3114 = vmax.f32 %v3112, %v3113
        %v3115 = vrot.slane %v3114, 1
        %v3116 = vmax.f32 %v3114, %v3115
        %v3117 = vsel %vm2710, %v2290, -inf
        %v3118 = vrot.slane %v3117, 4
        %v3119 = vmax.f32 %v3117, %v3118
        %v3120 = vrot.slane %v3119, 2
        %v3121 = vmax.f32 %v3119, %v3120
        %v3122 = vrot.slane %v3121, 1
        %v3123 = vmax.f32 %v3121, %v3122
        %v3124 = vsel %vm2710, %v2292, -inf
        %v3125 = vrot.slane %v3124, 4
        %v3126 = vmax.f32 %v3124, %v3125
        %v3127 = vrot.slane %v3126, 2
        %v3128 = vmax.f32 %v3126, %v3127
        %v3129 = vrot.slane %v3128, 1
        %v3130 = vmax.f32 %v3128, %v3129
        %v3131 = vsel %vm2710, %v2300, -inf
        %v3132 = vrot.slane %v3131, 4
        %v3133 = vmax.f32 %v3131, %v3132
        %v3134 = vrot.slane %v3133, 2
        %v3135 = vmax.f32 %v3133, %v3134
        %v3136 = vrot.slane %v3135, 1
        %v3137 = vmax.f32 %v3135, %v3136
        %v3138 = vsel %vm2710, %v2308, -inf
        %v3139 = vrot.slane %v3138, 4
        %v3140 = vmax.f32 %v3138, %v3139
        %v3141 = vrot.slane %v3140, 2
        %v3142 = vmax.f32 %v3140, %v3141
        %v3143 = vrot.slane %v3142, 1
        %v3144 = vmax.f32 %v3142, %v3143
        %v3145 = vsel %vm2710, %v2307, -inf
        %v3146 = vrot.slane %v3145, 4
        %v3147 = vmax.f32 %v3145, %v3146
        %v3148 = vrot.slane %v3147, 2
        %v3149 = vmax.f32 %v3147, %v3148
        %v3150 = vrot.slane %v3149, 1
        %v3151 = vmax.f32 %v3149, %v3150
        %v3152 = vsel %vm2710, %v2309, -inf
        %v3153 = vrot.slane %v3152, 4
        %v3154 = vmax.f32 %v3152, %v3153
        %v3155 = vrot.slane %v3154, 2
        %v3156 = vmax.f32 %v3154, %v3155
        %v3157 = vrot.slane %v3156, 1
        %v3158 = vmax.f32 %v3156, %v3157
        %v3159 = vsel %vm2710, %v2317, -inf
        %v3160 = vrot.slane %v3159, 4
        %v3161 = vmax.f32 %v3159, %v3160
        %v3162 = vrot.slane %v3161, 2
        %v3163 = vmax.f32 %v3161, %v3162
        %v3164 = vrot.slane %v3163, 1
        %v3165 = vmax.f32 %v3163, %v3164
        %v3166 = vsel %vm2710, %v2325, -inf
        %v3167 = vrot.slane %v3166, 4
        %v3168 = vmax.f32 %v3166, %v3167
        %v3169 = vrot.slane %v3168, 2
        %v3170 = vmax.f32 %v3168, %v3169
        %v3171 = vrot.slane %v3170, 1
        %v3172 = vmax.f32 %v3170, %v3171
        %v3173 = vsel %vm2710, %v2324, -inf
        %v3174 = vrot.slane %v3173, 4
        %v3175 = vmax.f32 %v3173, %v3174
        %v3176 = vrot.slane %v3175, 2
        %v3177 = vmax.f32 %v3175, %v3176
        %v3178 = vrot.slane %v3177, 1
        %v3179 = vmax.f32 %v3177, %v3178
        %v3180 = vsel %vm2710, %v2326, -inf
        %v3181 = vrot.slane %v3180, 4
        %v3182 = vmax.f32 %v3180, %v3181
        %v3183 = vrot.slane %v3182, 2
        %v3184 = vmax.f32 %v3182, %v3183
        %v3185 = vrot.slane %v3184, 1
        %v3186 = vmax.f32 %v3184, %v3185
        %v3187 = vsel %vm2710, %v2334, -inf
        %v3188 = vrot.slane %v3187, 4
        %v3189 = vmax.f32 %v3187, %v3188
        %v3190 = vrot.slane %v3189, 2
        %v3191 = vmax.f32 %v3189, %v3190
        %v3192 = vrot.slane %v3191, 1
        %v3193 = vmax.f32 %v3191, %v3192
        %v3194 = vsel %vm2710, %v2342, -inf
        %v3195 = vrot.slane %v3194, 4
        %v3196 = vmax.f32 %v3194, %v3195
        %v3197 = vrot.slane %v3196, 2
        %v3198 = vmax.f32 %v3196, %v3197
        %v3199 = vrot.slane %v3198, 1
        %v3200 = vmax.f32 %v3198, %v3199
        %v3201 = vsel %vm2710, %v2341, -inf
        %v3202 = vrot.slane %v3201, 4
        %v3203 = vmax.f32 %v3201, %v3202
        %v3204 = vrot.slane %v3203, 2
        %v3205 = vmax.f32 %v3203, %v3204
        %v3206 = vrot.slane %v3205, 1
        %v3207 = vmax.f32 %v3205, %v3206
        %v3208 = vsel %vm2710, %v2343, -inf
        %v3209 = vrot.slane %v3208, 4
        %v3210 = vmax.f32 %v3208, %v3209
        %v3211 = vrot.slane %v3210, 2
        %v3212 = vmax.f32 %v3210, %v3211
        %v3213 = vrot.slane %v3212, 1
        %v3214 = vmax.f32 %v3212, %v3213
        %v3215 = vsel %vm2710, %v2351, -inf
        %v3216 = vrot.slane %v3215, 4
        %v3217 = vmax.f32 %v3215, %v3216
        %v3218 = vrot.slane %v3217, 2
        %v3219 = vmax.f32 %v3217, %v3218
        %v3220 = vrot.slane %v3219, 1
        %v3221 = vmax.f32 %v3219, %v3220
        %v3222 = vsel %vm2710, %v2359, -inf
        %v3223 = vrot.slane %v3222, 4
        %v3224 = vmax.f32 %v3222, %v3223
        %v3225 = vrot.slane %v3224, 2
        %v3226 = vmax.f32 %v3224, %v3225
        %v3227 = vrot.slane %v3226, 1
        %v3228 = vmax.f32 %v3226, %v3227
        %v3229 = vsel %vm2710, %v2358, -inf
        %v3230 = vrot.slane %v3229, 4
        %v3231 = vmax.f32 %v3229, %v3230
        %v3232 = vrot.slane %v3231, 2
        %v3233 = vmax.f32 %v3231, %v3232
        %v3234 = vrot.slane %v3233, 1
        %v3235 = vmax.f32 %v3233, %v3234
        %v3236 = vsel %vm2710, %v2360, -inf
        %v3237 = vrot.slane %v3236, 4
        %v3238 = vmax.f32 %v3236, %v3237
        %v3239 = vrot.slane %v3238, 2
        %v3240 = vmax.f32 %v3238, %v3239
        %v3241 = vrot.slane %v3240, 1
        %v3242 = vmax.f32 %v3240, %v3241
        %v3243 = vsel %vm2710, %v2368, -inf
        %v3244 = vrot.slane %v3243, 4
        %v3245 = vmax.f32 %v3243, %v3244
        %v3246 = vrot.slane %v3245, 2
        %v3247 = vmax.f32 %v3245, %v3246
        %v3248 = vrot.slane %v3247, 1
        %v3249 = vmax.f32 %v3247, %v3248
        %v3250 = vsel %vm2710, %v2376, -inf
        %v3251 = vrot.slane %v3250, 4
        %v3252 = vmax.f32 %v3250, %v3251
        %v3253 = vrot.slane %v3252, 2
        %v3254 = vmax.f32 %v3252, %v3253
        %v3255 = vrot.slane %v3254, 1
        %v3256 = vmax.f32 %v3254, %v3255
        %v3257 = vsel %vm2710, %v2375, -inf
        %v3258 = vrot.slane %v3257, 4
        %v3259 = vmax.f32 %v3257, %v3258
        %v3260 = vrot.slane %v3259, 2
        %v3261 = vmax.f32 %v3259, %v3260
        %v3262 = vrot.slane %v3261, 1
        %v3263 = vmax.f32 %v3261, %v3262
        %v3264 = vsel %vm2710, %v2377, -inf
        %v3265 = vrot.slane %v3264, 4
        %v3266 = vmax.f32 %v3264, %v3265
        %v3267 = vrot.slane %v3266, 2
        %v3268 = vmax.f32 %v3266, %v3267
        %v3269 = vrot.slane %v3268, 1
        %v3270 = vmax.f32 %v3268, %v3269
        %v3271 = vsel %vm2710, %v2385, -inf
        %v3272 = vrot.slane %v3271, 4
        %v3273 = vmax.f32 %v3271, %v3272
        %v3274 = vrot.slane %v3273, 2
        %v3275 = vmax.f32 %v3273, %v3274
        %v3276 = vrot.slane %v3275, 1
        %v3277 = vmax.f32 %v3275, %v3276
        %v3278 = vsel %vm2710, %v2393, -inf
        %v3279 = vrot.slane %v3278, 4
        %v3280 = vmax.f32 %v3278, %v3279
        %v3281 = vrot.slane %v3280, 2
        %v3282 = vmax.f32 %v3280, %v3281
        %v3283 = vrot.slane %v3282, 1
        %v3284 = vmax.f32 %v3282, %v3283
        %v3285 = vsel %vm2710, %v2392, -inf
        %v3286 = vrot.slane %v3285, 4
        %v3287 = vmax.f32 %v3285, %v3286
        %v3288 = vrot.slane %v3287, 2
        %v3289 = vmax.f32 %v3287, %v3288
        %v3290 = vrot.slane %v3289, 1
        %v3291 = vmax.f32 %v3289, %v3290
        %v3292 = vsel %vm2710, %v2394, -inf
        %v3293 = vrot.slane %v3292, 4
        %v3294 = vmax.f32 %v3292, %v3293
        %v3295 = vrot.slane %v3294, 2
        %v3296 = vmax.f32 %v3294, %v3295
        %v3297 = vrot.slane %v3296, 1
        %v3298 = vmax.f32 %v3296, %v3297
        %v3299 = vsel %vm2710, %v2402, -inf
        %v3300 = vrot.slane %v3299, 4
        %v3301 = vmax.f32 %v3299, %v3300
        %v3302 = vrot.slane %v3301, 2
        %v3303 = vmax.f32 %v3301, %v3302
        %v3304 = vrot.slane %v3303, 1
        %v3305 = vmax.f32 %v3303, %v3304
        %v3306 = vsel %vm2710, %v2410, -inf
        %v3307 = vrot.slane %v3306, 4
        %v3308 = vmax.f32 %v3306, %v3307
        %v3309 = vrot.slane %v3308, 2
        %v3310 = vmax.f32 %v3308, %v3309
        %v3311 = vrot.slane %v3310, 1
        %v3312 = vmax.f32 %v3310, %v3311
        %v3313 = vsel %vm2710, %v2409, -inf
        %v3314 = vrot.slane %v3313, 4
        %v3315 = vmax.f32 %v3313, %v3314
        %v3316 = vrot.slane %v3315, 2
        %v3317 = vmax.f32 %v3315, %v3316
        %v3318 = vrot.slane %v3317, 1
        %v3319 = vmax.f32 %v3317, %v3318
        %v3320 = vsel %vm2710, %v2411, -inf
        %v3321 = vrot.slane %v3320, 4
        %v3322 = vmax.f32 %v3320, %v3321
        %v3323 = vrot.slane %v3322, 2
        %v3324 = vmax.f32 %v3322, %v3323
        %v3325 = vrot.slane %v3324, 1
        %v3326 = vmax.f32 %v3324, %v3325
        %v3327 = vsel %vm2710, %v2419, -inf
        %v3328 = vrot.slane %v3327, 4
        %v3329 = vmax.f32 %v3327, %v3328
        %v3330 = vrot.slane %v3329, 2
        %v3331 = vmax.f32 %v3329, %v3330
        %v3332 = vrot.slane %v3331, 1
        %v3333 = vmax.f32 %v3331, %v3332
        %v3334 = vsel %vm2710, %v2427, -inf
        %v3335 = vrot.slane %v3334, 4
        %v3336 = vmax.f32 %v3334, %v3335
        %v3337 = vrot.slane %v3336, 2
        %v3338 = vmax.f32 %v3336, %v3337
        %v3339 = vrot.slane %v3338, 1
        %v3340 = vmax.f32 %v3338, %v3339
        %v3341 = vsel %vm2710, %v2426, -inf
        %v3342 = vrot.slane %v3341, 4
        %v3343 = vmax.f32 %v3341, %v3342
        %v3344 = vrot.slane %v3343, 2
        %v3345 = vmax.f32 %v3343, %v3344
        %v3346 = vrot.slane %v3345, 1
        %v3347 = vmax.f32 %v3345, %v3346
        %v3348 = vsel %vm2710, %v2428, -inf
        %v3349 = vrot.slane %v3348, 4
        %v3350 = vmax.f32 %v3348, %v3349
        %v3351 = vrot.slane %v3350, 2
        %v3352 = vmax.f32 %v3350, %v3351
        %v3353 = vrot.slane %v3352, 1
        %v3354 = vmax.f32 %v3352, %v3353
        %v3355 = vsel %vm2710, %v2436, -inf
        %v3356 = vrot.slane %v3355, 4
        %v3357 = vmax.f32 %v3355, %v3356
        %v3358 = vrot.slane %v3357, 2
        %v3359 = vmax.f32 %v3357, %v3358
        %v3360 = vrot.slane %v3359, 1
        %v3361 = vmax.f32 %v3359, %v3360
        %v3362 = vsel %vm2710, %v2444, -inf
        %v3363 = vrot.slane %v3362, 4
        %v3364 = vmax.f32 %v3362, %v3363
        %v3365 = vrot.slane %v3364, 2
        %v3366 = vmax.f32 %v3364, %v3365
        %v3367 = vrot.slane %v3366, 1
        %v3368 = vmax.f32 %v3366, %v3367
        %v3369 = vsel %vm2710, %v2443, -inf
        %v3370 = vrot.slane %v3369, 4
        %v3371 = vmax.f32 %v3369, %v3370
        %v3372 = vrot.slane %v3371, 2
        %v3373 = vmax.f32 %v3371, %v3372
        %v3374 = vrot.slane %v3373, 1
        %v3375 = vmax.f32 %v3373, %v3374
        %v3376 = vsel %vm2710, %v2445, -inf
        %v3377 = vrot.slane %v3376, 4
        %v3378 = vmax.f32 %v3376, %v3377
        %v3379 = vrot.slane %v3378, 2
        %v3380 = vmax.f32 %v3378, %v3379
        %v3381 = vrot.slane %v3380, 1
        %v3382 = vmax.f32 %v3380, %v3381
        %v3383 = vsel %vm2710, %v2453, -inf
        %v3384 = vrot.slane %v3383, 4
        %v3385 = vmax.f32 %v3383, %v3384
        %v3386 = vrot.slane %v3385, 2
        %v3387 = vmax.f32 %v3385, %v3386
        %v3388 = vrot.slane %v3387, 1
        %v3389 = vmax.f32 %v3387, %v3388
        %v3390 = vsel %vm2710, %v2461, -inf
        %v3391 = vrot.slane %v3390, 4
        %v3392 = vmax.f32 %v3390, %v3391
        %v3393 = vrot.slane %v3392, 2
        %v3394 = vmax.f32 %v3392, %v3393
        %v3395 = vrot.slane %v3394, 1
        %v3396 = vmax.f32 %v3394, %v3395
        %v3397 = vsel %vm2710, %v2460, -inf
        %v3398 = vrot.slane %v3397, 4
        %v3399 = vmax.f32 %v3397, %v3398
        %v3400 = vrot.slane %v3399, 2
        %v3401 = vmax.f32 %v3399, %v3400
        %v3402 = vrot.slane %v3401, 1
        %v3403 = vmax.f32 %v3401, %v3402
        %v3404 = vsel %vm2710, %v2462, -inf
        %v3405 = vrot.slane %v3404, 4
        %v3406 = vmax.f32 %v3404, %v3405
        %v3407 = vrot.slane %v3406, 2
        %v3408 = vmax.f32 %v3406, %v3407
        %v3409 = vrot.slane %v3408, 1
        %v3410 = vmax.f32 %v3408, %v3409
        %v3411 = vsel %vm2710, %v2470, -inf
        %v3412 = vrot.slane %v3411, 4
        %v3413 = vmax.f32 %v3411, %v3412
        %v3414 = vrot.slane %v3413, 2
        %v3415 = vmax.f32 %v3413, %v3414
        %v3416 = vrot.slane %v3415, 1
        %v3417 = vmax.f32 %v3415, %v3416
        %v3418 = vsel %vm2710, %v2478, -inf
        %v3419 = vrot.slane %v3418, 4
        %v3420 = vmax.f32 %v3418, %v3419
        %v3421 = vrot.slane %v3420, 2
        %v3422 = vmax.f32 %v3420, %v3421
        %v3423 = vrot.slane %v3422, 1
        %v3424 = vmax.f32 %v3422, %v3423
        %v3425 = vsel %vm2710, %v2477, -inf
        %v3426 = vrot.slane %v3425, 4
        %v3427 = vmax.f32 %v3425, %v3426
        %v3428 = vrot.slane %v3427, 2
        %v3429 = vmax.f32 %v3427, %v3428
        %v3430 = vrot.slane %v3429, 1
        %v3431 = vmax.f32 %v3429, %v3430
        %v3432 = vsel %vm2710, %v2479, -inf
        %v3433 = vrot.slane %v3432, 4
        %v3434 = vmax.f32 %v3432, %v3433
        %v3435 = vrot.slane %v3434, 2
        %v3436 = vmax.f32 %v3434, %v3435
        %v3437 = vrot.slane %v3436, 1
        %v3438 = vmax.f32 %v3436, %v3437
        %v3439 = vsel %vm2710, %v2487, -inf
        %v3440 = vrot.slane %v3439, 4
        %v3441 = vmax.f32 %v3439, %v3440
        %v3442 = vrot.slane %v3441, 2
        %v3443 = vmax.f32 %v3441, %v3442
        %v3444 = vrot.slane %v3443, 1
        %v3445 = vmax.f32 %v3443, %v3444
        %v3446 = vsel %vm2710, %v2495, -inf
        %v3447 = vrot.slane %v3446, 4
        %v3448 = vmax.f32 %v3446, %v3447
        %v3449 = vrot.slane %v3448, 2
        %v3450 = vmax.f32 %v3448, %v3449
        %v3451 = vrot.slane %v3450, 1
        %v3452 = vmax.f32 %v3450, %v3451
        %v3453 = vsel %vm2710, %v2494, -inf
        %v3454 = vrot.slane %v3453, 4
        %v3455 = vmax.f32 %v3453, %v3454
        %v3456 = vrot.slane %v3455, 2
        %v3457 = vmax.f32 %v3455, %v3456
        %v3458 = vrot.slane %v3457, 1
        %v3459 = vmax.f32 %v3457, %v3458
        %v3460 = vsel %vm2710, %v2496, -inf
        %v3461 = vrot.slane %v3460, 4
        %v3462 = vmax.f32 %v3460, %v3461
        %v3463 = vrot.slane %v3462, 2
        %v3464 = vmax.f32 %v3462, %v3463
        %v3465 = vrot.slane %v3464, 1
        %v3466 = vmax.f32 %v3464, %v3465
        %v3467 = vsel %vm2710, %v2504, -inf
        %v3468 = vrot.slane %v3467, 4
        %v3469 = vmax.f32 %v3467, %v3468
        %v3470 = vrot.slane %v3469, 2
        %v3471 = vmax.f32 %v3469, %v3470
        %v3472 = vrot.slane %v3471, 1
        %v3473 = vmax.f32 %v3471, %v3472
        %v3474 = vsel %vm2710, %v2512, -inf
        %v3475 = vrot.slane %v3474, 4
        %v3476 = vmax.f32 %v3474, %v3475
        %v3477 = vrot.slane %v3476, 2
        %v3478 = vmax.f32 %v3476, %v3477
        %v3479 = vrot.slane %v3478, 1
        %v3480 = vmax.f32 %v3478, %v3479
        %v3481 = vsel %vm2710, %v2511, -inf
        %v3482 = vrot.slane %v3481, 4
        %v3483 = vmax.f32 %v3481, %v3482
        %v3484 = vrot.slane %v3483, 2
        %v3485 = vmax.f32 %v3483, %v3484
        %v3486 = vrot.slane %v3485, 1
        %v3487 = vmax.f32 %v3485, %v3486
        %v3488 = vsel %vm2710, %v2513, -inf
        %v3489 = vrot.slane %v3488, 4
        %v3490 = vmax.f32 %v3488, %v3489
        %v3491 = vrot.slane %v3490, 2
        %v3492 = vmax.f32 %v3490, %v3491
        %v3493 = vrot.slane %v3492, 1
        %v3494 = vmax.f32 %v3492, %v3493
        %v3495 = vsel %vm2710, %v2521, -inf
        %v3496 = vrot.slane %v3495, 4
        %v3497 = vmax.f32 %v3495, %v3496
        %v3498 = vrot.slane %v3497, 2
        %v3499 = vmax.f32 %v3497, %v3498
        %v3500 = vrot.slane %v3499, 1
        %v3501 = vmax.f32 %v3499, %v3500
        %v3502 = vsel %vm2710, %v2529, -inf
        %v3503 = vrot.slane %v3502, 4
        %v3504 = vmax.f32 %v3502, %v3503
        %v3505 = vrot.slane %v3504, 2
        %v3506 = vmax.f32 %v3504, %v3505
        %v3507 = vrot.slane %v3506, 1
        %v3508 = vmax.f32 %v3506, %v3507
        %v3509 = vsel %vm2710, %v2528, -inf
        %v3510 = vrot.slane %v3509, 4
        %v3511 = vmax.f32 %v3509, %v3510
        %v3512 = vrot.slane %v3511, 2
        %v3513 = vmax.f32 %v3511, %v3512
        %v3514 = vrot.slane %v3513, 1
        %v3515 = vmax.f32 %v3513, %v3514
        %v3516 = vsel %vm2710, %v2530, -inf
        %v3517 = vrot.slane %v3516, 4
        %v3518 = vmax.f32 %v3516, %v3517
        %v3519 = vrot.slane %v3518, 2
        %v3520 = vmax.f32 %v3518, %v3519
        %v3521 = vrot.slane %v3520, 1
        %v3522 = vmax.f32 %v3520, %v3521
        %v3523 = vsel %vm2710, %v2538, -inf
        %v3524 = vrot.slane %v3523, 4
        %v3525 = vmax.f32 %v3523, %v3524
        %v3526 = vrot.slane %v3525, 2
        %v3527 = vmax.f32 %v3525, %v3526
        %v3528 = vrot.slane %v3527, 1
        %v3529 = vmax.f32 %v3527, %v3528
        %v3530 = vsel %vm2710, %v2546, -inf
        %v3531 = vrot.slane %v3530, 4
        %v3532 = vmax.f32 %v3530, %v3531
        %v3533 = vrot.slane %v3532, 2
        %v3534 = vmax.f32 %v3532, %v3533
        %v3535 = vrot.slane %v3534, 1
        %v3536 = vmax.f32 %v3534, %v3535
        %v3537 = vsel %vm2710, %v2545, -inf
        %v3538 = vrot.slane %v3537, 4
        %v3539 = vmax.f32 %v3537, %v3538
        %v3540 = vrot.slane %v3539, 2
        %v3541 = vmax.f32 %v3539, %v3540
        %v3542 = vrot.slane %v3541, 1
        %v3543 = vmax.f32 %v3541, %v3542
        %v3544 = vsel %vm2710, %v2547, -inf
        %v3545 = vrot.slane %v3544, 4
        %v3546 = vmax.f32 %v3544, %v3545
        %v3547 = vrot.slane %v3546, 2
        %v3548 = vmax.f32 %v3546, %v3547
        %v3549 = vrot.slane %v3548, 1
        %v3550 = vmax.f32 %v3548, %v3549
        %v3551 = vsel %vm2710, %v2555, -inf
        %v3552 = vrot.slane %v3551, 4
        %v3553 = vmax.f32 %v3551, %v3552
        %v3554 = vrot.slane %v3553, 2
        %v3555 = vmax.f32 %v3553, %v3554
        %v3556 = vrot.slane %v3555, 1
        %v3557 = vmax.f32 %v3555, %v3556
        %v3558 = vsel %vm2710, %v2563, -inf
        %v3559 = vrot.slane %v3558, 4
        %v3560 = vmax.f32 %v3558, %v3559
        %v3561 = vrot.slane %v3560, 2
        %v3562 = vmax.f32 %v3560, %v3561
        %v3563 = vrot.slane %v3562, 1
        %v3564 = vmax.f32 %v3562, %v3563
        %v3565 = vsel %vm2710, %v2562, -inf
        %v3566 = vrot.slane %v3565, 4
        %v3567 = vmax.f32 %v3565, %v3566
        %v3568 = vrot.slane %v3567, 2
        %v3569 = vmax.f32 %v3567, %v3568
        %v3570 = vrot.slane %v3569, 1
        %v3571 = vmax.f32 %v3569, %v3570
        %v3572 = vsel %vm2710, %v2564, -inf
        %v3573 = vrot.slane %v3572, 4
        %v3574 = vmax.f32 %v3572, %v3573
        %v3575 = vrot.slane %v3574, 2
        %v3576 = vmax.f32 %v3574, %v3575
        %v3577 = vrot.slane %v3576, 1
        %v3578 = vmax.f32 %v3576, %v3577
        %v3579 = vsel %vm2710, %v2572, -inf
        %v3580 = vrot.slane %v3579, 4
        %v3581 = vmax.f32 %v3579, %v3580
        %v3582 = vrot.slane %v3581, 2
        %v3583 = vmax.f32 %v3581, %v3582
        %v3584 = vrot.slane %v3583, 1
        %v3585 = vmax.f32 %v3583, %v3584
        %v3586 = vsel %vm2710, %v2580, -inf
        %v3587 = vrot.slane %v3586, 4
        %v3588 = vmax.f32 %v3586, %v3587
        %v3589 = vrot.slane %v3588, 2
        %v3590 = vmax.f32 %v3588, %v3589
        %v3591 = vrot.slane %v3590, 1
        %v3592 = vmax.f32 %v3590, %v3591
        %v3593 = vsel %vm2710, %v2579, -inf
        %v3594 = vrot.slane %v3593, 4
        %v3595 = vmax.f32 %v3593, %v3594
        %v3596 = vrot.slane %v3595, 2
        %v3597 = vmax.f32 %v3595, %v3596
        %v3598 = vrot.slane %v3597, 1
        %v3599 = vmax.f32 %v3597, %v3598
        %v3600 = vsel %vm2710, %v2581, -inf
        %v3601 = vrot.slane %v3600, 4
        %v3602 = vmax.f32 %v3600, %v3601
        %v3603 = vrot.slane %v3602, 2
        %v3604 = vmax.f32 %v3602, %v3603
        %v3605 = vrot.slane %v3604, 1
        %v3606 = vmax.f32 %v3604, %v3605
        %vm3607 = vcmask 261120
        %v3608 = vsel %vm3607, %v2717, -inf
        %v3609 = vsel %vm3607, %v2773, -inf
        %v3610 = vmax.f32 %v3608, %v3609
        %v3611 = vsel %vm3607, %v2724, -inf
        %v3612 = vsel %vm3607, %v2780, -inf
        %v3613 = vmax.f32 %v3611, %v3612
        %v3614 = vsel %vm3607, %v2731, -inf
        %v3615 = vsel %vm3607, %v2787, -inf
        %v3616 = vmax.f32 %v3614, %v3615
        %v3617 = vsel %vm3607, %v2738, -inf
        %v3618 = vsel %vm3607, %v2794, -inf
        %v3619 = vmax.f32 %v3617, %v3618
        %v3620 = vsel %vm3607, %v2745, -inf
        %v3621 = vsel %vm3607, %v2801, -inf
        %v3622 = vmax.f32 %v3620, %v3621
        %v3623 = vsel %vm3607, %v2752, -inf
        %v3624 = vsel %vm3607, %v2808, -inf
        %v3625 = vmax.f32 %v3623, %v3624
        %v3626 = vsel %vm3607, %v2759, -inf
        %v3627 = vsel %vm3607, %v2815, -inf
        %v3628 = vmax.f32 %v3626, %v3627
        %v3629 = vsel %vm3607, %v2766, -inf
        %v3630 = vsel %vm3607, %v2822, -inf
        %v3631 = vmax.f32 %v3629, %v3630
        %v3632 = vsel %vm3607, %v2829, -inf
        %v3633 = vsel %vm3607, %v2885, -inf
        %v3634 = vmax.f32 %v3632, %v3633
        %v3635 = vsel %vm3607, %v2836, -inf
        %v3636 = vsel %vm3607, %v2892, -inf
        %v3637 = vmax.f32 %v3635, %v3636
        %v3638 = vsel %vm3607, %v2843, -inf
        %v3639 = vsel %vm3607, %v2899, -inf
        %v3640 = vmax.f32 %v3638, %v3639
        %v3641 = vsel %vm3607, %v2850, -inf
        %v3642 = vsel %vm3607, %v2906, -inf
        %v3643 = vmax.f32 %v3641, %v3642
        %v3644 = vsel %vm3607, %v2857, -inf
        %v3645 = vsel %vm3607, %v2913, -inf
        %v3646 = vmax.f32 %v3644, %v3645
        %v3647 = vsel %vm3607, %v2864, -inf
        %v3648 = vsel %vm3607, %v2920, -inf
        %v3649 = vmax.f32 %v3647, %v3648
        %v3650 = vsel %vm3607, %v2871, -inf
        %v3651 = vsel %vm3607, %v2927, -inf
        %v3652 = vmax.f32 %v3650, %v3651
        %v3653 = vsel %vm3607, %v2878, -inf
        %v3654 = vsel %vm3607, %v2934, -inf
        %v3655 = vmax.f32 %v3653, %v3654
        %v3656 = vsel %vm3607, %v2941, -inf
        %v3657 = vsel %vm3607, %v2997, -inf
        %v3658 = vmax.f32 %v3656, %v3657
        %v3659 = vsel %vm3607, %v2948, -inf
        %v3660 = vsel %vm3607, %v3004, -inf
        %v3661 = vmax.f32 %v3659, %v3660
        %v3662 = vsel %vm3607, %v2955, -inf
        %v3663 = vsel %vm3607, %v3011, -inf
        %v3664 = vmax.f32 %v3662, %v3663
        %v3665 = vsel %vm3607, %v2962, -inf
        %v3666 = vsel %vm3607, %v3018, -inf
        %v3667 = vmax.f32 %v3665, %v3666
        %v3668 = vsel %vm3607, %v2969, -inf
        %v3669 = vsel %vm3607, %v3025, -inf
        %v3670 = vmax.f32 %v3668, %v3669
        %v3671 = vsel %vm3607, %v2976, -inf
        %v3672 = vsel %vm3607, %v3032, -inf
        %v3673 = vmax.f32 %v3671, %v3672
        %v3674 = vsel %vm3607, %v2983, -inf
        %v3675 = vsel %vm3607, %v3039, -inf
        %v3676 = vmax.f32 %v3674, %v3675
        %v3677 = vsel %vm3607, %v2990, -inf
        %v3678 = vsel %vm3607, %v3046, -inf
        %v3679 = vmax.f32 %v3677, %v3678
        %v3680 = vsel %vm3607, %v3053, -inf
        %v3681 = vsel %vm3607, %v3109, -inf
        %v3682 = vmax.f32 %v3680, %v3681
        %v3683 = vsel %vm3607, %v3060, -inf
        %v3684 = vsel %vm3607, %v3116, -inf
        %v3685 = vmax.f32 %v3683, %v3684
        %v3686 = vsel %vm3607, %v3067, -inf
        %v3687 = vsel %vm3607, %v3123, -inf
        %v3688 = vmax.f32 %v3686, %v3687
        %v3689 = vsel %vm3607, %v3074, -inf
        %v3690 = vsel %vm3607, %v3130, -inf
        %v3691 = vmax.f32 %v3689, %v3690
        %v3692 = vsel %vm3607, %v3081, -inf
        %v3693 = vsel %vm3607, %v3137, -inf
        %v3694 = vmax.f32 %v3692, %v3693
        %v3695 = vsel %vm3607, %v3088, -inf
        %v3696 = vsel %vm3607, %v3144, -inf
        %v3697 = vmax.f32 %v3695, %v3696
        %v3698 = vsel %vm3607, %v3095, -inf
        %v3699 = vsel %vm3607, %v3151, -inf
        %v3700 = vmax.f32 %v3698, %v3699
        %v3701 = vsel %vm3607, %v3102, -inf
        %v3702 = vsel %vm3607, %v3158, -inf
        %v3703 = vmax.f32 %v3701, %v3702
        %v3704 = vsel %vm3607, %v3165, -inf
        %v3705 = vsel %vm3607, %v3221, -inf
        %v3706 = vmax.f32 %v3704, %v3705
        %v3707 = vsel %vm3607, %v3172, -inf
        %v3708 = vsel %vm3607, %v3228, -inf
        %v3709 = vmax.f32 %v3707, %v3708
        %v3710 = vsel %vm3607, %v3179, -inf
        %v3711 = vsel %vm3607, %v3235, -inf
        %v3712 = vmax.f32 %v3710, %v3711
        %v3713 = vsel %vm3607, %v3186, -inf
        %v3714 = vsel %vm3607, %v3242, -inf
        %v3715 = vmax.f32 %v3713, %v3714
        %v3716 = vsel %vm3607, %v3193, -inf
        %v3717 = vsel %vm3607, %v3249, -inf
        %v3718 = vmax.f32 %v3716, %v3717
        %v3719 = vsel %vm3607, %v3200, -inf
        %v3720 = vsel %vm3607, %v3256, -inf
        %v3721 = vmax.f32 %v3719, %v3720
        %v3722 = vsel %vm3607, %v3207, -inf
        %v3723 = vsel %vm3607, %v3263, -inf
        %v3724 = vmax.f32 %v3722, %v3723
        %v3725 = vsel %vm3607, %v3214, -inf
        %v3726 = vsel %vm3607, %v3270, -inf
        %v3727 = vmax.f32 %v3725, %v3726
        %v3728 = vsel %vm3607, %v3277, -inf
        %v3729 = vsel %vm3607, %v3333, -inf
        %v3730 = vmax.f32 %v3728, %v3729
        %v3731 = vsel %vm3607, %v3284, -inf
        %v3732 = vsel %vm3607, %v3340, -inf
        %v3733 = vmax.f32 %v3731, %v3732
        %v3734 = vsel %vm3607, %v3291, -inf
        %v3735 = vsel %vm3607, %v3347, -inf
        %v3736 = vmax.f32 %v3734, %v3735
        %v3737 = vsel %vm3607, %v3298, -inf
        %v3738 = vsel %vm3607, %v3354, -inf
        %v3739 = vmax.f32 %v3737, %v3738
        %v3740 = vsel %vm3607, %v3305, -inf
        %v3741 = vsel %vm3607, %v3361, -inf
        %v3742 = vmax.f32 %v3740, %v3741
        %v3743 = vsel %vm3607, %v3312, -inf
        %v3744 = vsel %vm3607, %v3368, -inf
        %v3745 = vmax.f32 %v3743, %v3744
        %v3746 = vsel %vm3607, %v3319, -inf
        %v3747 = vsel %vm3607, %v3375, -inf
        %v3748 = vmax.f32 %v3746, %v3747
        %v3749 = vsel %vm3607, %v3326, -inf
        %v3750 = vsel %vm3607, %v3382, -inf
        %v3751 = vmax.f32 %v3749, %v3750
        %v3752 = vsel %vm3607, %v3389, -inf
        %v3753 = vsel %vm3607, %v3445, -inf
        %v3754 = vmax.f32 %v3752, %v3753
        %v3755 = vsel %vm3607, %v3396, -inf
        %v3756 = vsel %vm3607, %v3452, -inf
        %v3757 = vmax.f32 %v3755, %v3756
        %v3758 = vsel %vm3607, %v3403, -inf
        %v3759 = vsel %vm3607, %v3459, -inf
        %v3760 = vmax.f32 %v3758, %v3759
        %v3761 = vsel %vm3607, %v3410, -inf
        %v3762 = vsel %vm3607, %v3466, -inf
        %v3763 = vmax.f32 %v3761, %v3762
        %v3764 = vsel %vm3607, %v3417, -inf
        %v3765 = vsel %vm3607, %v3473, -inf
        %v3766 = vmax.f32 %v3764, %v3765
        %v3767 = vsel %vm3607, %v3424, -inf
        %v3768 = vsel %vm3607, %v3480, -inf
        %v3769 = vmax.f32 %v3767, %v3768
        %v3770 = vsel %vm3607, %v3431, -inf
        %v3771 = vsel %vm3607, %v3487, -inf
        %v3772 = vmax.f32 %v3770, %v3771
        %v3773 = vsel %vm3607, %v3438, -inf
        %v3774 = vsel %vm3607, %v3494, -inf
        %v3775 = vmax.f32 %v3773, %v3774
        %v3776 = vsel %vm3607, %v3501, -inf
        %v3777 = vsel %vm3607, %v3557, -inf
        %v3778 = vmax.f32 %v3776, %v3777
        %v3779 = vsel %vm3607, %v3508, -inf
        %v3780 = vsel %vm3607, %v3564, -inf
        %v3781 = vmax.f32 %v3779, %v3780
        %v3782 = vsel %vm3607, %v3515, -inf
        %v3783 = vsel %vm3607, %v3571, -inf
        %v3784 = vmax.f32 %v3782, %v3783
        %v3785 = vsel %vm3607, %v3522, -inf
        %v3786 = vsel %vm3607, %v3578, -inf
        %v3787 = vmax.f32 %v3785, %v3786
        %v3788 = vsel %vm3607, %v3529, -inf
        %v3789 = vsel %vm3607, %v3585, -inf
        %v3790 = vmax.f32 %v3788, %v3789
        %v3791 = vsel %vm3607, %v3536, -inf
        %v3792 = vsel %vm3607, %v3592, -inf
        %v3793 = vmax.f32 %v3791, %v3792
        %v3794 = vsel %vm3607, %v3543, -inf
        %v3795 = vsel %vm3607, %v3599, -inf
        %v3796 = vmax.f32 %v3794, %v3795
        %v3797 = vsel %vm3607, %v3550, -inf
        %v3798 = vsel %vm3607, %v3606, -inf
        %v3799 = vmax.f32 %v3797, %v3798
        %3800 = vst.msk [vmem:[#allocation3] sm:$0xff] %vm3607, 0.0
        %3801 = vst.msk [vmem:[#allocation3 + $0x8] sm:$0x3] %vm2710, 0.0
        %3802 = vst.msk [vmem:[#allocation3 + $0x10] sm:$0xff] %vm3607, 0.0
        %3803 = vst.msk [vmem:[#allocation3 + $0x18] sm:$0x3] %vm2710, 0.0
        %3804 = vst.msk [vmem:[#allocation3 + $0x20] sm:$0xff] %vm3607, 0.0
        %3805 = vst.msk [vmem:[#allocation3 + $0x28] sm:$0x3] %vm2710, 0.0
        %3806 = vst.msk [vmem:[#allocation3 + $0x30] sm:$0xff] %vm3607, 0.0
        %3807 = vst.msk [vmem:[#allocation3 + $0x38] sm:$0x3] %vm2710, 0.0
        %3808 = vst.msk [vmem:[#allocation3 + $0x40] sm:$0xff] %vm3607, 0.0
        %3809 = vst.msk [vmem:[#allocation3 + $0x48] sm:$0x3] %vm2710, 0.0
        %3810 = vst.msk [vmem:[#allocation3 + $0x50] sm:$0xff] %vm3607, 0.0
        %3811 = vst.msk [vmem:[#allocation3 + $0x58] sm:$0x3] %vm2710, 0.0
        %3812 = vst.msk [vmem:[#allocation3 + $0x60] sm:$0xff] %vm3607, 0.0
        %3813 = vst.msk [vmem:[#allocation3 + $0x68] sm:$0x3] %vm2710, 0.0
        %3814 = vst.msk [vmem:[#allocation3 + $0x70] sm:$0xff] %vm3607, 0.0
        %3815 = vst.msk [vmem:[#allocation3 + $0x78] sm:$0x3] %vm2710, 0.0
        %3816 = vst.msk [vmem:[#allocation3 + $0x80] sm:$0xff] %vm3607, 0.0
        %3817 = vst.msk [vmem:[#allocation3 + $0x88] sm:$0x3] %vm2710, 0.0
        %3818 = vst.msk [vmem:[#allocation3 + $0x90] sm:$0xff] %vm3607, 0.0
        %3819 = vst.msk [vmem:[#allocation3 + $0x98] sm:$0x3] %vm2710, 0.0
        %vm3884 = vcmask 1041409
        %v3885 = vsel %vm3884, %v3613, %v3610
        %vm3886 = vcmask 1042434
        %v3887 = vsel %vm3886, %v3616, %v3885
        %vm3888 = vcmask 1043459
        %v3889 = vsel %vm3888, %v3619, %v3887
        %vm3890 = vcmask 1044484
        %v3891 = vsel %vm3890, %v3622, %v3889
        %vm3892 = vcmask 1045509
        %v3893 = vsel %vm3892, %v3625, %v3891
        %vm3894 = vcmask 1046534
        %v3895 = vsel %vm3894, %v3628, %v3893
        %vm3896 = vcmask 1047559
        %v3897 = vsel %vm3896, %v3631, %v3895
        %v3898 = vsel %vm3884, %v3637, %v3634
        %v3899 = vsel %vm3886, %v3640, %v3898
        %v3900 = vsel %vm3888, %v3643, %v3899
        %v3901 = vsel %vm3890, %v3646, %v3900
        %v3902 = vsel %vm3892, %v3649, %v3901
        %v3903 = vsel %vm3894, %v3652, %v3902
        %v3904 = vsel %vm3896, %v3655, %v3903
        %v3905 = vsel %vm3884, %v3661, %v3658
        %v3906 = vsel %vm3886, %v3664, %v3905
        %v3907 = vsel %vm3888, %v3667, %v3906
        %v3908 = vsel %vm3890, %v3670, %v3907
        %v3909 = vsel %vm3892, %v3673, %v3908
        %v3910 = vsel %vm3894, %v3676, %v3909
        %v3911 = vsel %vm3896, %v3679, %v3910
        %v3912 = vsel %vm3884, %v3685, %v3682
        %v3913 = vsel %vm3886, %v3688, %v3912
        %v3914 = vsel %vm3888, %v3691, %v3913
        %v3915 = vsel %vm3890, %v3694, %v3914
        %v3916 = vsel %vm3892, %v3697, %v3915
        %v3917 = vsel %vm3894, %v3700, %v3916
        %v3918 = vsel %vm3896, %v3703, %v3917
        %v3919 = vsel %vm3884, %v3709, %v3706
        %v3920 = vsel %vm3886, %v3712, %v3919
        %v3921 = vsel %vm3888, %v3715, %v3920
        %v3922 = vsel %vm3890, %v3718, %v3921
        %v3923 = vsel %vm3892, %v3721, %v3922
        %v3924 = vsel %vm3894, %v3724, %v3923
        %v3925 = vsel %vm3896, %v3727, %v3924
        %v3926 = vsel %vm3884, %v3733, %v3730
        %v3927 = vsel %vm3886, %v3736, %v3926
        %v3928 = vsel %vm3888, %v3739, %v3927
        %v3929 = vsel %vm3890, %v3742, %v3928
        %v3930 = vsel %vm3892, %v3745, %v3929
        %v3931 = vsel %vm3894, %v3748, %v3930
        %v3932 = vsel %vm3896, %v3751, %v3931
        %v3933 = vsel %vm3884, %v3757, %v3754
        %v3934 = vsel %vm3886, %v3760, %v3933
        %v3935 = vsel %vm3888, %v3763, %v3934
        %v3936 = vsel %vm3890, %v3766, %v3935
        %v3937 = vsel %vm3892, %v3769, %v3936
        %v3938 = vsel %vm3894, %v3772, %v3937
        %v3939 = vsel %vm3896, %v3775, %v3938
        %v3940 = vsel %vm3884, %v3781, %v3778
        %v3941 = vsel %vm3886, %v3784, %v3940
        %v3942 = vsel %vm3888, %v3787, %v3941
        %v3943 = vsel %vm3890, %v3790, %v3942
        %v3944 = vsel %vm3892, %v3793, %v3943
        %v3945 = vsel %vm3894, %v3796, %v3944
        %v3946 = vsel %vm3896, %v3799, %v3945
        %s3955 = scalar_lea.vmem [#allocation3], 16
        %3956 = vst.msk [vmem:[%s3955 + $0x1] sm:$0xff] %vm3607, %v3897
        %3957 = vst.msk [vmem:[%s3955 + $0x11] sm:$0xff] %vm3607, %v3904
        %3958 = vst.msk [vmem:[%s3955 + $0x21] sm:$0xff] %vm3607, %v3911
        %3959 = vst.msk [vmem:[%s3955 + $0x31] sm:$0xff] %vm3607, %v3918
        %3960 = vst.msk [vmem:[%s3955 + $0x41] sm:$0xff] %vm3607, %v3925
        %3961 = vst.msk [vmem:[%s3955 + $0x51] sm:$0xff] %vm3607, %v3932
        %3962 = vst.msk [vmem:[%s3955 + $0x61] sm:$0xff] %vm3607, %v3939
        %3963 = vst.msk [vmem:[%s3955 + $0x71] sm:$0xff] %vm3607, %v3946
        %v3964 = vld [vmem:[#allocation3] sm:$0xff]
        %v3965 = vld [vmem:[#allocation3 + $0x8] sm:$0x3]
        %v3966 = vld [vmem:[#allocation3 + $0x10] sm:$0xff]
        %v3967 = vld [vmem:[#allocation3 + $0x18] sm:$0x3]
        %v3968 = vld [vmem:[#allocation3 + $0x20] sm:$0xff]
        %v3969 = vld [vmem:[#allocation3 + $0x28] sm:$0x3]
        %v3970 = vld [vmem:[#allocation3 + $0x30] sm:$0xff]
        %v3971 = vld [vmem:[#allocation3 + $0x38] sm:$0x3]
        %v3972 = vld [vmem:[#allocation3 + $0x40] sm:$0xff]
        %v3973 = vld [vmem:[#allocation3 + $0x48] sm:$0x3]
        %v3974 = vld [vmem:[#allocation3 + $0x50] sm:$0xff]
        %v3975 = vld [vmem:[#allocation3 + $0x58] sm:$0x3]
        %v3976 = vld [vmem:[#allocation3 + $0x60] sm:$0xff]
        %v3977 = vld [vmem:[#allocation3 + $0x68] sm:$0x3]
        %v3978 = vld [vmem:[#allocation3 + $0x70] sm:$0xff]
        %v3979 = vld [vmem:[#allocation3 + $0x78] sm:$0x3]
        %v3980 = vld [vmem:[#allocation3 + $0x80] sm:$0xff]
        %v3981 = vld [vmem:[#allocation3 + $0x88] sm:$0x3]
        %v3982 = vld [vmem:[#allocation3 + $0x90] sm:$0xff]
        %v3983 = vld [vmem:[#allocation3 + $0x98] sm:$0x3]
        %v4000 = vrot.slane %v3964, 1
        %v4001 = vrot.slane %v3965, 1
        %v4002 = vsel %vm501, %v4000, %v4001
        %v4003 = vrot.slane %v3966, 1
        %v4004 = vrot.slane %v3967, 1
        %v4005 = vsel %vm501, %v4003, %v4004
        %v4006 = vrot.slane %v3968, 1
        %v4007 = vrot.slane %v3969, 1
        %v4008 = vsel %vm501, %v4006, %v4007
        %v4009 = vrot.slane %v3970, 1
        %v4010 = vrot.slane %v3971, 1
        %v4011 = vsel %vm501, %v4009, %v4010
        %v4012 = vrot.slane %v3972, 1
        %v4013 = vrot.slane %v3973, 1
        %v4014 = vsel %vm501, %v4012, %v4013
        %v4015 = vrot.slane %v3974, 1
        %v4016 = vrot.slane %v3975, 1
        %v4017 = vsel %vm501, %v4015, %v4016
        %v4018 = vrot.slane %v3976, 1
        %v4019 = vrot.slane %v3977, 1
        %v4020 = vsel %vm501, %v4018, %v4019
        %v4021 = vrot.slane %v3978, 1
        %v4022 = vrot.slane %v3979, 1
        %v4023 = vsel %vm501, %v4021, %v4022
        %4024 = vrot.lane.b32.xlu0 %v4002, 32
        %v4025 = vpop.permute.xlu0 %4024
        %4026 = vrot.lane.b32.xlu0 %v4005, 32
        %v4027 = vpop.permute.xlu0 %4026
        %4028 = vrot.lane.b32.xlu0 %v4008, 32
        %v4029 = vpop.permute.xlu0 %4028
        %4030 = vrot.lane.b32.xlu0 %v4011, 32
        %v4031 = vpop.permute.xlu0 %4030
        %4032 = vrot.lane.b32.xlu0 %v4014, 32
        %v4033 = vpop.permute.xlu0 %4032
        %4034 = vrot.lane.b32.xlu0 %v4017, 32
        %v4035 = vpop.permute.xlu0 %4034
        %4036 = vrot.lane.b32.xlu0 %v4020, 32
        %v4037 = vpop.permute.xlu0 %4036
        %4038 = vrot.lane.b32.xlu0 %v4023, 32
        %v4039 = vpop.permute.xlu0 %4038
        %v4048 = vrot.slane %v3964, 2
        %v4049 = vrot.slane %v3965, 2
        %v4050 = vsel %vm678, %v4048, %v4049
        %v4051 = vrot.slane %v3966, 2
        %v4052 = vrot.slane %v3967, 2
        %v4053 = vsel %vm678, %v4051, %v4052
        %v4054 = vrot.slane %v3968, 2
        %v4055 = vrot.slane %v3969, 2
        %v4056 = vsel %vm678, %v4054, %v4055
        %v4057 = vrot.slane %v3970, 2
        %v4058 = vrot.slane %v3971, 2
        %v4059 = vsel %vm678, %v4057, %v4058
        %v4060 = vrot.slane %v3972, 2
        %v4061 = vrot.slane %v3973, 2
        %v4062 = vsel %vm678, %v4060, %v4061
        %v4063 = vrot.slane %v3974, 2
        %v4064 = vrot.slane %v3975, 2
        %v4065 = vsel %vm678, %v4063, %v4064
        %v4066 = vrot.slane %v3976, 2
        %v4067 = vrot.slane %v3977, 2
        %v4068 = vsel %vm678, %v4066, %v4067
        %v4069 = vrot.slane %v3978, 2
        %v4070 = vrot.slane %v3979, 2
        %v4071 = vsel %vm678, %v4069, %v4070
        %4072 = vrot.lane.b32.xlu0 %v4050, 64
        %v4073 = vpop.permute.xlu0 %4072
        %4074 = vrot.lane.b32.xlu0 %v4053, 64
        %v4075 = vpop.permute.xlu0 %4074
        %4076 = vrot.lane.b32.xlu0 %v4056, 64
        %v4077 = vpop.permute.xlu0 %4076
        %4078 = vrot.lane.b32.xlu0 %v4059, 64
        %v4079 = vpop.permute.xlu0 %4078
        %4080 = vrot.lane.b32.xlu0 %v4062, 64
        %v4081 = vpop.permute.xlu0 %4080
        %4082 = vrot.lane.b32.xlu0 %v4065, 64
        %v4083 = vpop.permute.xlu0 %4082
        %4084 = vrot.lane.b32.xlu0 %v4068, 64
        %v4085 = vpop.permute.xlu0 %4084
        %4086 = vrot.lane.b32.xlu0 %v4071, 64
        %v4087 = vpop.permute.xlu0 %4086
        %4097 = vrot.lane.b32.xlu0 %v3966, 96
        %v4098 = vpop.permute.xlu0 %4097
        %4099 = vrot.lane.b32.xlu0 %v3968, 96
        %v4100 = vpop.permute.xlu0 %4099
        %4101 = vrot.lane.b32.xlu0 %v3970, 96
        %v4102 = vpop.permute.xlu0 %4101
        %4103 = vrot.lane.b32.xlu0 %v3972, 96
        %v4104 = vpop.permute.xlu0 %4103
        %4105 = vrot.lane.b32.xlu0 %v3974, 96
        %v4106 = vpop.permute.xlu0 %4105
        %4107 = vrot.lane.b32.xlu0 %v3976, 96
        %v4108 = vpop.permute.xlu0 %4107
        %4109 = vrot.lane.b32.xlu0 %v3978, 96
        %v4110 = vpop.permute.xlu0 %4109
        %4111 = vrot.lane.b32.xlu0 %v3980, 96
        %v4112 = vpop.permute.xlu0 %4111
        %v4122 = vrot.slane %v3980, 1
        %v4123 = vrot.slane %v3981, 1
        %v4124 = vsel %vm501, %v4122, %v4123
        %v4133 = vrot.slane %v3980, 2
        %v4134 = vrot.slane %v3981, 2
        %v4135 = vsel %vm678, %v4133, %v4134
        %4136 = vrot.lane.b32.xlu0 %v4053, 32
        %v4137 = vpop.permute.xlu0 %4136
        %4138 = vrot.lane.b32.xlu0 %v4056, 32
        %v4139 = vpop.permute.xlu0 %4138
        %4140 = vrot.lane.b32.xlu0 %v4059, 32
        %v4141 = vpop.permute.xlu0 %4140
        %4142 = vrot.lane.b32.xlu0 %v4062, 32
        %v4143 = vpop.permute.xlu0 %4142
        %4144 = vrot.lane.b32.xlu0 %v4065, 32
        %v4145 = vpop.permute.xlu0 %4144
        %4146 = vrot.lane.b32.xlu0 %v4068, 32
        %v4147 = vpop.permute.xlu0 %4146
        %4148 = vrot.lane.b32.xlu0 %v4071, 32
        %v4149 = vpop.permute.xlu0 %4148
        %4150 = vrot.lane.b32.xlu0 %v4135, 32
        %v4151 = vpop.permute.xlu0 %4150
        %4161 = vrot.lane.b32.xlu0 %v3968, 64
        %v4162 = vpop.permute.xlu0 %4161
        %4163 = vrot.lane.b32.xlu0 %v3970, 64
        %v4164 = vpop.permute.xlu0 %4163
        %4165 = vrot.lane.b32.xlu0 %v3972, 64
        %v4166 = vpop.permute.xlu0 %4165
        %4167 = vrot.lane.b32.xlu0 %v3974, 64
        %v4168 = vpop.permute.xlu0 %4167
        %4169 = vrot.lane.b32.xlu0 %v3976, 64
        %v4170 = vpop.permute.xlu0 %4169
        %4171 = vrot.lane.b32.xlu0 %v3978, 64
        %v4172 = vpop.permute.xlu0 %4171
        %4173 = vrot.lane.b32.xlu0 %v3980, 64
        %v4174 = vpop.permute.xlu0 %4173
        %4175 = vrot.lane.b32.xlu0 %v3982, 64
        %v4176 = vpop.permute.xlu0 %4175
        %v4186 = vrot.slane %v3982, 1
        %v4187 = vrot.slane %v3983, 1
        %v4188 = vsel %vm501, %v4186, %v4187
        %4189 = vrot.lane.b32.xlu0 %v4008, 96
        %v4190 = vpop.permute.xlu0 %4189
        %4191 = vrot.lane.b32.xlu0 %v4011, 96
        %v4192 = vpop.permute.xlu0 %4191
        %4193 = vrot.lane.b32.xlu0 %v4014, 96
        %v4194 = vpop.permute.xlu0 %4193
        %4195 = vrot.lane.b32.xlu0 %v4017, 96
        %v4196 = vpop.permute.xlu0 %4195
        %4197 = vrot.lane.b32.xlu0 %v4020, 96
        %v4198 = vpop.permute.xlu0 %4197
        %4199 = vrot.lane.b32.xlu0 %v4023, 96
        %v4200 = vpop.permute.xlu0 %4199
        %4201 = vrot.lane.b32.xlu0 %v4124, 96
        %v4202 = vpop.permute.xlu0 %4201
        %4203 = vrot.lane.b32.xlu0 %v4188, 96
        %v4204 = vpop.permute.xlu0 %4203
        %v4213 = vrot.slane %v3982, 2
        %v4214 = vrot.slane %v3983, 2
        %v4215 = vsel %vm678, %v4213, %v4214
        %v4224 = vsel %vm3607, %v3964, %v4025
        %v4225 = vsel %vm3607, %v3966, %v4027
        %v4226 = vsel %vm3607, %v3968, %v4029
        %v4227 = vsel %vm3607, %v3970, %v4031
        %v4228 = vsel %vm3607, %v3972, %v4033
        %v4229 = vsel %vm3607, %v3974, %v4035
        %v4230 = vsel %vm3607, %v3976, %v4037
        %v4231 = vsel %vm3607, %v3978, %v4039
        %vm4232 = vcmask 523264
        %v4233 = vsel %vm4232, %v4224, %v4073
        %v4234 = vsel %vm4232, %v4225, %v4075
        %v4235 = vsel %vm4232, %v4226, %v4077
        %v4236 = vsel %vm4232, %v4227, %v4079
        %v4237 = vsel %vm4232, %v4228, %v4081
        %v4238 = vsel %vm4232, %v4229, %v4083
        %v4239 = vsel %vm4232, %v4230, %v4085
        %v4240 = vsel %vm4232, %v4231, %v4087
        %vm4241 = vcmask 785408
        %v4242 = vsel %vm4241, %v4233, %v4098
        %v4243 = vsel %vm4241, %v4234, %v4100
        %v4244 = vsel %vm4241, %v4235, %v4102
        %v4245 = vsel %vm4241, %v4236, %v4104
        %v4246 = vsel %vm4241, %v4237, %v4106
        %v4247 = vsel %vm4241, %v4238, %v4108
        %v4248 = vsel %vm4241, %v4239, %v4110
        %v4249 = vsel %vm4241, %v4240, %v4112
        %v4250 = vsel %vm3607, %v4005, %v4137
        %v4251 = vsel %vm3607, %v4008, %v4139
        %v4252 = vsel %vm3607, %v4011, %v4141
        %v4253 = vsel %vm3607, %v4014, %v4143
        %v4254 = vsel %vm3607, %v4017, %v4145
        %v4255 = vsel %vm3607, %v4020, %v4147
        %v4256 = vsel %vm3607, %v4023, %v4149
        %v4257 = vsel %vm3607, %v4124, %v4151
        %v4258 = vsel %vm4232, %v4250, %v4162
        %v4259 = vsel %vm4232, %v4251, %v4164
        %v4260 = vsel %vm4232, %v4252, %v4166
        %v4261 = vsel %vm4232, %v4253, %v4168
        %v4262 = vsel %vm4232, %v4254, %v4170
        %v4263 = vsel %vm4232, %v4255, %v4172
        %v4264 = vsel %vm4232, %v4256, %v4174
        %v4265 = vsel %vm4232, %v4257, %v4176
        %v4266 = vsel %vm4241, %v4258, %v4190
        %v4267 = vsel %vm4241, %v4259, %v4192
        %v4268 = vsel %vm4241, %v4260, %v4194
        %v4269 = vsel %vm4241, %v4261, %v4196
        %v4270 = vsel %vm4241, %v4262, %v4198
        %v4271 = vsel %vm4241, %v4263, %v4200
        %v4272 = vsel %vm4241, %v4264, %v4202
        %v4273 = vsel %vm4241, %v4265, %v4204
        %v4274 = vpack.c.bf16 %v4243, %v4242
        %v4275 = vpack.c.bf16 %v4267, %v4266
        %v4276 = vpack.c.bf16 %v4059, %v4056
        %v4277 = vpack.c.bf16 %v4245, %v4244
        %v4278 = vpack.c.bf16 %v4269, %v4268
        %v4279 = vpack.c.bf16 %v4065, %v4062
        %v4280 = vpack.c.bf16 %v4247, %v4246
        %v4281 = vpack.c.bf16 %v4271, %v4270
        %v4282 = vpack.c.bf16 %v4071, %v4068
        %v4283 = vpack.c.bf16 %v4249, %v4248
        %v4284 = vpack.c.bf16 %v4273, %v4272
        %v4285 = vpack.c.bf16 %v4215, %v4135
        %v4286 = vld [vmem:[%s3] sm:$0xf]
        %v4287 = vld [vmem:[%s3 + $0x4] sm:$0xf]
        %v4288 = vld [vmem:[%s3 + $0x8] sm:$0xf]
        %v4289 = vld [vmem:[%s3 + $0xc] sm:$0xf]
        %v4290 = vld [vmem:[%s3 + $0x10] sm:$0xf]
        %v4291 = vld [vmem:[%s3 + $0x14] sm:$0xf]
        %v4292 = vld [vmem:[%s3 + $0x18] sm:$0xf]
        %v4293 = vld [vmem:[%s3 + $0x1c] sm:$0xf]
        %v4294 = vld [vmem:[%s3 + $0x20] sm:$0xf]
        %v4295 = vld [vmem:[%s3 + $0x24] sm:$0xf]
        %v4296 = vld [vmem:[%s3 + $0x28] sm:$0xf]
        %v4297 = vld [vmem:[%s3 + $0x2c] sm:$0xf]
        %v4298 = vld [vmem:[%s3 + $0x30] sm:$0xf]
        %v4299 = vld [vmem:[%s3 + $0x34] sm:$0xf]
        %v4300 = vld [vmem:[%s3 + $0x38] sm:$0xf]
        %v4301 = vld [vmem:[%s3 + $0x3c] sm:$0xf]
        %v4302 = vld [vmem:[%s3 + $0x40] sm:$0xf]
        %v4303 = vld [vmem:[%s3 + $0x44] sm:$0xf]
        %v4304 = vld [vmem:[%s3 + $0x48] sm:$0xf]
        %v4305 = vld [vmem:[%s3 + $0x4c] sm:$0xf]
        %v4306 = vld [vmem:[%s3 + $0x50] sm:$0xf]
        %v4307 = vld [vmem:[%s3 + $0x54] sm:$0xf]
        %v4308 = vld [vmem:[%s3 + $0x58] sm:$0xf]
        %v4309 = vld [vmem:[%s3 + $0x5c] sm:$0xf]
        %v4310 = vld [vmem:[%s3 + $0x60] sm:$0xf]
        %v4311 = vld [vmem:[%s3 + $0x64] sm:$0xf]
        %v4312 = vld [vmem:[%s3 + $0x68] sm:$0xf]
        %v4313 = vld [vmem:[%s3 + $0x6c] sm:$0xf]
        %v4314 = vld [vmem:[%s3 + $0x70] sm:$0xf]
        %v4315 = vld [vmem:[%s3 + $0x74] sm:$0xf]
        %v4316 = vld [vmem:[%s3 + $0x78] sm:$0xf]
        %v4317 = vld [vmem:[%s3 + $0x7c] sm:$0xf]
        %v4318 = vld [vmem:[%s3 + $0x80] sm:$0xf]
        %v4319 = vld [vmem:[%s3 + $0x84] sm:$0xf]
        %v4320 = vld [vmem:[%s3 + $0x88] sm:$0xf]
        %v4321 = vld [vmem:[%s3 + $0x8c] sm:$0xf]
        %v4322 = vld [vmem:[%s4] sm:$0x1]
        %v4324 = vlaneseq
        %v4325 = vshrl.u32 %v4324, 7
        %v4326 = vsub.s32 0, %v4325
        %v4327 = vrot.slane %v4322, %v4326
        %v4365 = vunpack.c.l.b16 %v4286
        %v4366 = vunpack.c.l.b16 %v4287
        %v4367 = vunpack.c.l.b16 %v4288
        %v4368 = vunpack.c.l.b16 %v4289
        %v4369 = vunpack.c.l.b16 %v4290
        %v4370 = vunpack.c.l.b16 %v4291
        %v4371 = vunpack.c.l.b16 %v4292
        %v4372 = vunpack.c.l.b16 %v4293
        %v4373 = vunpack.c.l.b16 %v4294
        %v4374 = vunpack.c.l.b16 %v4295
        %v4375 = vunpack.c.l.b16 %v4296
        %v4376 = vunpack.c.l.b16 %v4297
        %v4377 = vunpack.c.l.b16 %v4298
        %v4378 = vunpack.c.l.b16 %v4299
        %v4379 = vunpack.c.l.b16 %v4300
        %v4380 = vunpack.c.l.b16 %v4301
        %v4381 = vunpack.c.l.b16 %v4302
        %v4382 = vunpack.c.l.b16 %v4303
        %v4383 = vunpack.c.l.b16 %v4304
        %v4384 = vunpack.c.l.b16 %v4305
        %v4385 = vunpack.c.l.b16 %v4306
        %v4386 = vunpack.c.l.b16 %v4307
        %v4387 = vunpack.c.l.b16 %v4308
        %v4388 = vunpack.c.l.b16 %v4309
        %v4389 = vunpack.c.l.b16 %v4310
        %v4390 = vunpack.c.l.b16 %v4311
        %v4391 = vunpack.c.l.b16 %v4312
        %v4392 = vunpack.c.l.b16 %v4313
        %v4393 = vunpack.c.l.b16 %v4314
        %v4394 = vunpack.c.l.b16 %v4315
        %v4395 = vunpack.c.l.b16 %v4316
        %v4396 = vunpack.c.l.b16 %v4317
        %v4397 = vunpack.c.l.b16 %v4318
        %v4398 = vunpack.c.l.b16 %v4319
        %v4399 = vunpack.c.l.b16 %v4320
        %v4400 = vunpack.c.l.b16 %v4321
        %v4401 = vpack.c.b16 %v4366, %v4365
        %v4402 = vpack.c.b16 %v4368, %v4367
        %v4403 = vpack.c.b16 %v4370, %v4369
        %v4404 = vpack.c.b16 %v4372, %v4371
        %v4405 = vpack.c.b16 %v4374, %v4373
        %v4406 = vpack.c.b16 %v4376, %v4375
        %v4407 = vpack.c.b16 %v4378, %v4377
        %v4408 = vpack.c.b16 %v4380, %v4379
        %v4409 = vpack.c.b16 %v4382, %v4381
        %v4410 = vpack.c.b16 %v4384, %v4383
        %v4411 = vpack.c.b16 %v4386, %v4385
        %v4412 = vpack.c.b16 %v4388, %v4387
        %v4413 = vpack.c.b16 %v4390, %v4389
        %v4414 = vpack.c.b16 %v4392, %v4391
        %v4415 = vpack.c.b16 %v4394, %v4393
        %v4416 = vpack.c.b16 %v4396, %v4395
        %v4417 = vpack.c.b16 %v4398, %v4397
        %v4418 = vpack.c.b16 %v4400, %v4399
        %v4438 = vsel %vm3607, %v4276, 0
        %v4441 = vsel %vm3607, %v4279, 0
        %v4444 = vsel %vm3607, %v4282, 0
        %v4447 = vsel %vm3607, %v4285, 0
        %4449 = vmatprep.subr.bf16.mxu0 0
        %4450 = vmatpush1.bf16.msra.mxu0 %v4408
        %4451 = vmatprep.subr.bf16.mxu0 0
        %4452 = vmatpush1.bf16.msra.mxu0 %v4407
        %4453 = vmatprep.subr.bf16.mxu0 0
        %4454 = vmatpush1.bf16.msra.mxu0 %v4406
        %4455 = vmatprep.subr.bf16.mxu0 0
        %4456 = vmatpush1.bf16.msra.mxu0 %v4405
        %4457 = vmatprep.subr.bf16.mxu0 0
        %4458 = vmatpush1.bf16.msra.mxu0 %v4404
        %4459 = vmatprep.subr.bf16.mxu0 0
        %4460 = vmatpush1.bf16.msra.mxu0 %v4403
        %4461 = vmatprep.subr.bf16.mxu0 0
        %4462 = vmatpush1.bf16.msra.mxu0 %v4402
        %4463 = vmatprep.subr.bf16.mxu0 0
        %4464 = vmatpush1.bf16.msra.mxu0 %v4401
        %4465 = vmatprep.subr.bf16.mxu0 0
        %4466 = vmatpush2.bf16.msra.mxu0 %v4416
        %4467 = vmatprep.subr.bf16.mxu0 0
        %4468 = vmatpush2.bf16.msra.mxu0 %v4415
        %4469 = vmatprep.subr.bf16.mxu0 0
        %4470 = vmatpush2.bf16.msra.mxu0 %v4414
        %4471 = vmatprep.subr.bf16.mxu0 0
        %4472 = vmatpush2.bf16.msra.mxu0 %v4413
        %4473 = vmatprep.subr.bf16.mxu0 0
        %4474 = vmatpush2.bf16.msra.mxu0 %v4412
        %4475 = vmatprep.subr.bf16.mxu0 0
        %4476 = vmatpush2.bf16.msra.mxu0 %v4411
        %4477 = vmatprep.subr.bf16.mxu0 0
        %4478 = vmatpush2.bf16.msra.mxu0 %v4410
        %4479 = vmatprep.subr.bf16.mxu0 0
        %4480 = vmatpush2.bf16.msra.mxu0 %v4409
        %4481 = vmatprep.mubr.bf16.mxu0 %v4275
        %4482 = vmatmul.mubr.bf16.gmra.mxu0 %v4274
        %v4483 = vpop.f32.mrf.mxu0
        %v4484 = vadd.f32 %v4327, %v4483
        %v4485 = vpop.f32.mrf.mxu0
        %v4486 = vpop.f32.mrf.mxu0
        %v4487 = vadd.f32 %v4327, %v4486
        %v4488 = vpop.f32.mrf.mxu0
        %4489 = vmatprep.mubr.bf16.mxu0 %v4278
        %4490 = vmatmul.mubr.bf16.gmra.mxu0 %v4277
        %v4491 = vpop.f32.mrf.mxu0
        %v4492 = vadd.f32 %v4327, %v4491
        %v4493 = vpop.f32.mrf.mxu0
        %v4494 = vpop.f32.mrf.mxu0
        %v4495 = vadd.f32 %v4327, %v4494
        %v4496 = vpop.f32.mrf.mxu0
        %4497 = vmatprep.mubr.bf16.mxu0 %v4281
        %4498 = vmatmul.mubr.bf16.gmra.mxu0 %v4280
        %v4499 = vpop.f32.mrf.mxu0
        %v4500 = vadd.f32 %v4327, %v4499
        %v4501 = vpop.f32.mrf.mxu0
        %v4502 = vpop.f32.mrf.mxu0
        %v4503 = vadd.f32 %v4327, %v4502
        %v4504 = vpop.f32.mrf.mxu0
        %4505 = vmatprep.mubr.bf16.mxu0 %v4284
        %4506 = vmatmul.mubr.bf16.gmra.mxu0 %v4283
        %v4507 = vpop.f32.mrf.mxu0
        %v4508 = vadd.f32 %v4327, %v4507
        %v4509 = vpop.f32.mrf.mxu0
        %v4510 = vpop.f32.mrf.mxu0
        %v4511 = vadd.f32 %v4327, %v4510
        %v4512 = vpop.f32.mrf.mxu0
        %4513 = vdwg.mxu0
        %4514 = vmatprep.subr.bf16.mxu0 0
        %4515 = vmatpush1.bf16.msra.mxu0 0
        %4516 = vmatprep.subr.bf16.mxu0 0
        %4517 = vmatpush1.bf16.msra.mxu0 0
        %4518 = vmatprep.subr.bf16.mxu0 0
        %4519 = vmatpush1.bf16.msra.mxu0 0
        %4520 = vmatprep.subr.bf16.mxu0 0
        %4521 = vmatpush1.bf16.msra.mxu0 0
        %4522 = vmatprep.subr.bf16.mxu0 0
        %4523 = vmatpush1.bf16.msra.mxu0 0
        %4524 = vmatprep.subr.bf16.mxu0 0
        %4525 = vmatpush1.bf16.msra.mxu0 0
        %4526 = vmatprep.subr.bf16.mxu0 0
        %4527 = vmatpush1.bf16.msra.mxu0 %v4418
        %4528 = vmatprep.subr.bf16.mxu0 0
        %4529 = vmatpush1.bf16.msra.mxu0 %v4417
        %4530 = vmatprep.subr.bf16.mxu0 0
        %4531 = vmatpush2.bf16.msra.mxu0 0
        %4532 = vmatprep.subr.bf16.mxu0 0
        %4533 = vmatpush2.bf16.msra.mxu0 0
        %4534 = vmatprep.subr.bf16.mxu0 0
        %4535 = vmatpush2.bf16.msra.mxu0 0
        %4536 = vmatprep.subr.bf16.mxu0 0
        %4537 = vmatpush2.bf16.msra.mxu0 0
        %4538 = vmatprep.subr.bf16.mxu0 0
        %4539 = vmatpush2.bf16.msra.mxu0 0
        %4540 = vmatprep.subr.bf16.mxu0 0
        %4541 = vmatpush2.bf16.msra.mxu0 0
        %4542 = vmatprep.subr.bf16.mxu0 0
        %4543 = vmatpush2.bf16.msra.mxu0 0
        %4544 = vmatprep.subr.bf16.mxu0 0
        %4545 = vmatpush2.bf16.msra.mxu0 0
        %4546 = vmatprep.mubr.bf16.mxu0 0
        %4547 = vmatmul.mubr.bf16.gmra.mxu0 %v4438
        %v4548 = vpop.f32.mrf.mxu0
        %v4549 = vadd.f32 %v4484, %v4548
        %v4550 = vpop.f32.mrf.mxu0
        %v4551 = vpop.f32.mrf.mxu0
        %v4552 = vadd.f32 %v4487, %v4551
        %v4553 = vpop.f32.mrf.mxu0
        %4554 = vmatprep.mubr.bf16.mxu0 0
        %4555 = vmatmul.mubr.bf16.gmra.mxu0 %v4441
        %v4556 = vpop.f32.mrf.mxu0
        %v4557 = vadd.f32 %v4492, %v4556
        %v4558 = vpop.f32.mrf.mxu0
        %v4559 = vpop.f32.mrf.mxu0
        %v4560 = vadd.f32 %v4495, %v4559
        %v4561 = vpop.f32.mrf.mxu0
        %4562 = vmatprep.mubr.bf16.mxu0 0
        %4563 = vmatmul.mubr.bf16.gmra.mxu0 %v4444
        %v4564 = vpop.f32.mrf.mxu0
        %v4565 = vadd.f32 %v4500, %v4564
        %v4566 = vpop.f32.mrf.mxu0
        %v4567 = vpop.f32.mrf.mxu0
        %v4568 = vadd.f32 %v4503, %v4567
        %v4569 = vpop.f32.mrf.mxu0
        %4570 = vmatprep.mubr.bf16.mxu0 0
        %4571 = vmatmul.mubr.bf16.gmra.mxu0 %v4447
        %v4572 = vpop.f32.mrf.mxu0
        %v4573 = vadd.f32 %v4508, %v4572
        %v4574 = vpop.f32.mrf.mxu0
        %v4575 = vpop.f32.mrf.mxu0
        %v4576 = vadd.f32 %v4511, %v4575
        %v4577 = vpop.f32.mrf.mxu0
        %4578 = vdwg.mxu0
        %v4579 = vmax.f32 %v4549, 0.0
        %v4580 = vmax.f32 %v4552, 0.0
        %v4581 = vmax.f32 %v4557, 0.0
        %v4582 = vmax.f32 %v4560, 0.0
        %v4583 = vmax.f32 %v4565, 0.0
        %v4584 = vmax.f32 %v4568, 0.0
        %v4585 = vmax.f32 %v4573, 0.0
        %v4586 = vmax.f32 %v4576, 0.0
        %v4595 = vcombine.high %v4579, %v4579
        %v4597 = vunpack.c.l.s4 1983009808
        %v4598 = vunpack.c.0.s8 %v4597
        %v4599 = vlaneseq
        %v4600 = vshrl.u32 %v4599, 7
        %v4601 = vsub.s32 %v4598, %v4600
        %v4602 = vrot.slane %v4579, %v4601
        %v4604 = vunpack.c.l.s4 1983009808
        %v4605 = vunpack.c.0.s8 %v4604
        %v4606 = vlaneseq
        %v4607 = vshrl.u32 %v4606, 7
        %v4608 = vsub.s32 %v4605, %v4607
        %v4609 = vrot.slane %v4595, %v4608
        %v4610 = vcombine.high %v4602, %v4602
        %v4611 = vcombine.high %v4609, %v4609
        %v4612 = vcombine.high %v4580, %v4580
        %v4614 = vunpack.c.l.s4 1983009808
        %v4615 = vunpack.c.0.s8 %v4614
        %v4616 = vlaneseq
        %v4617 = vshrl.u32 %v4616, 7
        %v4618 = vsub.s32 %v4615, %v4617
        %v4619 = vrot.slane %v4580, %v4618
        %v4621 = vunpack.c.l.s4 1983009808
        %v4622 = vunpack.c.0.s8 %v4621
        %v4623 = vlaneseq
        %v4624 = vshrl.u32 %v4623, 7
        %v4625 = vsub.s32 %v4622, %v4624
        %v4626 = vrot.slane %v4612, %v4625
        %v4627 = vcombine.high %v4619, %v4619
        %v4628 = vcombine.high %v4626, %v4626
        %v4629 = vcombine.high %v4581, %v4581
        %v4631 = vunpack.c.l.s4 1983009808
        %v4632 = vunpack.c.0.s8 %v4631
        %v4633 = vlaneseq
        %v4634 = vshrl.u32 %v4633, 7
        %v4635 = vsub.s32 %v4632, %v4634
        %v4636 = vrot.slane %v4581, %v4635
        %v4638 = vunpack.c.l.s4 1983009808
        %v4639 = vunpack.c.0.s8 %v4638
        %v4640 = vlaneseq
        %v4641 = vshrl.u32 %v4640, 7
        %v4642 = vsub.s32 %v4639, %v4641
        %v4643 = vrot.slane %v4629, %v4642
        %v4644 = vcombine.high %v4636, %v4636
        %v4645 = vcombine.high %v4643, %v4643
        %v4646 = vcombine.high %v4582, %v4582
        %v4648 = vunpack.c.l.s4 1983009808
        %v4649 = vunpack.c.0.s8 %v4648
        %v4650 = vlaneseq
        %v4651 = vshrl.u32 %v4650, 7
        %v4652 = vsub.s32 %v4649, %v4651
        %v4653 = vrot.slane %v4582, %v4652
        %v4655 = vunpack.c.l.s4 1983009808
        %v4656 = vunpack.c.0.s8 %v4655
        %v4657 = vlaneseq
        %v4658 = vshrl.u32 %v4657, 7
        %v4659 = vsub.s32 %v4656, %v4658
        %v4660 = vrot.slane %v4646, %v4659
        %v4661 = vcombine.high %v4653, %v4653
        %v4662 = vcombine.high %v4660, %v4660
        %v4663 = vcombine.high %v4583, %v4583
        %v4665 = vunpack.c.l.s4 1983009808
        %v4666 = vunpack.c.0.s8 %v4665
        %v4667 = vlaneseq
        %v4668 = vshrl.u32 %v4667, 7
        %v4669 = vsub.s32 %v4666, %v4668
        %v4670 = vrot.slane %v4583, %v4669
        %v4672 = vunpack.c.l.s4 1983009808
        %v4673 = vunpack.c.0.s8 %v4672
        %v4674 = vlaneseq
        %v4675 = vshrl.u32 %v4674, 7
        %v4676 = vsub.s32 %v4673, %v4675
        %v4677 = vrot.slane %v4663, %v4676
        %v4678 = vcombine.high %v4670, %v4670
        %v4679 = vcombine.high %v4677, %v4677
        %v4680 = vcombine.high %v4584, %v4584
        %v4682 = vunpack.c.l.s4 1983009808
        %v4683 = vunpack.c.0.s8 %v4682
        %v4684 = vlaneseq
        %v4685 = vshrl.u32 %v4684, 7
        %v4686 = vsub.s32 %v4683, %v4685
        %v4687 = vrot.slane %v4584, %v4686
        %v4689 = vunpack.c.l.s4 1983009808
        %v4690 = vunpack.c.0.s8 %v4689
        %v4691 = vlaneseq
        %v4692 = vshrl.u32 %v4691, 7
        %v4693 = vsub.s32 %v4690, %v4692
        %v4694 = vrot.slane %v4680, %v4693
        %v4695 = vcombine.high %v4687, %v4687
        %v4696 = vcombine.high %v4694, %v4694
        %v4697 = vcombine.high %v4585, %v4585
        %v4699 = vunpack.c.l.s4 1983009808
        %v4700 = vunpack.c.0.s8 %v4699
        %v4701 = vlaneseq
        %v4702 = vshrl.u32 %v4701, 7
        %v4703 = vsub.s32 %v4700, %v4702
        %v4704 = vrot.slane %v4585, %v4703
        %v4706 = vunpack.c.l.s4 1983009808
        %v4707 = vunpack.c.0.s8 %v4706
        %v4708 = vlaneseq
        %v4709 = vshrl.u32 %v4708, 7
        %v4710 = vsub.s32 %v4707, %v4709
        %v4711 = vrot.slane %v4697, %v4710
        %v4712 = vcombine.high %v4704, %v4704
        %v4713 = vcombine.high %v4711, %v4711
        %v4714 = vcombine.high %v4586, %v4586
        %v4716 = vunpack.c.l.s4 1983009808
        %v4717 = vunpack.c.0.s8 %v4716
        %v4718 = vlaneseq
        %v4719 = vshrl.u32 %v4718, 7
        %v4720 = vsub.s32 %v4717, %v4719
        %v4721 = vrot.slane %v4586, %v4720
        %v4723 = vunpack.c.l.s4 1983009808
        %v4724 = vunpack.c.0.s8 %v4723
        %v4725 = vlaneseq
        %v4726 = vshrl.u32 %v4725, 7
        %v4727 = vsub.s32 %v4724, %v4726
        %v4728 = vrot.slane %v4714, %v4727
        %v4729 = vcombine.high %v4721, %v4721
        %v4730 = vcombine.high %v4728, %v4728
        %vm4763 = vcmask 517120
        %v4764 = vsel %vm4763, %v4602, -inf
        %v4765 = vrot.slane %v4764, 4
        %v4766 = vmax.f32 %v4764, %v4765
        %v4767 = vrot.slane %v4766, 2
        %v4768 = vmax.f32 %v4766, %v4767
        %v4769 = vrot.slane %v4768, 1
        %v4770 = vmax.f32 %v4768, %v4769
        %v4771 = vsel %vm4763, %v4610, -inf
        %v4772 = vrot.slane %v4771, 4
        %v4773 = vmax.f32 %v4771, %v4772
        %v4774 = vrot.slane %v4773, 2
        %v4775 = vmax.f32 %v4773, %v4774
        %v4776 = vrot.slane %v4775, 1
        %v4777 = vmax.f32 %v4775, %v4776
        %v4778 = vsel %vm4763, %v4609, -inf
        %v4779 = vrot.slane %v4778, 4
        %v4780 = vmax.f32 %v4778, %v4779
        %v4781 = vrot.slane %v4780, 2
        %v4782 = vmax.f32 %v4780, %v4781
        %v4783 = vrot.slane %v4782, 1
        %v4784 = vmax.f32 %v4782, %v4783
        %v4785 = vsel %vm4763, %v4611, -inf
        %v4786 = vrot.slane %v4785, 4
        %v4787 = vmax.f32 %v4785, %v4786
        %v4788 = vrot.slane %v4787, 2
        %v4789 = vmax.f32 %v4787, %v4788
        %v4790 = vrot.slane %v4789, 1
        %v4791 = vmax.f32 %v4789, %v4790
        %v4792 = vsel %vm4763, %v4619, -inf
        %v4793 = vrot.slane %v4792, 4
        %v4794 = vmax.f32 %v4792, %v4793
        %v4795 = vrot.slane %v4794, 2
        %v4796 = vmax.f32 %v4794, %v4795
        %v4797 = vrot.slane %v4796, 1
        %v4798 = vmax.f32 %v4796, %v4797
        %v4799 = vsel %vm4763, %v4627, -inf
        %v4800 = vrot.slane %v4799, 4
        %v4801 = vmax.f32 %v4799, %v4800
        %v4802 = vrot.slane %v4801, 2
        %v4803 = vmax.f32 %v4801, %v4802
        %v4804 = vrot.slane %v4803, 1
        %v4805 = vmax.f32 %v4803, %v4804
        %v4806 = vsel %vm4763, %v4626, -inf
        %v4807 = vrot.slane %v4806, 4
        %v4808 = vmax.f32 %v4806, %v4807
        %v4809 = vrot.slane %v4808, 2
        %v4810 = vmax.f32 %v4808, %v4809
        %v4811 = vrot.slane %v4810, 1
        %v4812 = vmax.f32 %v4810, %v4811
        %v4813 = vsel %vm4763, %v4628, -inf
        %v4814 = vrot.slane %v4813, 4
        %v4815 = vmax.f32 %v4813, %v4814
        %v4816 = vrot.slane %v4815, 2
        %v4817 = vmax.f32 %v4815, %v4816
        %v4818 = vrot.slane %v4817, 1
        %v4819 = vmax.f32 %v4817, %v4818
        %v4820 = vsel %vm4763, %v4636, -inf
        %v4821 = vrot.slane %v4820, 4
        %v4822 = vmax.f32 %v4820, %v4821
        %v4823 = vrot.slane %v4822, 2
        %v4824 = vmax.f32 %v4822, %v4823
        %v4825 = vrot.slane %v4824, 1
        %v4826 = vmax.f32 %v4824, %v4825
        %v4827 = vsel %vm4763, %v4644, -inf
        %v4828 = vrot.slane %v4827, 4
        %v4829 = vmax.f32 %v4827, %v4828
        %v4830 = vrot.slane %v4829, 2
        %v4831 = vmax.f32 %v4829, %v4830
        %v4832 = vrot.slane %v4831, 1
        %v4833 = vmax.f32 %v4831, %v4832
        %v4834 = vsel %vm4763, %v4643, -inf
        %v4835 = vrot.slane %v4834, 4
        %v4836 = vmax.f32 %v4834, %v4835
        %v4837 = vrot.slane %v4836, 2
        %v4838 = vmax.f32 %v4836, %v4837
        %v4839 = vrot.slane %v4838, 1
        %v4840 = vmax.f32 %v4838, %v4839
        %v4841 = vsel %vm4763, %v4645, -inf
        %v4842 = vrot.slane %v4841, 4
        %v4843 = vmax.f32 %v4841, %v4842
        %v4844 = vrot.slane %v4843, 2
        %v4845 = vmax.f32 %v4843, %v4844
        %v4846 = vrot.slane %v4845, 1
        %v4847 = vmax.f32 %v4845, %v4846
        %v4848 = vsel %vm4763, %v4653, -inf
        %v4849 = vrot.slane %v4848, 4
        %v4850 = vmax.f32 %v4848, %v4849
        %v4851 = vrot.slane %v4850, 2
        %v4852 = vmax.f32 %v4850, %v4851
        %v4853 = vrot.slane %v4852, 1
        %v4854 = vmax.f32 %v4852, %v4853
        %v4855 = vsel %vm4763, %v4661, -inf
        %v4856 = vrot.slane %v4855, 4
        %v4857 = vmax.f32 %v4855, %v4856
        %v4858 = vrot.slane %v4857, 2
        %v4859 = vmax.f32 %v4857, %v4858
        %v4860 = vrot.slane %v4859, 1
        %v4861 = vmax.f32 %v4859, %v4860
        %v4862 = vsel %vm4763, %v4660, -inf
        %v4863 = vrot.slane %v4862, 4
        %v4864 = vmax.f32 %v4862, %v4863
        %v4865 = vrot.slane %v4864, 2
        %v4866 = vmax.f32 %v4864, %v4865
        %v4867 = vrot.slane %v4866, 1
        %v4868 = vmax.f32 %v4866, %v4867
        %v4869 = vsel %vm4763, %v4662, -inf
        %v4870 = vrot.slane %v4869, 4
        %v4871 = vmax.f32 %v4869, %v4870
        %v4872 = vrot.slane %v4871, 2
        %v4873 = vmax.f32 %v4871, %v4872
        %v4874 = vrot.slane %v4873, 1
        %v4875 = vmax.f32 %v4873, %v4874
        %v4876 = vsel %vm4763, %v4670, -inf
        %v4877 = vrot.slane %v4876, 4
        %v4878 = vmax.f32 %v4876, %v4877
        %v4879 = vrot.slane %v4878, 2
        %v4880 = vmax.f32 %v4878, %v4879
        %v4881 = vrot.slane %v4880, 1
        %v4882 = vmax.f32 %v4880, %v4881
        %v4883 = vsel %vm4763, %v4678, -inf
        %v4884 = vrot.slane %v4883, 4
        %v4885 = vmax.f32 %v4883, %v4884
        %v4886 = vrot.slane %v4885, 2
        %v4887 = vmax.f32 %v4885, %v4886
        %v4888 = vrot.slane %v4887, 1
        %v4889 = vmax.f32 %v4887, %v4888
        %v4890 = vsel %vm4763, %v4677, -inf
        %v4891 = vrot.slane %v4890, 4
        %v4892 = vmax.f32 %v4890, %v4891
        %v4893 = vrot.slane %v4892, 2
        %v4894 = vmax.f32 %v4892, %v4893
        %v4895 = vrot.slane %v4894, 1
        %v4896 = vmax.f32 %v4894, %v4895
        %v4897 = vsel %vm4763, %v4679, -inf
        %v4898 = vrot.slane %v4897, 4
        %v4899 = vmax.f32 %v4897, %v4898
        %v4900 = vrot.slane %v4899, 2
        %v4901 = vmax.f32 %v4899, %v4900
        %v4902 = vrot.slane %v4901, 1
        %v4903 = vmax.f32 %v4901, %v4902
        %v4904 = vsel %vm4763, %v4687, -inf
        %v4905 = vrot.slane %v4904, 4
        %v4906 = vmax.f32 %v4904, %v4905
        %v4907 = vrot.slane %v4906, 2
        %v4908 = vmax.f32 %v4906, %v4907
        %v4909 = vrot.slane %v4908, 1
        %v4910 = vmax.f32 %v4908, %v4909
        %v4911 = vsel %vm4763, %v4695, -inf
        %v4912 = vrot.slane %v4911, 4
        %v4913 = vmax.f32 %v4911, %v4912
        %v4914 = vrot.slane %v4913, 2
        %v4915 = vmax.f32 %v4913, %v4914
        %v4916 = vrot.slane %v4915, 1
        %v4917 = vmax.f32 %v4915, %v4916
        %v4918 = vsel %vm4763, %v4694, -inf
        %v4919 = vrot.slane %v4918, 4
        %v4920 = vmax.f32 %v4918, %v4919
        %v4921 = vrot.slane %v4920, 2
        %v4922 = vmax.f32 %v4920, %v4921
        %v4923 = vrot.slane %v4922, 1
        %v4924 = vmax.f32 %v4922, %v4923
        %v4925 = vsel %vm4763, %v4696, -inf
        %v4926 = vrot.slane %v4925, 4
        %v4927 = vmax.f32 %v4925, %v4926
        %v4928 = vrot.slane %v4927, 2
        %v4929 = vmax.f32 %v4927, %v4928
        %v4930 = vrot.slane %v4929, 1
        %v4931 = vmax.f32 %v4929, %v4930
        %v4932 = vsel %vm4763, %v4704, -inf
        %v4933 = vrot.slane %v4932, 4
        %v4934 = vmax.f32 %v4932, %v4933
        %v4935 = vrot.slane %v4934, 2
        %v4936 = vmax.f32 %v4934, %v4935
        %v4937 = vrot.slane %v4936, 1
        %v4938 = vmax.f32 %v4936, %v4937
        %v4939 = vsel %vm4763, %v4712, -inf
        %v4940 = vrot.slane %v4939, 4
        %v4941 = vmax.f32 %v4939, %v4940
        %v4942 = vrot.slane %v4941, 2
        %v4943 = vmax.f32 %v4941, %v4942
        %v4944 = vrot.slane %v4943, 1
        %v4945 = vmax.f32 %v4943, %v4944
        %v4946 = vsel %vm4763, %v4711, -inf
        %v4947 = vrot.slane %v4946, 4
        %v4948 = vmax.f32 %v4946, %v4947
        %v4949 = vrot.slane %v4948, 2
        %v4950 = vmax.f32 %v4948, %v4949
        %v4951 = vrot.slane %v4950, 1
        %v4952 = vmax.f32 %v4950, %v4951
        %v4953 = vsel %vm4763, %v4713, -inf
        %v4954 = vrot.slane %v4953, 4
        %v4955 = vmax.f32 %v4953, %v4954
        %v4956 = vrot.slane %v4955, 2
        %v4957 = vmax.f32 %v4955, %v4956
        %v4958 = vrot.slane %v4957, 1
        %v4959 = vmax.f32 %v4957, %v4958
        %v4960 = vsel %vm4763, %v4721, -inf
        %v4961 = vrot.slane %v4960, 4
        %v4962 = vmax.f32 %v4960, %v4961
        %v4963 = vrot.slane %v4962, 2
        %v4964 = vmax.f32 %v4962, %v4963
        %v4965 = vrot.slane %v4964, 1
        %v4966 = vmax.f32 %v4964, %v4965
        %v4967 = vsel %vm4763, %v4729, -inf
        %v4968 = vrot.slane %v4967, 4
        %v4969 = vmax.f32 %v4967, %v4968
        %v4970 = vrot.slane %v4969, 2
        %v4971 = vmax.f32 %v4969, %v4970
        %v4972 = vrot.slane %v4971, 1
        %v4973 = vmax.f32 %v4971, %v4972
        %v4974 = vsel %vm4763, %v4728, -inf
        %v4975 = vrot.slane %v4974, 4
        %v4976 = vmax.f32 %v4974, %v4975
        %v4977 = vrot.slane %v4976, 2
        %v4978 = vmax.f32 %v4976, %v4977
        %v4979 = vrot.slane %v4978, 1
        %v4980 = vmax.f32 %v4978, %v4979
        %v4981 = vsel %vm4763, %v4730, -inf
        %v4982 = vrot.slane %v4981, 4
        %v4983 = vmax.f32 %v4981, %v4982
        %v4984 = vrot.slane %v4983, 2
        %v4985 = vmax.f32 %v4983, %v4984
        %v4986 = vrot.slane %v4985, 1
        %v4987 = vmax.f32 %v4985, %v4986
        %v4988 = vsel %vm4232, %v4770, -inf
        %v4989 = vsel %vm4232, %v4798, -inf
        %v4990 = vmax.f32 %v4988, %v4989
        %v4991 = vsel %vm4232, %v4777, -inf
        %v4992 = vsel %vm4232, %v4805, -inf
        %v4993 = vmax.f32 %v4991, %v4992
        %v4994 = vsel %vm4232, %v4784, -inf
        %v4995 = vsel %vm4232, %v4812, -inf
        %v4996 = vmax.f32 %v4994, %v4995
        %v4997 = vsel %vm4232, %v4791, -inf
        %v4998 = vsel %vm4232, %v4819, -inf
        %v4999 = vmax.f32 %v4997, %v4998
        %v5000 = vsel %vm4232, %v4826, -inf
        %v5001 = vsel %vm4232, %v4854, -inf
        %v5002 = vmax.f32 %v5000, %v5001
        %v5003 = vsel %vm4232, %v4833, -inf
        %v5004 = vsel %vm4232, %v4861, -inf
        %v5005 = vmax.f32 %v5003, %v5004
        %v5006 = vsel %vm4232, %v4840, -inf
        %v5007 = vsel %vm4232, %v4868, -inf
        %v5008 = vmax.f32 %v5006, %v5007
        %v5009 = vsel %vm4232, %v4847, -inf
        %v5010 = vsel %vm4232, %v4875, -inf
        %v5011 = vmax.f32 %v5009, %v5010
        %v5012 = vsel %vm4232, %v4882, -inf
        %v5013 = vsel %vm4232, %v4910, -inf
        %v5014 = vmax.f32 %v5012, %v5013
        %v5015 = vsel %vm4232, %v4889, -inf
        %v5016 = vsel %vm4232, %v4917, -inf
        %v5017 = vmax.f32 %v5015, %v5016
        %v5018 = vsel %vm4232, %v4896, -inf
        %v5019 = vsel %vm4232, %v4924, -inf
        %v5020 = vmax.f32 %v5018, %v5019
        %v5021 = vsel %vm4232, %v4903, -inf
        %v5022 = vsel %vm4232, %v4931, -inf
        %v5023 = vmax.f32 %v5021, %v5022
        %v5024 = vsel %vm4232, %v4938, -inf
        %v5025 = vsel %vm4232, %v4966, -inf
        %v5026 = vmax.f32 %v5024, %v5025
        %v5027 = vsel %vm4232, %v4945, -inf
        %v5028 = vsel %vm4232, %v4973, -inf
        %v5029 = vmax.f32 %v5027, %v5028
        %v5030 = vsel %vm4232, %v4952, -inf
        %v5031 = vsel %vm4232, %v4980, -inf
        %v5032 = vmax.f32 %v5030, %v5031
        %v5033 = vsel %vm4232, %v4959, -inf
        %v5034 = vsel %vm4232, %v4987, -inf
        %v5035 = vmax.f32 %v5033, %v5034
        %vm5036 = vcmask 521216
        %5037 = vst.msk [vmem:[#allocation4] sm:$0x3f] %vm5036, 0.0
        %5038 = vst.msk [vmem:[#allocation4 + $0x8] sm:$0x3f] %vm5036, 0.0
        %5039 = vst.msk [vmem:[#allocation4 + $0x10] sm:$0x3f] %vm5036, 0.0
        %5040 = vst.msk [vmem:[#allocation4 + $0x18] sm:$0x3f] %vm5036, 0.0
        %5041 = vst.msk [vmem:[#allocation4 + $0x20] sm:$0x3f] %vm5036, 0.0
        %5042 = vst.msk [vmem:[#allocation4 + $0x28] sm:$0x3f] %vm5036, 0.0
        %v5059 = vsel %vm3884, %v4993, %v4990
        %v5060 = vsel %vm3886, %v4996, %v5059
        %v5061 = vsel %vm3888, %v4999, %v5060
        %v5062 = vsel %vm3884, %v5005, %v5002
        %v5063 = vsel %vm3886, %v5008, %v5062
        %v5064 = vsel %vm3888, %v5011, %v5063
        %v5065 = vsel %vm3884, %v5017, %v5014
        %v5066 = vsel %vm3886, %v5020, %v5065
        %v5067 = vsel %vm3888, %v5023, %v5066
        %v5068 = vsel %vm3884, %v5029, %v5026
        %v5069 = vsel %vm3886, %v5032, %v5068
        %v5070 = vsel %vm3888, %v5035, %v5069
        %s5075 = scalar_lea.vmem [#allocation4], 8
        %vm5076 = vcmask 519168
        %5077 = vst.msk [vmem:[%s5075 + $0x1] sm:$0xf] %vm5076, %v5061
        %5078 = vst.msk [vmem:[%s5075 + $0x9] sm:$0xf] %vm5076, %v5064
        %5079 = vst.msk [vmem:[%s5075 + $0x11] sm:$0xf] %vm5076, %v5067
        %5080 = vst.msk [vmem:[%s5075 + $0x19] sm:$0xf] %vm5076, %v5070
        %v5081 = vld [vmem:[#allocation4] sm:$0x3f]
        %v5082 = vld [vmem:[#allocation4 + $0x8] sm:$0x3f]
        %v5083 = vld [vmem:[#allocation4 + $0x10] sm:$0x3f]
        %v5084 = vld [vmem:[#allocation4 + $0x18] sm:$0x3f]
        %v5085 = vld [vmem:[#allocation4 + $0x20] sm:$0x3f]
        %v5086 = vld [vmem:[#allocation4 + $0x28] sm:$0x3f]
        %v5091 = vrot.slane %v5081, 1
        %v5092 = vrot.slane %v5082, 1
        %v5093 = vrot.slane %v5083, 1
        %v5094 = vrot.slane %v5084, 1
        %5095 = vrot.lane.b32.xlu0 %v5091, 64
        %v5096 = vpop.permute.xlu0 %5095
        %5097 = vrot.lane.b32.xlu0 %v5092, 64
        %v5098 = vpop.permute.xlu0 %5097
        %5099 = vrot.lane.b32.xlu0 %v5093, 64
        %v5100 = vpop.permute.xlu0 %5099
        %5101 = vrot.lane.b32.xlu0 %v5094, 64
        %v5102 = vpop.permute.xlu0 %5101
        %v5107 = vrot.slane %v5081, 2
        %v5108 = vrot.slane %v5082, 2
        %v5109 = vrot.slane %v5083, 2
        %v5110 = vrot.slane %v5084, 2
        %5116 = vrot.lane.b32.xlu0 %v5082, 64
        %v5117 = vpop.permute.xlu0 %5116
        %5118 = vrot.lane.b32.xlu0 %v5083, 64
        %v5119 = vpop.permute.xlu0 %5118
        %5120 = vrot.lane.b32.xlu0 %v5084, 64
        %v5121 = vpop.permute.xlu0 %5120
        %5122 = vrot.lane.b32.xlu0 %v5085, 64
        %v5123 = vpop.permute.xlu0 %5122
        %v5128 = vrot.slane %v5085, 1
        %v5133 = vrot.slane %v5085, 2
        %5134 = vrot.lane.b32.xlu0 %v5108, 64
        %v5135 = vpop.permute.xlu0 %5134
        %5136 = vrot.lane.b32.xlu0 %v5109, 64
        %v5137 = vpop.permute.xlu0 %5136
        %5138 = vrot.lane.b32.xlu0 %v5110, 64
        %v5139 = vpop.permute.xlu0 %5138
        %5140 = vrot.lane.b32.xlu0 %v5133, 64
        %v5141 = vpop.permute.xlu0 %5140
        %v5147 = vrot.slane %v5086, 1
        %5148 = vrot.lane.b32.xlu0 %v5128, 64
        %v5149 = vpop.permute.xlu0 %5148
        %5150 = vrot.lane.b32.xlu0 %v5147, 64
        %v5151 = vpop.permute.xlu0 %5150
        %v5154 = vrot.slane %v5086, 2
        %v5155 = vsel %vm4232, %v5081, %v5096
        %v5156 = vsel %vm4232, %v5082, %v5098
        %v5157 = vsel %vm4232, %v5083, %v5100
        %v5158 = vsel %vm4232, %v5084, %v5102
        %v5159 = vsel %vm4232, %v5107, %v5117
        %v5160 = vsel %vm4232, %v5108, %v5119
        %v5161 = vsel %vm4232, %v5109, %v5121
        %v5162 = vsel %vm4232, %v5110, %v5123
        %v5163 = vsel %vm4232, %v5092, %v5135
        %v5164 = vsel %vm4232, %v5093, %v5137
        %v5165 = vsel %vm4232, %v5094, %v5139
        %v5166 = vsel %vm4232, %v5128, %v5141
        %v5167 = vsel %vm4232, %v5085, %v5149
        %v5168 = vsel %vm4232, %v5086, %v5151
        %v5183 = vcombine.low %v5155, %v5159
        %v5184 = vcombine.low %v5163, %v5157
        %v5185 = vcombine.low %v5156, %v5160
        %v5186 = vcombine.low %v5164, %v5158
        %v5187 = vcombine.low %v5157, %v5161
        %v5188 = vcombine.low %v5165, %v5167
        %v5189 = vcombine.low %v5158, %v5162
        %v5190 = vcombine.low %v5166, %v5168
        %v5191 = vcombine.low %v5183, %v5185
        %v5192 = vcombine.high %v5183, %v5185
        %v5193 = vcombine.low %v5184, %v5186
        %v5194 = vcombine.high %v5184, %v5186
        %v5195 = vcombine.low %v5109, %v5110
        %v5196 = vcombine.low %v5187, %v5189
        %v5197 = vcombine.high %v5187, %v5189
        %v5198 = vcombine.low %v5188, %v5190
        %v5199 = vcombine.high %v5188, %v5190
        %v5200 = vcombine.low %v5133, %v5154
        %v5211 = vpack.c.bf16 %v5196, %v5191
        %v5212 = vpack.c.bf16 %v5197, %v5192
        %v5213 = vpack.c.bf16 %v5198, %v5193
        %v5214 = vpack.c.bf16 %v5199, %v5194
        %v5215 = vpack.c.bf16 %v5200, %v5195
        %v5216 = vld [vmem:[%s5] sm:$0xf]
        %v5217 = vld [vmem:[%s5 + $0x4] sm:$0xf]
        %v5218 = vld [vmem:[%s5 + $0x8] sm:$0xf]
        %v5219 = vld [vmem:[%s5 + $0xc] sm:$0xf]
        %v5220 = vld [vmem:[%s5 + $0x10] sm:$0xf]
        %v5221 = vld [vmem:[%s5 + $0x14] sm:$0xf]
        %v5222 = vld [vmem:[%s5 + $0x18] sm:$0xf]
        %v5223 = vld [vmem:[%s5 + $0x1c] sm:$0xf]
        %v5224 = vld [vmem:[%s5 + $0x20] sm:$0xf]
        %v5225 = vld [vmem:[%s5 + $0x24] sm:$0xf]
        %v5226 = vld [vmem:[%s5 + $0x28] sm:$0xf]
        %v5227 = vld [vmem:[%s5 + $0x2c] sm:$0xf]
        %v5228 = vld [vmem:[%s5 + $0x30] sm:$0xf]
        %v5229 = vld [vmem:[%s5 + $0x34] sm:$0xf]
        %v5230 = vld [vmem:[%s5 + $0x38] sm:$0xf]
        %v5231 = vld [vmem:[%s5 + $0x3c] sm:$0xf]
        %v5232 = vld [vmem:[%s5 + $0x40] sm:$0xf]
        %v5233 = vld [vmem:[%s5 + $0x44] sm:$0xf]
        %v5234 = vld [vmem:[%s5 + $0x48] sm:$0xf]
        %v5235 = vld [vmem:[%s5 + $0x4c] sm:$0xf]
        %v5236 = vld [vmem:[%s5 + $0x50] sm:$0xf]
        %v5237 = vld [vmem:[%s5 + $0x54] sm:$0xf]
        %v5238 = vld [vmem:[%s5 + $0x58] sm:$0xf]
        %v5239 = vld [vmem:[%s5 + $0x5c] sm:$0xf]
        %v5240 = vld [vmem:[%s5 + $0x60] sm:$0xf]
        %v5241 = vld [vmem:[%s5 + $0x64] sm:$0xf]
        %v5242 = vld [vmem:[%s5 + $0x68] sm:$0xf]
        %v5243 = vld [vmem:[%s5 + $0x6c] sm:$0xf]
        %v5244 = vld [vmem:[%s5 + $0x70] sm:$0xf]
        %v5245 = vld [vmem:[%s5 + $0x74] sm:$0xf]
        %v5246 = vld [vmem:[%s5 + $0x78] sm:$0xf]
        %v5247 = vld [vmem:[%s5 + $0x7c] sm:$0xf]
        %v5248 = vld [vmem:[%s5 + $0x80] sm:$0xf]
        %v5249 = vld [vmem:[%s5 + $0x84] sm:$0xf]
        %v5250 = vld [vmem:[%s5 + $0x88] sm:$0xf]
        %v5251 = vld [vmem:[%s5 + $0x8c] sm:$0xf]
        %v5252 = vld [vmem:[%s5 + $0x90] sm:$0xf]
        %v5253 = vld [vmem:[%s5 + $0x94] sm:$0xf]
        %v5254 = vld [vmem:[%s5 + $0x98] sm:$0xf]
        %v5255 = vld [vmem:[%s5 + $0x9c] sm:$0xf]
        %v5256 = vld [vmem:[%s5 + $0xa0] sm:$0xf]
        %v5257 = vld [vmem:[%s5 + $0xa4] sm:$0xf]
        %v5258 = vld [vmem:[%s5 + $0xa8] sm:$0xf]
        %v5259 = vld [vmem:[%s5 + $0xac] sm:$0xf]
        %v5260 = vld [vmem:[%s5 + $0xb0] sm:$0xf]
        %v5261 = vld [vmem:[%s5 + $0xb4] sm:$0xf]
        %v5262 = vld [vmem:[%s5 + $0xb8] sm:$0xf]
        %v5263 = vld [vmem:[%s5 + $0xbc] sm:$0xf]
        %v5264 = vld [vmem:[%s5 + $0xc0] sm:$0xf]
        %v5265 = vld [vmem:[%s5 + $0xc4] sm:$0xf]
        %v5266 = vld [vmem:[%s5 + $0xc8] sm:$0xf]
        %v5267 = vld [vmem:[%s5 + $0xcc] sm:$0xf]
        %v5268 = vld [vmem:[%s5 + $0xd0] sm:$0xf]
        %v5269 = vld [vmem:[%s5 + $0xd4] sm:$0xf]
        %v5270 = vld [vmem:[%s5 + $0xd8] sm:$0xf]
        %v5271 = vld [vmem:[%s5 + $0xdc] sm:$0xf]
        %v5272 = vld [vmem:[%s5 + $0xe0] sm:$0xf]
        %v5273 = vld [vmem:[%s5 + $0xe4] sm:$0xf]
        %v5274 = vld [vmem:[%s5 + $0xe8] sm:$0xf]
        %v5275 = vld [vmem:[%s5 + $0xec] sm:$0xf]
        %v5276 = vld [vmem:[%s5 + $0xf0] sm:$0xf]
        %v5277 = vld [vmem:[%s5 + $0xf4] sm:$0xf]
        %v5278 = vld [vmem:[%s5 + $0xf8] sm:$0xf]
        %v5279 = vld [vmem:[%s5 + $0xfc] sm:$0xf]
        %v5280 = vld [vmem:[%s5 + $0x100] sm:$0xf]
        %v5281 = vld [vmem:[%s5 + $0x104] sm:$0xf]
        %v5282 = vld [vmem:[%s5 + $0x108] sm:$0xf]
        %v5283 = vld [vmem:[%s5 + $0x10c] sm:$0xf]
        %v5284 = vld [vmem:[%s5 + $0x110] sm:$0xf]
        %v5285 = vld [vmem:[%s5 + $0x114] sm:$0xf]
        %v5286 = vld [vmem:[%s5 + $0x118] sm:$0xf]
        %v5287 = vld [vmem:[%s5 + $0x11c] sm:$0xf]
        %v5288 = vld [vmem:[%s6] sm:$0x1]
        %v5290 = vlaneseq
        %v5291 = vshrl.u32 %v5290, 7
        %v5292 = vsub.s32 0, %v5291
        %v5293 = vrot.slane %v5288, %v5292
        %v5367 = vunpack.c.l.b16 %v5216
        %v5368 = vunpack.c.l.b16 %v5217
        %v5369 = vunpack.c.l.b16 %v5218
        %v5370 = vunpack.c.l.b16 %v5219
        %v5371 = vunpack.c.l.b16 %v5220
        %v5372 = vunpack.c.l.b16 %v5221
        %v5373 = vunpack.c.l.b16 %v5222
        %v5374 = vunpack.c.l.b16 %v5223
        %v5375 = vunpack.c.l.b16 %v5224
        %v5376 = vunpack.c.l.b16 %v5225
        %v5377 = vunpack.c.l.b16 %v5226
        %v5378 = vunpack.c.l.b16 %v5227
        %v5379 = vunpack.c.l.b16 %v5228
        %v5380 = vunpack.c.l.b16 %v5229
        %v5381 = vunpack.c.l.b16 %v5230
        %v5382 = vunpack.c.l.b16 %v5231
        %v5383 = vunpack.c.l.b16 %v5232
        %v5384 = vunpack.c.l.b16 %v5233
        %v5385 = vunpack.c.l.b16 %v5234
        %v5386 = vunpack.c.l.b16 %v5235
        %v5387 = vunpack.c.l.b16 %v5236
        %v5388 = vunpack.c.l.b16 %v5237
        %v5389 = vunpack.c.l.b16 %v5238
        %v5390 = vunpack.c.l.b16 %v5239
        %v5391 = vunpack.c.l.b16 %v5240
        %v5392 = vunpack.c.l.b16 %v5241
        %v5393 = vunpack.c.l.b16 %v5242
        %v5394 = vunpack.c.l.b16 %v5243
        %v5395 = vunpack.c.l.b16 %v5244
        %v5396 = vunpack.c.l.b16 %v5245
        %v5397 = vunpack.c.l.b16 %v5246
        %v5398 = vunpack.c.l.b16 %v5247
        %v5399 = vunpack.c.l.b16 %v5248
        %v5400 = vunpack.c.l.b16 %v5249
        %v5401 = vunpack.c.l.b16 %v5250
        %v5402 = vunpack.c.l.b16 %v5251
        %v5403 = vunpack.c.l.b16 %v5252
        %v5404 = vunpack.c.l.b16 %v5253
        %v5405 = vunpack.c.l.b16 %v5254
        %v5406 = vunpack.c.l.b16 %v5255
        %v5407 = vunpack.c.l.b16 %v5256
        %v5408 = vunpack.c.l.b16 %v5257
        %v5409 = vunpack.c.l.b16 %v5258
        %v5410 = vunpack.c.l.b16 %v5259
        %v5411 = vunpack.c.l.b16 %v5260
        %v5412 = vunpack.c.l.b16 %v5261
        %v5413 = vunpack.c.l.b16 %v5262
        %v5414 = vunpack.c.l.b16 %v5263
        %v5415 = vunpack.c.l.b16 %v5264
        %v5416 = vunpack.c.l.b16 %v5265
        %v5417 = vunpack.c.l.b16 %v5266
        %v5418 = vunpack.c.l.b16 %v5267
        %v5419 = vunpack.c.l.b16 %v5268
        %v5420 = vunpack.c.l.b16 %v5269
        %v5421 = vunpack.c.l.b16 %v5270
        %v5422 = vunpack.c.l.b16 %v5271
        %v5423 = vunpack.c.l.b16 %v5272
        %v5424 = vunpack.c.l.b16 %v5273
        %v5425 = vunpack.c.l.b16 %v5274
        %v5426 = vunpack.c.l.b16 %v5275
        %v5427 = vunpack.c.l.b16 %v5276
        %v5428 = vunpack.c.l.b16 %v5277
        %v5429 = vunpack.c.l.b16 %v5278
        %v5430 = vunpack.c.l.b16 %v5279
        %v5431 = vunpack.c.l.b16 %v5280
        %v5432 = vunpack.c.l.b16 %v5281
        %v5433 = vunpack.c.l.b16 %v5282
        %v5434 = vunpack.c.l.b16 %v5283
        %v5435 = vunpack.c.l.b16 %v5284
        %v5436 = vunpack.c.l.b16 %v5285
        %v5437 = vunpack.c.l.b16 %v5286
        %v5438 = vunpack.c.l.b16 %v5287
        %v5439 = vpack.c.b16 %v5368, %v5367
        %v5440 = vpack.c.b16 %v5370, %v5369
        %v5441 = vpack.c.b16 %v5372, %v5371
        %v5442 = vpack.c.b16 %v5374, %v5373
        %v5443 = vpack.c.b16 %v5376, %v5375
        %v5444 = vpack.c.b16 %v5378, %v5377
        %v5445 = vpack.c.b16 %v5380, %v5379
        %v5446 = vpack.c.b16 %v5382, %v5381
        %v5447 = vpack.c.b16 %v5384, %v5383
        %v5448 = vpack.c.b16 %v5386, %v5385
        %v5449 = vpack.c.b16 %v5388, %v5387
        %v5450 = vpack.c.b16 %v5390, %v5389
        %v5451 = vpack.c.b16 %v5392, %v5391
        %v5452 = vpack.c.b16 %v5394, %v5393
        %v5453 = vpack.c.b16 %v5396, %v5395
        %v5454 = vpack.c.b16 %v5398, %v5397
        %v5455 = vpack.c.b16 %v5400, %v5399
        %v5456 = vpack.c.b16 %v5402, %v5401
        %v5457 = vpack.c.b16 %v5404, %v5403
        %v5458 = vpack.c.b16 %v5406, %v5405
        %v5459 = vpack.c.b16 %v5408, %v5407
        %v5460 = vpack.c.b16 %v5410, %v5409
        %v5461 = vpack.c.b16 %v5412, %v5411
        %v5462 = vpack.c.b16 %v5414, %v5413
        %v5463 = vpack.c.b16 %v5416, %v5415
        %v5464 = vpack.c.b16 %v5418, %v5417
        %v5465 = vpack.c.b16 %v5420, %v5419
        %v5466 = vpack.c.b16 %v5422, %v5421
        %v5467 = vpack.c.b16 %v5424, %v5423
        %v5468 = vpack.c.b16 %v5426, %v5425
        %v5469 = vpack.c.b16 %v5428, %v5427
        %v5470 = vpack.c.b16 %v5430, %v5429
        %v5471 = vpack.c.b16 %v5432, %v5431
        %v5472 = vpack.c.b16 %v5434, %v5433
        %v5473 = vpack.c.b16 %v5436, %v5435
        %v5474 = vpack.c.b16 %v5438, %v5437
        %v5512 = vsel %vm4232, %v5215, 0
        %5514 = vmatprep.subr.bf16.mxu0 0
        %5515 = vmatpush1.bf16.msra.mxu0 %v5446
        %5516 = vmatprep.subr.bf16.mxu0 0
        %5517 = vmatpush1.bf16.msra.mxu0 %v5445
        %5518 = vmatprep.subr.bf16.mxu0 0
        %5519 = vmatpush1.bf16.msra.mxu0 %v5444
        %5520 = vmatprep.subr.bf16.mxu0 0
        %5521 = vmatpush1.bf16.msra.mxu0 %v5443
        %5522 = vmatprep.subr.bf16.mxu0 0
        %5523 = vmatpush1.bf16.msra.mxu0 %v5442
        %5524 = vmatprep.subr.bf16.mxu0 0
        %5525 = vmatpush1.bf16.msra.mxu0 %v5441
        %5526 = vmatprep.subr.bf16.mxu0 0
        %5527 = vmatpush1.bf16.msra.mxu0 %v5440
        %5528 = vmatprep.subr.bf16.mxu0 0
        %5529 = vmatpush1.bf16.msra.mxu0 %v5439
        %5530 = vmatprep.subr.bf16.mxu0 0
        %5531 = vmatpush2.bf16.msra.mxu0 %v5454
        %5532 = vmatprep.subr.bf16.mxu0 0
        %5533 = vmatpush2.bf16.msra.mxu0 %v5453
        %5534 = vmatprep.subr.bf16.mxu0 0
        %5535 = vmatpush2.bf16.msra.mxu0 %v5452
        %5536 = vmatprep.subr.bf16.mxu0 0
        %5537 = vmatpush2.bf16.msra.mxu0 %v5451
        %5538 = vmatprep.subr.bf16.mxu0 0
        %5539 = vmatpush2.bf16.msra.mxu0 %v5450
        %5540 = vmatprep.subr.bf16.mxu0 0
        %5541 = vmatpush2.bf16.msra.mxu0 %v5449
        %5542 = vmatprep.subr.bf16.mxu0 0
        %5543 = vmatpush2.bf16.msra.mxu0 %v5448
        %5544 = vmatprep.subr.bf16.mxu0 0
        %5545 = vmatpush2.bf16.msra.mxu0 %v5447
        %5546 = vmatprep.mubr.bf16.mxu0 %v5212
        %5547 = vmatmul.mubr.bf16.gmra.mxu0 %v5211
        %v5548 = vpop.f32.mrf.mxu0
        %v5549 = vadd.f32 %v5293, %v5548
        %v5550 = vpop.f32.mrf.mxu0
        %v5551 = vpop.f32.mrf.mxu0
        %v5552 = vadd.f32 %v5293, %v5551
        %v5553 = vpop.f32.mrf.mxu0
        %5554 = vdwg.mxu0
        %5555 = vmatprep.subr.bf16.mxu0 0
        %5556 = vmatpush1.bf16.msra.mxu0 %v5462
        %5557 = vmatprep.subr.bf16.mxu0 0
        %5558 = vmatpush1.bf16.msra.mxu0 %v5461
        %5559 = vmatprep.subr.bf16.mxu0 0
        %5560 = vmatpush1.bf16.msra.mxu0 %v5460
        %5561 = vmatprep.subr.bf16.mxu0 0
        %5562 = vmatpush1.bf16.msra.mxu0 %v5459
        %5563 = vmatprep.subr.bf16.mxu0 0
        %5564 = vmatpush1.bf16.msra.mxu0 %v5458
        %5565 = vmatprep.subr.bf16.mxu0 0
        %5566 = vmatpush1.bf16.msra.mxu0 %v5457
        %5567 = vmatprep.subr.bf16.mxu0 0
        %5568 = vmatpush1.bf16.msra.mxu0 %v5456
        %5569 = vmatprep.subr.bf16.mxu0 0
        %5570 = vmatpush1.bf16.msra.mxu0 %v5455
        %5571 = vmatprep.subr.bf16.mxu0 0
        %5572 = vmatpush2.bf16.msra.mxu0 %v5470
        %5573 = vmatprep.subr.bf16.mxu0 0
        %5574 = vmatpush2.bf16.msra.mxu0 %v5469
        %5575 = vmatprep.subr.bf16.mxu0 0
        %5576 = vmatpush2.bf16.msra.mxu0 %v5468
        %5577 = vmatprep.subr.bf16.mxu0 0
        %5578 = vmatpush2.bf16.msra.mxu0 %v5467
        %5579 = vmatprep.subr.bf16.mxu0 0
        %5580 = vmatpush2.bf16.msra.mxu0 %v5466
        %5581 = vmatprep.subr.bf16.mxu0 0
        %5582 = vmatpush2.bf16.msra.mxu0 %v5465
        %5583 = vmatprep.subr.bf16.mxu0 0
        %5584 = vmatpush2.bf16.msra.mxu0 %v5464
        %5585 = vmatprep.subr.bf16.mxu0 0
        %5586 = vmatpush2.bf16.msra.mxu0 %v5463
        %5587 = vmatprep.mubr.bf16.mxu0 %v5214
        %5588 = vmatmul.mubr.bf16.gmra.mxu0 %v5213
        %v5589 = vpop.f32.mrf.mxu0
        %v5590 = vadd.f32 %v5549, %v5589
        %v5591 = vpop.f32.mrf.mxu0
        %v5592 = vpop.f32.mrf.mxu0
        %v5593 = vadd.f32 %v5552, %v5592
        %v5594 = vpop.f32.mrf.mxu0
        %5595 = vdwg.mxu0
        %5596 = vmatprep.subr.bf16.mxu0 0
        %5597 = vmatpush1.bf16.msra.mxu0 0
        %5598 = vmatprep.subr.bf16.mxu0 0
        %5599 = vmatpush1.bf16.msra.mxu0 0
        %5600 = vmatprep.subr.bf16.mxu0 0
        %5601 = vmatpush1.bf16.msra.mxu0 0
        %5602 = vmatprep.subr.bf16.mxu0 0
        %5603 = vmatpush1.bf16.msra.mxu0 0
        %5604 = vmatprep.subr.bf16.mxu0 0
        %5605 = vmatpush1.bf16.msra.mxu0 %v5474
        %5606 = vmatprep.subr.bf16.mxu0 0
        %5607 = vmatpush1.bf16.msra.mxu0 %v5473
        %5608 = vmatprep.subr.bf16.mxu0 0
        %5609 = vmatpush1.bf16.msra.mxu0 %v5472
        %5610 = vmatprep.subr.bf16.mxu0 0
        %5611 = vmatpush1.bf16.msra.mxu0 %v5471
        %5612 = vmatprep.subr.bf16.mxu0 0
        %5613 = vmatpush2.bf16.msra.mxu0 0
        %5614 = vmatprep.subr.bf16.mxu0 0
        %5615 = vmatpush2.bf16.msra.mxu0 0
        %5616 = vmatprep.subr.bf16.mxu0 0
        %5617 = vmatpush2.bf16.msra.mxu0 0
        %5618 = vmatprep.subr.bf16.mxu0 0
        %5619 = vmatpush2.bf16.msra.mxu0 0
        %5620 = vmatprep.subr.bf16.mxu0 0
        %5621 = vmatpush2.bf16.msra.mxu0 0
        %5622 = vmatprep.subr.bf16.mxu0 0
        %5623 = vmatpush2.bf16.msra.mxu0 0
        %5624 = vmatprep.subr.bf16.mxu0 0
        %5625 = vmatpush2.bf16.msra.mxu0 0
        %5626 = vmatprep.subr.bf16.mxu0 0
        %5627 = vmatpush2.bf16.msra.mxu0 0
        %5628 = vmatprep.mubr.bf16.mxu0 0
        %5629 = vmatmul.mubr.bf16.gmra.mxu0 %v5512
        %v5630 = vpop.f32.mrf.mxu0
        %v5631 = vadd.f32 %v5590, %v5630
        %v5632 = vpop.f32.mrf.mxu0
        %v5633 = vpop.f32.mrf.mxu0
        %v5634 = vadd.f32 %v5593, %v5633
        %v5635 = vpop.f32.mrf.mxu0
        %5636 = vdwg.mxu0
        %v5637 = vmax.f32 %v5631, 0.0
        %v5638 = vmax.f32 %v5634, 0.0
        %v5641 = vcombine.high %v5637, %v5637
        %v5643 = vunpack.c.l.s4 1983009808
        %v5644 = vunpack.c.0.s8 %v5643
        %v5645 = vlaneseq
        %v5646 = vshrl.u32 %v5645, 7
        %v5647 = vsub.s32 %v5644, %v5646
        %v5648 = vrot.slane %v5637, %v5647
        %v5650 = vunpack.c.l.s4 1983009808
        %v5651 = vunpack.c.0.s8 %v5650
        %v5652 = vlaneseq
        %v5653 = vshrl.u32 %v5652, 7
        %v5654 = vsub.s32 %v5651, %v5653
        %v5655 = vrot.slane %v5641, %v5654
        %v5656 = vcombine.high %v5648, %v5648
        %v5657 = vcombine.high %v5655, %v5655
        %v5658 = vcombine.high %v5638, %v5638
        %v5660 = vunpack.c.l.s4 1983009808
        %v5661 = vunpack.c.0.s8 %v5660
        %v5662 = vlaneseq
        %v5663 = vshrl.u32 %v5662, 7
        %v5664 = vsub.s32 %v5661, %v5663
        %v5665 = vrot.slane %v5638, %v5664
        %v5667 = vunpack.c.l.s4 1983009808
        %v5668 = vunpack.c.0.s8 %v5667
        %v5669 = vlaneseq
        %v5670 = vshrl.u32 %v5669, 7
        %v5671 = vsub.s32 %v5668, %v5670
        %v5672 = vrot.slane %v5658, %v5671
        %v5673 = vcombine.high %v5665, %v5665
        %v5674 = vcombine.high %v5672, %v5672
        %vm5683 = vcmask 1041408
        %v5684 = vsel %vm5683, %v5648, -inf
        %v5685 = vrot.slane %v5684, 4
        %v5686 = vmax.f32 %v5684, %v5685
        %v5687 = vrot.slane %v5686, 2
        %v5688 = vmax.f32 %v5686, %v5687
        %v5689 = vrot.slane %v5688, 1
        %v5690 = vmax.f32 %v5688, %v5689
        %v5691 = vsel %vm5683, %v5656, -inf
        %v5692 = vrot.slane %v5691, 4
        %v5693 = vmax.f32 %v5691, %v5692
        %v5694 = vrot.slane %v5693, 2
        %v5695 = vmax.f32 %v5693, %v5694
        %v5696 = vrot.slane %v5695, 1
        %v5697 = vmax.f32 %v5695, %v5696
        %v5698 = vsel %vm5683, %v5655, -inf
        %v5699 = vrot.slane %v5698, 4
        %v5700 = vmax.f32 %v5698, %v5699
        %v5701 = vrot.slane %v5700, 2
        %v5702 = vmax.f32 %v5700, %v5701
        %v5703 = vrot.slane %v5702, 1
        %v5704 = vmax.f32 %v5702, %v5703
        %v5705 = vsel %vm5683, %v5657, -inf
        %v5706 = vrot.slane %v5705, 4
        %v5707 = vmax.f32 %v5705, %v5706
        %v5708 = vrot.slane %v5707, 2
        %v5709 = vmax.f32 %v5707, %v5708
        %v5710 = vrot.slane %v5709, 1
        %v5711 = vmax.f32 %v5709, %v5710
        %v5712 = vsel %vm5683, %v5665, -inf
        %v5713 = vrot.slane %v5712, 4
        %v5714 = vmax.f32 %v5712, %v5713
        %v5715 = vrot.slane %v5714, 2
        %v5716 = vmax.f32 %v5714, %v5715
        %v5717 = vrot.slane %v5716, 1
        %v5718 = vmax.f32 %v5716, %v5717
        %v5719 = vsel %vm5683, %v5673, -inf
        %v5720 = vrot.slane %v5719, 4
        %v5721 = vmax.f32 %v5719, %v5720
        %v5722 = vrot.slane %v5721, 2
        %v5723 = vmax.f32 %v5721, %v5722
        %v5724 = vrot.slane %v5723, 1
        %v5725 = vmax.f32 %v5723, %v5724
        %v5726 = vsel %vm5683, %v5672, -inf
        %v5727 = vrot.slane %v5726, 4
        %v5728 = vmax.f32 %v5726, %v5727
        %v5729 = vrot.slane %v5728, 2
        %v5730 = vmax.f32 %v5728, %v5729
        %v5731 = vrot.slane %v5730, 1
        %v5732 = vmax.f32 %v5730, %v5731
        %v5733 = vsel %vm5683, %v5674, -inf
        %v5734 = vrot.slane %v5733, 4
        %v5735 = vmax.f32 %v5733, %v5734
        %v5736 = vrot.slane %v5735, 2
        %v5737 = vmax.f32 %v5735, %v5736
        %v5738 = vrot.slane %v5737, 1
        %v5739 = vmax.f32 %v5737, %v5738
        %v5740 = vmax.f32 %v5690, %v5704
        %v5741 = vmax.f32 %v5697, %v5711
        %v5742 = vmax.f32 %v5718, %v5732
        %v5743 = vmax.f32 %v5725, %v5739
        %v5748 = vsel %vm3884, %v5741, %v5740
        %v5749 = vsel %vm3884, %v5743, %v5742
        %5752 = vst [vmem:[%s271] sm:$0x3] %v5748
        %5753 = vst [vmem:[%s271 + $0x2] sm:$0x3] %v5749
        %s5754 = sand.u32 %s181, 1
        %s5755 = scalar_lea.sflag [#allocation6], %s5754
        %s5756 = sand.u32 %s181, 1
        %s5757 = smul.addr %s5756, 4
        %s5758 = scalar_lea.vmem [#allocation5], %s5757
        // Predicated region
        $region49: #{cnn_forward.1} parent=47 // pred_check
          %p5759 = pneg %p191
        $region50: #{cnn_forward.1} parent=47 // pred_check_branch
          %5761 = sbr.rel (%p5759) target = $region52
        $region51: #{cnn_forward.1} parent=47 // pred_region
          %s5763 = ssub.s32 64, 64
          %5764 = vsyncadd %s5755, %s5763
          %s5765 = smul.addr %s21, 2
          %s5766 = smul.addr %s5765, 32
          %s5767 = scalar_lea.hbm %s7, %s5766
          %s5768 = sshll.u32 %s5758, 4
          %s5769 = int_to_ptr.vmem [resolvable:$true] %s5768
          %5774 = dma.vmem_to_hbm [thread:$0]  %s5769, 64, %s5767, %s5755, 32, 32, 2
        $region52: #{cnn_forward.1} parent=47 // pred_fallthru
          _
      $region48: #{cnn_forward.1} parent=5 // pred_fallthru
        _
      %p5775 = scmp.le.s32.totalorder 2, %s16
      // Predicated region
      $region53: #{cnn_forward.1} parent=5 // pred_check
        %p5776 = pneg %p5775
      $region54: #{cnn_forward.1} parent=5 // pred_check_branch
        %5778 = sbr.rel (%p5776) target = $region56
      $region55: #{cnn_forward.1} parent=5 // pred_region
        %s5779 = ssub.s32 %s16, 2
        // Predicated region
        $region57: #{cnn_forward.1} parent=55 // pred_check
          %p5780 = pneg %p197
        $region58: #{cnn_forward.1} parent=55 // pred_check_branch
          %5782 = sbr.rel (%p5780) target = $region60
        $region59: #{cnn_forward.1} parent=55 // pred_region
          %s5783 = sand.u32 %s182, 1
          %s5784 = scalar_lea.sflag [#allocation6], %s5783
          %s5785 = sand.u32 %s182, 1
          %s5786 = smul.addr %s5785, 4
          %s5787 = scalar_lea.vmem [#allocation5], %s5786
          %5788 = dma.done %s5784, 64
        $region60: #{cnn_forward.1} parent=55 // pred_fallthru
          _
      $region56: #{cnn_forward.1} parent=5 // pred_fallthru
        _
    $region6: #{cnn_forward.1} parent=1 // loop_footer
      %s20 = sadd.s32 1, %s16
    $region7: #{cnn_forward.1} parent=1 // loop_footer_branch
      %15 = sbr.rel target = $region3
    $region8: #{cnn_forward.1} parent=1 // loop_exit
      _
    %5789 = vsyncpa [#allocation6], 1
    %s5790 = scalar_lea.sflag [#allocation6], 1
    %5791 = vsyncpa %s5790, 1

</llo_original>
